<compile_context>
chip_gen: v7x
topology: tpu7x:2x2x1
jax: 0.10.0
libtpu: 0.0.40
codegen_flags: <defaults>
</compile_context>

<pallas_src>
import functools
import math

import jax
import jax.numpy as jnp
from jax.experimental import pallas as pl
from jax.experimental.pallas import tpu as pltpu


# ------------------------------ budgets / tiling ------------------------------

def _default_vmem_limit():
    # 32 MiB scoped limit is safe on every generation (v7x has only 64 MiB
    # physical VMEM); on 128-MiB chips (v5e/v6e) allow bigger blocks.
    try:
        phys = pltpu.get_tpu_info().vmem_capacity_bytes
        if phys >= 100 * 1024 * 1024:
            return 64 * 1024 * 1024
    except Exception:
        pass
    return 32 * 1024 * 1024


_VMEM_LIMIT = _default_vmem_limit()
_RESIDENT_W_BYTES = 8 * 1024 * 1024      # bf16 weights <= 8 MiB stay VMEM-resident
_TM = 512                                # row-tile target for resident matmuls / LN


def _pick_tile(dim, target, align):
    """Largest tile <= target that is a multiple of `align` and divides `dim`,
    falling back to the full dimension (always a legal BlockSpec block)."""
    if dim <= target:
        return dim
    t = (target // align) * align
    while t >= align:
        if dim % t == 0:
            return t
        t -= align
    return dim


# --------------------- resident-weight matmul (+bias/GELU/LN) ---------------------

def _mm_kernel(x_ref, w_ref, b_ref, o_ref, *, activation):
    h = jnp.dot(x_ref[...], w_ref[...], preferred_element_type=jnp.float32)
    h = h + b_ref[...]
    if activation == "gelu":
        # tanh-approximate GELU (EUP); HF BERT uses erf-GELU (tiny numeric diff)
        h = jax.nn.gelu(h, approximate=True)
    o_ref[...] = h.astype(o_ref.dtype)


def _mm_res_ln_kernel(x_ref, w_ref, b_ref, r_ref, g_ref, bt_ref, o_ref, *, activation):
    # matmul + bias (+GELU) + residual add + LayerNorm fused in one epilogue;
    # all LN math stays in f32 (v5e-friendly).
    h = jnp.dot(x_ref[...], w_ref[...], preferred_element_type=jnp.float32)
    h = h + b_ref[...]
    if activation == "gelu":
        h = jax.nn.gelu(h, approximate=True)
    h = h + r_ref[...].astype(jnp.float32)
    mu = jnp.mean(h, axis=-1, keepdims=True)
    var = jnp.mean((h - mu) ** 2, axis=-1, keepdims=True)
    y = (h - mu) * jax.lax.rsqrt(var + 1e-12) * g_ref[...] + bt_ref[...]
    o_ref[...] = y.astype(o_ref.dtype)


def _mm_tiled_kernel(x_ref, w_ref, b_ref, o_ref, acc_ref, *, activation):
    # fallback K/N-tiled path for weights too large to keep resident
    @pl.when(pl.program_id(2) == 0)
    def _():
        acc_ref[...] = jnp.zeros_like(acc_ref)

    acc_ref[...] += jnp.dot(x_ref[...], w_ref[...],
                            preferred_element_type=jnp.float32)

    @pl.when(pl.program_id(2) == pl.num_programs(2) - 1)
    def _():
        h = acc_ref[...] + b_ref[...]
        if activation == "gelu":
            h = jax.nn.gelu(h, approximate=True)
        o_ref[...] = h.astype(o_ref.dtype)


def matmul_fused(x, w, b, *, activation=None, ln=None, residual=None,
                 out_dtype=jnp.bfloat16):
    """y = act(x @ w + b); if ln=(gamma, beta): y = LayerNorm(y + residual).

    x: (M, K) bf16, w: (K, N) bf16, b/gamma/beta: (1, N) f32."""
    M, K = x.shape
    N = w.shape[1]
    x = x.astype(jnp.bfloat16)
    flops = 2 * M * N * K
    trans = M * N if activation == "gelu" else 0

    if w.size * 2 <= _RESIDENT_W_BYTES:
        tm = _pick_tile(M, _TM, 16)          # 16-row alignment for bf16 sublanes
        grid = (M // tm,)
        x_spec = pl.BlockSpec((tm, K), lambda i: (i, 0))
        w_spec = pl.BlockSpec((K, N), lambda i: (0, 0))     # resident: fetched once
        v_spec = pl.BlockSpec((1, N), lambda i: (0, 0))
        o_spec = pl.BlockSpec((tm, N), lambda i: (i, 0))
        cp = pltpu.CompilerParams(dimension_semantics=("parallel",),
                                  vmem_limit_bytes=_VMEM_LIMIT)
        bytes_accessed = (M * K * 2 + K * N * 2 + N * 4
                          + M * N * jnp.dtype(out_dtype).itemsize)
        if ln is None:
            return pl.pallas_call(
                functools.partial(_mm_kernel, activation=activation),
                grid=grid,
                in_specs=[x_spec, w_spec, v_spec],
                out_specs=o_spec,
                out_shape=jax.ShapeDtypeStruct((M, N), out_dtype),
                compiler_params=cp,
                cost_estimate=pl.CostEstimate(
                    flops=flops, transcendentals=trans,
                    bytes_accessed=bytes_accessed),
            )(x, w, b)
        gamma, beta = ln
        return pl.pallas_call(
            functools.partial(_mm_res_ln_kernel, activation=activation),
            grid=grid,
            in_specs=[x_spec, w_spec, v_spec, o_spec, v_spec, v_spec],
            out_specs=o_spec,
            out_shape=jax.ShapeDtypeStruct((M, N), out_dtype),
            compiler_params=cp,
            cost_estimate=pl.CostEstimate(
                flops=flops + 10 * M * N, transcendentals=trans,
                bytes_accessed=bytes_accessed + M * N * 2 + 2 * N * 4),
        )(x, w, b, residual.astype(jnp.bfloat16), gamma, beta)

    # ---------------- fallback: K/N-tiled accumulator matmul ----------------
    tm = _pick_tile(M, 256, 16)
    tn = _pick_tile(N, 256, 128)
    tk = _pick_tile(K, 512, 128)
    y = pl.pallas_call(
        functools.partial(_mm_tiled_kernel, activation=activation),
        grid=(M // tm, N // tn, K // tk),
        in_specs=[pl.BlockSpec((tm, tk), lambda i, j, k: (i, k)),
                  pl.BlockSpec((tk, tn), lambda i, j, k: (k, j)),
                  pl.BlockSpec((1, tn), lambda i, j, k: (0, j))],
        out_specs=pl.BlockSpec((tm, tn), lambda i, j, k: (i, j)),
        out_shape=jax.ShapeDtypeStruct((M, N), out_dtype),
        scratch_shapes=[pltpu.VMEM((tm, tn), jnp.float32)],
        compiler_params=pltpu.CompilerParams(
            dimension_semantics=("parallel", "parallel", "arbitrary"),
            vmem_limit_bytes=_VMEM_LIMIT),
        cost_estimate=pl.CostEstimate(
            flops=flops, transcendentals=trans,
            bytes_accessed=M * K * 2 + (M // tm) * K * N * 2 + M * N * 2),
    )(x, w, b)
    if ln is None:
        return y
    gamma, beta = ln
    return layernorm(y, gamma, beta, residual=residual, out_dtype=out_dtype)


# ------------------------- standalone LayerNorm (embeddings / fallback) -------------------------

def _ln_kernel(x_ref, g_ref, b_ref, o_ref):
    x = x_ref[...].astype(jnp.float32)
    mu = jnp.mean(x, axis=-1, keepdims=True)
    var = jnp.mean((x - mu) ** 2, axis=-1, keepdims=True)
    y = (x - mu) * jax.lax.rsqrt(var + 1e-12) * g_ref[...] + b_ref[...]
    o_ref[...] = y.astype(o_ref.dtype)


def _add_ln_kernel(x_ref, r_ref, g_ref, b_ref, o_ref):
    x = x_ref[...].astype(jnp.float32) + r_ref[...].astype(jnp.float32)
    mu = jnp.mean(x, axis=-1, keepdims=True)
    var = jnp.mean((x - mu) ** 2, axis=-1, keepdims=True)
    y = (x - mu) * jax.lax.rsqrt(var + 1e-12) * g_ref[...] + b_ref[...]
    o_ref[...] = y.astype(o_ref.dtype)


def layernorm(x, gamma, beta, residual=None, out_dtype=jnp.bfloat16):
    """gamma/beta: (1, H) f32 (pre-reshaped in prepare_params)."""
    M, H = x.shape
    tm = _pick_tile(M, _TM, 16)
    row = pl.BlockSpec((tm, H), lambda i: (i, 0))
    vec = pl.BlockSpec((1, H), lambda i: (0, 0))
    common = dict(
        grid=(M // tm,),
        out_specs=row,
        out_shape=jax.ShapeDtypeStruct((M, H), out_dtype),
        compiler_params=pltpu.CompilerParams(
            dimension_semantics=("parallel",), vmem_limit_bytes=_VMEM_LIMIT),
    )
    if residual is None:
        return pl.pallas_call(_ln_kernel, in_specs=[row, vec, vec],
                              **common)(x, gamma, beta)
    return pl.pallas_call(_add_ln_kernel, in_specs=[row, row, vec, vec],
                          **common)(x, residual, gamma, beta)


# ----------------------------------- attention -----------------------------------

def _attention_kernel(q_ref, k_ref, v_ref, bias_ref, o_ref, *, g, dh):
    # q/k/v blocks: (S, g*dh) bf16 head-column slices of the fused QKV tensor;
    # q already pre-scaled by 1/sqrt(dh) (folded into W_q at pack time).
    bias = bias_ref[0]                                   # (1, S) additive mask bias
    outs = []
    for hh in range(g):                                  # static unroll over heads
        if g == 1:
            q, k, v = q_ref[...], k_ref[...], v_ref[...]
        else:
            q = q_ref[:, hh * dh:(hh + 1) * dh]
            k = k_ref[:, hh * dh:(hh + 1) * dh]
            v = v_ref[:, hh * dh:(hh + 1) * dh]
        s = jnp.dot(q, k.T, preferred_element_type=jnp.float32) + bias   # (S, S)
        s = s - jnp.max(s, axis=-1, keepdims=True)
        p = jnp.exp(s)
        p = p * pl.reciprocal(jnp.sum(p, axis=-1, keepdims=True), approx=True)
        outs.append(jnp.dot(p.astype(v.dtype), v,
                            preferred_element_type=jnp.float32))
    ctx = outs[0] if g == 1 else jnp.concatenate(outs, axis=-1)
    o_ref[...] = ctx.astype(o_ref.dtype)


def attention(qkv, mask_bias, B, S, nH, dh):
    """qkv: (B*S, 3H) bf16 fused projection (Q pre-scaled by 1/sqrt(dh)).
    mask_bias: (B, 1, S) f32 additive bias (0 keep / -1e9 pad).
    Returns ctx written directly in (B*S, H) bf16 layout (no head transposes)."""
    H = nH * dh
    # group heads so the column block is lane-dense (g*dh multiple of 128)
    g = nH
    for cand in range(1, nH + 1):
        if nH % cand == 0 and (cand * dh) % 128 == 0:
            g = cand
            break
    # TODO(synk): if no divisor of nH gives a 128-multiple block (toy configs
    # only), the block is not lane-dense; standard BERT (dh=64/128) is fine.
    bw = g * dh
    nhb = nH // g
    q_spec = pl.BlockSpec((S, bw), lambda b, j: (b, j))
    k_spec = pl.BlockSpec((S, bw), lambda b, j: (b, nhb + j))
    v_spec = pl.BlockSpec((S, bw), lambda b, j: (b, 2 * nhb + j))
    o_spec = pl.BlockSpec((S, bw), lambda b, j: (b, j))
    m_spec = pl.BlockSpec((1, 1, S), lambda b, j: (b, 0, 0))
    # TODO(synk): for long sequences (S >~ 2K) tile the KV axis flash-style with
    # online-softmax m/l/acc scratch instead of materializing the (S,S) scores.
    return pl.pallas_call(
        functools.partial(_attention_kernel, g=g, dh=dh),
        grid=(B, nhb),
        in_specs=[q_spec, k_spec, v_spec, m_spec],
        out_specs=o_spec,
        out_shape=jax.ShapeDtypeStruct((B * S, H), jnp.bfloat16),
        compiler_params=pltpu.CompilerParams(
            dimension_semantics=("parallel", "parallel"),
            vmem_limit_bytes=_VMEM_LIMIT),
        cost_estimate=pl.CostEstimate(
            flops=4 * B * nH * S * S * dh,
            transcendentals=B * nH * S * S,
            bytes_accessed=B * S * (3 * H + H) * 2 + B * S * 4),
    )(qkv, qkv, qkv, mask_bias)


# ----------------------------------- mean pool -----------------------------------

def _meanpool_kernel(x_ref, o_ref, acc_ref, *, inv_s):
    # torch.mean(last_layer, dim=1): UNMASKED mean over the sequence axis,
    # accumulated over S-chunks in f32.
    @pl.when(pl.program_id(0) == 0)
    def _():
        acc_ref[...] = jnp.zeros_like(acc_ref)

    acc_ref[...] += jnp.sum(x_ref[...].astype(jnp.float32), axis=1)

    @pl.when(pl.program_id(0) == pl.num_programs(0) - 1)
    def _():
        o_ref[...] = acc_ref[...] * inv_s


def mean_pool(x):
    B, S, H = x.shape
    ts = _pick_tile(S, 64, 16)
    return pl.pallas_call(
        functools.partial(_meanpool_kernel, inv_s=1.0 / S),
        grid=(S // ts,),
        in_specs=[pl.BlockSpec((B, ts, H), lambda s: (0, s, 0))],
        out_specs=pl.BlockSpec((B, H), lambda s: (0, 0)),
        out_shape=jax.ShapeDtypeStruct((B, H), jnp.float32),
        scratch_shapes=[pltpu.VMEM((B, H), jnp.float32)],
        compiler_params=pltpu.CompilerParams(
            dimension_semantics=("arbitrary",), vmem_limit_bytes=_VMEM_LIMIT),
    )(x)


# ----------------------------- params & model wrapper -------------------------------

def init_params(key, cfg):
    H, F, V, P = cfg["hidden"], cfg["ffn"], cfg["vocab"], cfg["max_pos"]
    n_layers = cfg["layers"]
    keys = jax.random.split(key, 3 + n_layers)

    def dense(k, shape):
        return (0.02 * jax.random.normal(k, shape)).astype(jnp.float32)

    params = {
        "word_emb": dense(keys[0], (V, H)),
        "pos_emb": dense(keys[1], (P, H)),
        "type_emb": dense(keys[2], (2, H)),
        "emb_ln_g": jnp.ones((H,), jnp.float32),
        "emb_ln_b": jnp.zeros((H,), jnp.float32),
        "layers": [],
    }
    for l in range(n_layers):
        lk = jax.random.split(keys[3 + l], 6)
        params["layers"].append({
            "wq": dense(lk[0], (H, H)), "bq": jnp.zeros((H,), jnp.float32),
            "wk": dense(lk[1], (H, H)), "bk": jnp.zeros((H,), jnp.float32),
            "wv": dense(lk[2], (H, H)), "bv": jnp.zeros((H,), jnp.float32),
            "wo": dense(lk[3], (H, H)), "bo": jnp.zeros((H,), jnp.float32),
            "ln1_g": jnp.ones((H,), jnp.float32), "ln1_b": jnp.zeros((H,), jnp.float32),
            "w1": dense(lk[4], (H, F)), "b1": jnp.zeros((F,), jnp.float32),
            "w2": dense(lk[5], (F, H)), "b2": jnp.zeros((H,), jnp.float32),
            "ln2_g": jnp.ones((H,), jnp.float32), "ln2_b": jnp.zeros((H,), jnp.float32),
        })
    return params


def prepare_params(params, cfg):
    """One-time packing hoisted out of the traced forward: bf16 weights, fused
    W_qkv (1/sqrt(dh) folded into the Q columns), (1,N)-shaped f32 biases/LN."""
    H, nH = cfg["hidden"], cfg["heads"]
    dh = H // nH
    scale = 1.0 / math.sqrt(dh)
    prep = {
        "word_emb": params["word_emb"],
        "pos_emb": params["pos_emb"],
        "type_emb": params["type_emb"],
        "emb_ln_g": params["emb_ln_g"].astype(jnp.float32).reshape(1, H),
        "emb_ln_b": params["emb_ln_b"].astype(jnp.float32).reshape(1, H),
        "layers": [],
    }
    for lyr in params["layers"]:
        F = lyr["w1"].shape[1]
        wqkv = jnp.concatenate([lyr["wq"] * scale, lyr["wk"], lyr["wv"]], axis=1)
        bqkv = jnp.concatenate([lyr["bq"] * scale, lyr["bk"], lyr["bv"]], axis=0)
        prep["layers"].append({
            "wqkv": wqkv.astype(jnp.bfloat16),
            "bqkv": bqkv.astype(jnp.float32).reshape(1, 3 * H),
            "wo": lyr["wo"].astype(jnp.bfloat16),
            "bo": lyr["bo"].astype(jnp.float32).reshape(1, H),
            "ln1_g": lyr["ln1_g"].astype(jnp.float32).reshape(1, H),
            "ln1_b": lyr["ln1_b"].astype(jnp.float32).reshape(1, H),
            "w1": lyr["w1"].astype(jnp.bfloat16),
            "b1": lyr["b1"].astype(jnp.float32).reshape(1, F),
            "w2": lyr["w2"].astype(jnp.bfloat16),
            "b2": lyr["b2"].astype(jnp.float32).reshape(1, H),
            "ln2_g": lyr["ln2_g"].astype(jnp.float32).reshape(1, H),
            "ln2_b": lyr["ln2_b"].astype(jnp.float32).reshape(1, H),
        })
    return prep


def bert_sentence_encoder(prep, tokens, mask, cfg):
    B, S = tokens.shape
    H, nH = cfg["hidden"], cfg["heads"]
    dh = H // nH

    # Embeddings (token gather is plain-JAX glue); LayerNorm is a Pallas kernel.
    x = (jnp.take(prep["word_emb"], tokens, axis=0)
         + prep["pos_emb"][None, :S, :]
         + prep["type_emb"][0][None, None, :])
    x2 = layernorm(x.reshape(B * S, H), prep["emb_ln_g"], prep["emb_ln_b"])  # bf16

    # additive attention-mask bias, computed once (0 = keep, -1e9 = pad)
    mask_bias = ((mask.astype(jnp.float32) - 1.0) * 1e9).reshape(B, 1, S)

    for lyr in prep["layers"]:
        qkv = matmul_fused(x2, lyr["wqkv"], lyr["bqkv"])            # (B*S, 3H)
        ctx = attention(qkv, mask_bias, B, S, nH, dh)               # (B*S, H)
        # output projection with fused bias + residual + LayerNorm epilogue
        x2 = matmul_fused(ctx, lyr["wo"], lyr["bo"],
                          ln=(lyr["ln1_g"], lyr["ln1_b"]), residual=x2)
        h = matmul_fused(x2, lyr["w1"], lyr["b1"], activation="gelu")
        x2 = matmul_fused(h, lyr["w2"], lyr["b2"],
                          ln=(lyr["ln2_g"], lyr["ln2_b"]), residual=x2)

    # forward() returns torch.mean(last_layer, dim=1) -> (B, H) float32
    return mean_pool(x2.reshape(B, S, H))


# --------------------------------- main -------------------------------------

if __name__ == "__main__":
    # TODO(synk): tokenizer / tokenize() / create_input() are host-side string
    # processing with no Pallas equivalent; pretrained-weight loading replaced
    # by deterministic synthetic init; lexical dropout is unused in forward().
    cfg = dict(vocab=64, max_pos=32, hidden=256, heads=2, ffn=512, layers=2)
    B, S = 2, 16

    params = init_params(jax.random.PRNGKey(0), cfg)
    prep = prepare_params(params, cfg)      # one-time weight packing (not traced)

    tokens = jax.random.randint(jax.random.PRNGKey(1), (B, S), 0, cfg["vocab"],
                                dtype=jnp.int32)
    # mask as create_input() would make it: leading 1s, trailing 0 padding
    lens = jnp.array([S, 11])
    mask = (jnp.arange(S)[None, :] < lens[:, None]).astype(jnp.float32)

    fwd = jax.jit(functools.partial(bert_sentence_encoder, cfg=cfg))
    out = jax.block_until_ready(fwd(prep, tokens, mask))
    assert out.shape == (B, cfg["hidden"]) and out.dtype == jnp.float32
    print("KERNEL_OK")
</pallas_src>

<mosaic_0001>
module attributes {stable_mosaic.version = 11 : i64} {
  func.func @_mm_kernel(%arg0: i32, %arg1: memref<32x256xbf16, #tpu.memory_space<vmem>>, %arg2: memref<256x768xbf16, #tpu.memory_space<vmem>>, %arg3: memref<1x768xf32, #tpu.memory_space<vmem>>, %arg4: memref<32x768xbf16, #tpu.memory_space<vmem>>) attributes {dimension_semantics = [#tpu.dimension_semantics<parallel>], iteration_bounds = array<i64: 1>, scalar_prefetch = 0 : i64, scratch_operands = 0 : i64, tpu.core_type = #tpu.core_type<tc>, window_params = [{transform_indices = @transform_0, window_bounds = array<i64: 32, 256>}, {pipeline_mode = #tpu.pipeline_mode<synchronous>, transform_indices = @transform_1, window_bounds = array<i64: 256, 768>}, {pipeline_mode = #tpu.pipeline_mode<synchronous>, transform_indices = @transform_2, window_bounds = array<i64: 1, 768>}, {transform_indices = @transform_3, window_bounds = array<i64: 32, 768>}]} {
    %c0 = arith.constant 0 : index
    %c0_0 = arith.constant 0 : index
    %0 = vector.load %arg1[%c0, %c0_0] : memref<32x256xbf16, #tpu.memory_space<vmem>>, vector<32x256xbf16>
    %c0_1 = arith.constant 0 : index
    %c0_2 = arith.constant 0 : index
    %1 = vector.load %arg2[%c0_1, %c0_2] : memref<256x768xbf16, #tpu.memory_space<vmem>>, vector<256x768xbf16>
    %cst = arith.constant dense<0.000000e+00> : vector<32x768xf32>
    %2 = tpu.matmul %0, %1, %cst {dimension_numbers = #tpu.dot_dimension_numbers<[1], [0], [0], [1], [0, 0, 1, 1], [], []>} : vector<32x256xbf16>, vector<256x768xbf16>, vector<32x768xf32> -> vector<32x768xf32>
    %c0_3 = arith.constant 0 : index
    %c0_4 = arith.constant 0 : index
    %3 = vector.load %arg3[%c0_3, %c0_4] : memref<1x768xf32, #tpu.memory_space<vmem>>, vector<1x768xf32>
    %4 = vector.broadcast %3 : vector<1x768xf32> to vector<32x768xf32>
    %5 = arith.addf %2, %4 : vector<32x768xf32>
    %6 = arith.truncf %5 : vector<32x768xf32> to vector<32x768xbf16>
    %c0_5 = arith.constant 0 : index
    %c0_6 = arith.constant 0 : index
    %7 = vector.load %arg4[%c0_5, %c0_6] : memref<32x768xbf16, #tpu.memory_space<vmem>>, vector<32x768xbf16>
    tpu.vector_store %arg4[%c0_5, %c0_6], %6 {strides = array<i32>} : memref<32x768xbf16, #tpu.memory_space<vmem>>, vector<32x768xbf16>,
    return
  }
  func.func @transform_0(%arg0: i32) -> (i32, i32) {
    %c0_i32 = arith.constant 0 : i32
    %c0_i32_0 = arith.constant 0 : i32
    return %arg0, %c0_i32 : i32, i32
  }
  func.func @transform_1(%arg0: i32) -> (i32, i32) {
    %c0_i32 = arith.constant 0 : i32
    %c0_i32_0 = arith.constant 0 : i32
    %c0_i32_1 = arith.constant 0 : i32
    return %c0_i32, %c0_i32_0 : i32, i32
  }
  func.func @transform_2(%arg0: i32) -> (i32, i32) {
    %c0_i32 = arith.constant 0 : i32
    %c0_i32_0 = arith.constant 0 : i32
    %c0_i32_1 = arith.constant 0 : i32
    return %c0_i32, %c0_i32_0 : i32, i32
  }
  func.func @transform_3(%arg0: i32) -> (i32, i32) {
    %c0_i32 = arith.constant 0 : i32
    %c0_i32_0 = arith.constant 0 : i32
    return %arg0, %c0_i32 : i32, i32
  }
}

module attributes {stable_mosaic.version = 11 : i64} {
  func.func @_ln_kernel(%arg0: i32, %arg1: memref<32x256xf32, #tpu.memory_space<vmem>>, %arg2: memref<1x256xf32, #tpu.memory_space<vmem>>, %arg3: memref<1x256xf32, #tpu.memory_space<vmem>>, %arg4: memref<32x256xbf16, #tpu.memory_space<vmem>>) attributes {dimension_semantics = [#tpu.dimension_semantics<parallel>], iteration_bounds = array<i64: 1>, scalar_prefetch = 0 : i64, scratch_operands = 0 : i64, tpu.core_type = #tpu.core_type<tc>, window_params = [{transform_indices = @transform_0, window_bounds = array<i64: 32, 256>}, {pipeline_mode = #tpu.pipeline_mode<synchronous>, transform_indices = @transform_1, window_bounds = array<i64: 1, 256>}, {pipeline_mode = #tpu.pipeline_mode<synchronous>, transform_indices = @transform_2, window_bounds = array<i64: 1, 256>}, {transform_indices = @transform_3, window_bounds = array<i64: 32, 256>}]} {
    %c0 = arith.constant 0 : index
    %c0_0 = arith.constant 0 : index
    %0 = vector.load %arg1[%c0, %c0_0] : memref<32x256xf32, #tpu.memory_space<vmem>>, vector<32x256xf32>
    %cst = arith.constant dense<0.000000e+00> : vector<32xf32>
    %1 = vector.multi_reduction <add>, %0, %cst [1] : vector<32x256xf32> to vector<32xf32>
    %2 = vector.shape_cast %1 : vector<32xf32> to vector<32x1xf32>
    %cst_1 = arith.constant 2.560000e+02 : f32
    %3 = vector.broadcast %cst_1 : f32 to vector<32x1xf32>
    %4 = arith.divf %2, %3 : vector<32x1xf32>
    %5 = vector.broadcast %4 : vector<32x1xf32> to vector<32x256xf32>
    %6 = arith.subf %0, %5 : vector<32x256xf32>
    %7 = arith.mulf %6, %6 : vector<32x256xf32>
    %cst_2 = arith.constant dense<0.000000e+00> : vector<32xf32>
    %8 = vector.multi_reduction <add>, %7, %cst_2 [1] : vector<32x256xf32> to vector<32xf32>
    %9 = vector.shape_cast %8 : vector<32xf32> to vector<32x1xf32>
    %cst_3 = arith.constant 2.560000e+02 : f32
    %10 = vector.broadcast %cst_3 : f32 to vector<32x1xf32>
    %11 = arith.divf %9, %10 : vector<32x1xf32>
    %12 = vector.broadcast %4 : vector<32x1xf32> to vector<32x256xf32>
    %13 = arith.subf %0, %12 : vector<32x256xf32>
    %cst_4 = arith.constant 9.99999996E-13 : f32
    %14 = vector.broadcast %cst_4 : f32 to vector<32x1xf32>
    %15 = arith.addf %11, %14 : vector<32x1xf32>
    %16 = math.rsqrt %15 : vector<32x1xf32>
    %17 = vector.broadcast %16 : vector<32x1xf32> to vector<32x256xf32>
    %18 = arith.mulf %13, %17 : vector<32x256xf32>
    %c0_5 = arith.constant 0 : index
    %c0_6 = arith.constant 0 : index
    %19 = vector.load %arg2[%c0_5, %c0_6] : memref<1x256xf32, #tpu.memory_space<vmem>>, vector<1x256xf32>
    %20 = vector.broadcast %19 : vector<1x256xf32> to vector<32x256xf32>
    %21 = arith.mulf %18, %20 : vector<32x256xf32>
    %c0_7 = arith.constant 0 : index
    %c0_8 = arith.constant 0 : index
    %22 = vector.load %arg3[%c0_7, %c0_8] : memref<1x256xf32, #tpu.memory_space<vmem>>, vector<1x256xf32>
    %23 = vector.broadcast %22 : vector<1x256xf32> to vector<32x256xf32>
    %24 = arith.addf %21, %23 : vector<32x256xf32>
    %25 = arith.truncf %24 : vector<32x256xf32> to vector<32x256xbf16>
    %c0_9 = arith.constant 0 : index
    %c0_10 = arith.constant 0 : index
    %26 = vector.load %arg4[%c0_9, %c0_10] : memref<32x256xbf16, #tpu.memory_space<vmem>>, vector<32x256xbf16>
    tpu.vector_store %arg4[%c0_9, %c0_10], %25 {strides = array<i32>} : memref<32x256xbf16, #tpu.memory_space<vmem>>, vector<32x256xbf16>,
    return
  }
  func.func @transform_0(%arg0: i32) -> (i32, i32) {
    %c0_i32 = arith.constant 0 : i32
    %c0_i32_0 = arith.constant 0 : i32
    return %arg0, %c0_i32 : i32, i32
  }
  func.func @transform_1(%arg0: i32) -> (i32, i32) {
    %c0_i32 = arith.constant 0 : i32
    %c0_i32_0 = arith.constant 0 : i32
    %c0_i32_1 = arith.constant 0 : i32
    return %c0_i32, %c0_i32_0 : i32, i32
  }
  func.func @transform_2(%arg0: i32) -> (i32, i32) {
    %c0_i32 = arith.constant 0 : i32
    %c0_i32_0 = arith.constant 0 : i32
    %c0_i32_1 = arith.constant 0 : i32
    return %c0_i32, %c0_i32_0 : i32, i32
  }
  func.func @transform_3(%arg0: i32) -> (i32, i32) {
    %c0_i32 = arith.constant 0 : i32
    %c0_i32_0 = arith.constant 0 : i32
    return %arg0, %c0_i32 : i32, i32
  }
}

module attributes {stable_mosaic.version = 11 : i64} {
  func.func @_attention_kernel(%arg0: i32, %arg1: i32, %arg2: memref<16x128xbf16, #tpu.memory_space<vmem>>, %arg3: memref<16x128xbf16, #tpu.memory_space<vmem>>, %arg4: memref<16x128xbf16, #tpu.memory_space<vmem>>, %arg5: memref<1x1x16xf32, #tpu.memory_space<vmem>>, %arg6: memref<16x128xbf16, #tpu.memory_space<vmem>>) attributes {dimension_semantics = [#tpu.dimension_semantics<parallel>, #tpu.dimension_semantics<parallel>], iteration_bounds = array<i64: 2, 2>, scalar_prefetch = 0 : i64, scratch_operands = 0 : i64, tpu.core_type = #tpu.core_type<tc>, window_params = [{transform_indices = @transform_0, window_bounds = array<i64: 16, 128>}, {transform_indices = @transform_1, window_bounds = array<i64: 16, 128>}, {transform_indices = @transform_2, window_bounds = array<i64: 16, 128>}, {transform_indices = @transform_3, window_bounds = array<i64: 1, 1, 16>}, {transform_indices = @transform_4, window_bounds = array<i64: 16, 128>}]} {
    %c0 = arith.constant 0 : index
    %c0_0 = arith.constant 0 : index
    %c0_1 = arith.constant 0 : index
    %0 = vector.load %arg5[%c0, %c0_0, %c0_1] : memref<1x1x16xf32, #tpu.memory_space<vmem>>, vector<1x1x16xf32>
    %1 = vector.shape_cast %0 : vector<1x1x16xf32> to vector<1x16xf32>
    %c0_2 = arith.constant 0 : index
    %c0_3 = arith.constant 0 : index
    %2 = vector.load %arg2[%c0_2, %c0_3] : memref<16x128xbf16, #tpu.memory_space<vmem>>, vector<16x128xbf16>
    %c0_4 = arith.constant 0 : index
    %c0_5 = arith.constant 0 : index
    %3 = vector.load %arg3[%c0_4, %c0_5] : memref<16x128xbf16, #tpu.memory_space<vmem>>, vector<16x128xbf16>
    %c0_6 = arith.constant 0 : index
    %c0_7 = arith.constant 0 : index
    %4 = vector.load %arg4[%c0_6, %c0_7] : memref<16x128xbf16, #tpu.memory_space<vmem>>, vector<16x128xbf16>
    %5 = tpu.transpose %3, [1, 0] : vector<16x128xbf16> -> vector<128x16xbf16>
    %cst = arith.constant dense<0.000000e+00> : vector<16x16xf32>
    %6 = tpu.matmul %2, %5, %cst {dimension_numbers = #tpu.dot_dimension_numbers<[1], [0], [0], [1], [0, 0, 1, 1], [], []>} : vector<16x128xbf16>, vector<128x16xbf16>, vector<16x16xf32> -> vector<16x16xf32>
    %7 = vector.broadcast %1 : vector<1x16xf32> to vector<16x16xf32>
    %8 = arith.addf %6, %7 : vector<16x16xf32>
    %cst_8 = arith.constant dense<0xFF800000> : vector<16xf32>
    %9 = vector.multi_reduction <maximumf>, %8, %cst_8 [1] : vector<16x16xf32> to vector<16xf32>
    %10 = vector.shape_cast %9 : vector<16xf32> to vector<16x1xf32>
    %11 = vector.broadcast %10 : vector<16x1xf32> to vector<16x16xf32>
    %12 = arith.subf %8, %11 : vector<16x16xf32>
    %13 = math.exp %12 : vector<16x16xf32>
    %cst_9 = arith.constant dense<0.000000e+00> : vector<16xf32>
    %14 = vector.multi_reduction <add>, %13, %cst_9 [1] : vector<16x16xf32> to vector<16xf32>
    %15 = vector.shape_cast %14 : vector<16xf32> to vector<16x1xf32>
    %16 = tpu.reciprocal %15 {approx = true} : vector<16x1xf32> -> vector<16x1xf32>
    %17 = vector.broadcast %16 : vector<16x1xf32> to vector<16x16xf32>
    %18 = arith.mulf %13, %17 : vector<16x16xf32>
    %19 = arith.truncf %18 : vector<16x16xf32> to vector<16x16xbf16>
    %cst_10 = arith.constant dense<0.000000e+00> : vector<16x128xf32>
    %20 = tpu.matmul %19, %4, %cst_10 {dimension_numbers = #tpu.dot_dimension_numbers<[1], [0], [0], [1], [0, 0, 1, 1], [], []>} : vector<16x16xbf16>, vector<16x128xbf16>, vector<16x128xf32> -> vector<16x128xf32>
    %21 = arith.truncf %20 : vector<16x128xf32> to vector<16x128xbf16>
    %c0_11 = arith.constant 0 : index
    %c0_12 = arith.constant 0 : index
    %22 = vector.load %arg6[%c0_11, %c0_12] : memref<16x128xbf16, #tpu.memory_space<vmem>>, vector<16x128xbf16>
    tpu.vector_store %arg6[%c0_11, %c0_12], %21 {strides = array<i32>} : memref<16x128xbf16, #tpu.memory_space<vmem>>, vector<16x128xbf16>,
    return
  }
  func.func @transform_0(%arg0: i32, %arg1: i32) -> (i32, i32) {
    %c0_i32 = arith.constant 0 : i32
    return %arg0, %arg1 : i32, i32
  }
  func.func @transform_1(%arg0: i32, %arg1: i32) -> (i32, i32) {
    %c2_i32 = arith.constant 2 : i32
    %0 = arith.addi %c2_i32, %arg1 : i32
    %c0_i32 = arith.constant 0 : i32
    return %arg0, %0 : i32, i32
  }
  func.func @transform_2(%arg0: i32, %arg1: i32) -> (i32, i32) {
    %c4_i32 = arith.constant 4 : i32
    %0 = arith.addi %c4_i32, %arg1 : i32
    %c0_i32 = arith.constant 0 : i32
    return %arg0, %0 : i32, i32
  }
  func.func @transform_3(%arg0: i32, %arg1: i32) -> (i32, i32, i32) {
    %c0_i32 = arith.constant 0 : i32
    %c0_i32_0 = arith.constant 0 : i32
    %c0_i32_1 = arith.constant 0 : i32
    return %arg0, %c0_i32, %c0_i32_0 : i32, i32, i32
  }
  func.func @transform_4(%arg0: i32, %arg1: i32) -> (i32, i32) {
    %c0_i32 = arith.constant 0 : i32
    return %arg0, %arg1 : i32, i32
  }
}

module attributes {stable_mosaic.version = 11 : i64} {
  func.func @_mm_res_ln_kernel(%arg0: i32, %arg1: memref<32x256xbf16, #tpu.memory_space<vmem>>, %arg2: memref<256x256xbf16, #tpu.memory_space<vmem>>, %arg3: memref<1x256xf32, #tpu.memory_space<vmem>>, %arg4: memref<32x256xbf16, #tpu.memory_space<vmem>>, %arg5: memref<1x256xf32, #tpu.memory_space<vmem>>, %arg6: memref<1x256xf32, #tpu.memory_space<vmem>>, %arg7: memref<32x256xbf16, #tpu.memory_space<vmem>>) attributes {dimension_semantics = [#tpu.dimension_semantics<parallel>], iteration_bounds = array<i64: 1>, scalar_prefetch = 0 : i64, scratch_operands = 0 : i64, tpu.core_type = #tpu.core_type<tc>, window_params = [{transform_indices = @transform_0, window_bounds = array<i64: 32, 256>}, {pipeline_mode = #tpu.pipeline_mode<synchronous>, transform_indices = @transform_1, window_bounds = array<i64: 256, 256>}, {pipeline_mode = #tpu.pipeline_mode<synchronous>, transform_indices = @transform_2, window_bounds = array<i64: 1, 256>}, {transform_indices = @transform_3, window_bounds = array<i64: 32, 256>}, {pipeline_mode = #tpu.pipeline_mode<synchronous>, transform_indices = @transform_4, window_bounds = array<i64: 1, 256>}, {pipeline_mode = #tpu.pipeline_mode<synchronous>, transform_indices = @transform_5, window_bounds = array<i64: 1, 256>}, {transform_indices = @transform_6, window_bounds = array<i64: 32, 256>}]} {
    %c0 = arith.constant 0 : index
    %c0_0 = arith.constant 0 : index
    %0 = vector.load %arg1[%c0, %c0_0] : memref<32x256xbf16, #tpu.memory_space<vmem>>, vector<32x256xbf16>
    %c0_1 = arith.constant 0 : index
    %c0_2 = arith.constant 0 : index
    %1 = vector.load %arg2[%c0_1, %c0_2] : memref<256x256xbf16, #tpu.memory_space<vmem>>, vector<256x256xbf16>
    %cst = arith.constant dense<0.000000e+00> : vector<32x256xf32>
    %2 = tpu.matmul %0, %1, %cst {dimension_numbers = #tpu.dot_dimension_numbers<[1], [0], [0], [1], [0, 0, 1, 1], [], []>} : vector<32x256xbf16>, vector<256x256xbf16>, vector<32x256xf32> -> vector<32x256xf32>
    %c0_3 = arith.constant 0 : index
    %c0_4 = arith.constant 0 : index
    %3 = vector.load %arg3[%c0_3, %c0_4] : memref<1x256xf32, #tpu.memory_space<vmem>>, vector<1x256xf32>
    %4 = vector.broadcast %3 : vector<1x256xf32> to vector<32x256xf32>
    %5 = arith.addf %2, %4 : vector<32x256xf32>
    %c0_5 = arith.constant 0 : index
    %c0_6 = arith.constant 0 : index
    %6 = vector.load %arg4[%c0_5, %c0_6] : memref<32x256xbf16, #tpu.memory_space<vmem>>, vector<32x256xbf16>
    %7 = arith.extf %6 : vector<32x256xbf16> to vector<32x256xf32>
    %8 = arith.addf %5, %7 : vector<32x256xf32>
    %cst_7 = arith.constant dense<0.000000e+00> : vector<32xf32>
    %9 = vector.multi_reduction <add>, %8, %cst_7 [1] : vector<32x256xf32> to vector<32xf32>
    %10 = vector.shape_cast %9 : vector<32xf32> to vector<32x1xf32>
    %cst_8 = arith.constant 2.560000e+02 : f32
    %11 = vector.broadcast %cst_8 : f32 to vector<32x1xf32>
    %12 = arith.divf %10, %11 : vector<32x1xf32>
    %13 = vector.broadcast %12 : vector<32x1xf32> to vector<32x256xf32>
    %14 = arith.subf %8, %13 : vector<32x256xf32>
    %15 = arith.mulf %14, %14 : vector<32x256xf32>
    %cst_9 = arith.constant dense<0.000000e+00> : vector<32xf32>
    %16 = vector.multi_reduction <add>, %15, %cst_9 [1] : vector<32x256xf32> to vector<32xf32>
    %17 = vector.shape_cast %16 : vector<32xf32> to vector<32x1xf32>
    %cst_10 = arith.constant 2.560000e+02 : f32
    %18 = vector.broadcast %cst_10 : f32 to vector<32x1xf32>
    %19 = arith.divf %17, %18 : vector<32x1xf32>
    %20 = vector.broadcast %12 : vector<32x1xf32> to vector<32x256xf32>
    %21 = arith.subf %8, %20 : vector<32x256xf32>
    %cst_11 = arith.constant 9.99999996E-13 : f32
    %22 = vector.broadcast %cst_11 : f32 to vector<32x1xf32>
    %23 = arith.addf %19, %22 : vector<32x1xf32>
    %24 = math.rsqrt %23 : vector<32x1xf32>
    %25 = vector.broadcast %24 : vector<32x1xf32> to vector<32x256xf32>
    %26 = arith.mulf %21, %25 : vector<32x256xf32>
    %c0_12 = arith.constant 0 : index
    %c0_13 = arith.constant 0 : index
    %27 = vector.load %arg5[%c0_12, %c0_13] : memref<1x256xf32, #tpu.memory_space<vmem>>, vector<1x256xf32>
    %28 = vector.broadcast %27 : vector<1x256xf32> to vector<32x256xf32>
    %29 = arith.mulf %26, %28 : vector<32x256xf32>
    %c0_14 = arith.constant 0 : index
    %c0_15 = arith.constant 0 : index
    %30 = vector.load %arg6[%c0_14, %c0_15] : memref<1x256xf32, #tpu.memory_space<vmem>>, vector<1x256xf32>
    %31 = vector.broadcast %30 : vector<1x256xf32> to vector<32x256xf32>
    %32 = arith.addf %29, %31 : vector<32x256xf32>
    %33 = arith.truncf %32 : vector<32x256xf32> to vector<32x256xbf16>
    %c0_16 = arith.constant 0 : index
    %c0_17 = arith.constant 0 : index
    %34 = vector.load %arg7[%c0_16, %c0_17] : memref<32x256xbf16, #tpu.memory_space<vmem>>, vector<32x256xbf16>
    tpu.vector_store %arg7[%c0_16, %c0_17], %33 {strides = array<i32>} : memref<32x256xbf16, #tpu.memory_space<vmem>>, vector<32x256xbf16>,
    return
  }
  func.func @transform_0(%arg0: i32) -> (i32, i32) {
    %c0_i32 = arith.constant 0 : i32
    %c0_i32_0 = arith.constant 0 : i32
    return %arg0, %c0_i32 : i32, i32
  }
  func.func @transform_1(%arg0: i32) -> (i32, i32) {
    %c0_i32 = arith.constant 0 : i32
    %c0_i32_0 = arith.constant 0 : i32
    %c0_i32_1 = arith.constant 0 : i32
    return %c0_i32, %c0_i32_0 : i32, i32
  }
  func.func @transform_2(%arg0: i32) -> (i32, i32) {
    %c0_i32 = arith.constant 0 : i32
    %c0_i32_0 = arith.constant 0 : i32
    %c0_i32_1 = arith.constant 0 : i32
    return %c0_i32, %c0_i32_0 : i32, i32
  }
  func.func @transform_3(%arg0: i32) -> (i32, i32) {
    %c0_i32 = arith.constant 0 : i32
    %c0_i32_0 = arith.constant 0 : i32
    return %arg0, %c0_i32 : i32, i32
  }
  func.func @transform_4(%arg0: i32) -> (i32, i32) {
    %c0_i32 = arith.constant 0 : i32
    %c0_i32_0 = arith.constant 0 : i32
    %c0_i32_1 = arith.constant 0 : i32
    return %c0_i32, %c0_i32_0 : i32, i32
  }
  func.func @transform_5(%arg0: i32) -> (i32, i32) {
    %c0_i32 = arith.constant 0 : i32
    %c0_i32_0 = arith.constant 0 : i32
    %c0_i32_1 = arith.constant 0 : i32
    return %c0_i32, %c0_i32_0 : i32, i32
  }
  func.func @transform_6(%arg0: i32) -> (i32, i32) {
    %c0_i32 = arith.constant 0 : i32
    %c0_i32_0 = arith.constant 0 : i32
    return %arg0, %c0_i32 : i32, i32
  }
}

module attributes {stable_mosaic.version = 11 : i64} {
  func.func @_meanpool_kernel(%arg0: i32, %arg1: memref<2x16x256xbf16, #tpu.memory_space<vmem>>, %arg2: memref<2x256xf32, #tpu.memory_space<vmem>>, %arg3: memref<2x256xf32, #tpu.memory_space<vmem>>) attributes {dimension_semantics = [#tpu.dimension_semantics<arbitrary>], iteration_bounds = array<i64: 1>, scalar_prefetch = 0 : i64, scratch_operands = 1 : i64, tpu.core_type = #tpu.core_type<tc>, window_params = [{transform_indices = @transform_0, window_bounds = array<i64: 2, 16, 256>}, {pipeline_mode = #tpu.pipeline_mode<synchronous>, transform_indices = @transform_1, window_bounds = array<i64: 2, 256>}]} {
    %c0_i32 = arith.constant 0 : i32
    %0 = arith.cmpi eq, %arg0, %c0_i32 : i32
    %1 = arith.extui %0 : i1 to i32
    %c0_i32_0 = arith.constant 0 : i32
    %2 = arith.cmpi ne, %1, %c0_i32_0 : i32
    scf.if %2 {
      %cst_9 = arith.constant 0.000000e+00 : f32
      %12 = vector.broadcast %cst_9 : f32 to vector<2x256xf32>
      %c0_10 = arith.constant 0 : index
      %c0_11 = arith.constant 0 : index
      %13 = vector.load %arg3[%c0_10, %c0_11] : memref<2x256xf32, #tpu.memory_space<vmem>>, vector<2x256xf32>
      tpu.vector_store %arg3[%c0_10, %c0_11], %12 {strides = array<i32>} : memref<2x256xf32, #tpu.memory_space<vmem>>, vector<2x256xf32>,
    } else {
    }
    %c0 = arith.constant 0 : index
    %c0_1 = arith.constant 0 : index
    %3 = vector.load %arg3[%c0, %c0_1] : memref<2x256xf32, #tpu.memory_space<vmem>>, vector<2x256xf32>
    %c0_2 = arith.constant 0 : index
    %c0_3 = arith.constant 0 : index
    %c0_4 = arith.constant 0 : index
    %4 = vector.load %arg1[%c0_2, %c0_3, %c0_4] : memref<2x16x256xbf16, #tpu.memory_space<vmem>>, vector<2x16x256xbf16>
    %5 = arith.extf %4 : vector<2x16x256xbf16> to vector<2x16x256xf32>
    %cst = arith.constant dense<0.000000e+00> : vector<2x256xf32>
    %6 = vector.multi_reduction <add>, %5, %cst [1] : vector<2x16x256xf32> to vector<2x256xf32>
    %7 = arith.addf %3, %6 : vector<2x256xf32>
    %c0_5 = arith.constant 0 : index
    %c0_6 = arith.constant 0 : index
    %8 = vector.load %arg3[%c0_5, %c0_6] : memref<2x256xf32, #tpu.memory_space<vmem>>, vector<2x256xf32>
    tpu.vector_store %arg3[%c0_5, %c0_6], %7 {strides = array<i32>} : memref<2x256xf32, #tpu.memory_space<vmem>>, vector<2x256xf32>,
    %c0_i32_7 = arith.constant 0 : i32
    %9 = arith.cmpi eq, %arg0, %c0_i32_7 : i32
    %10 = arith.extui %9 : i1 to i32
    %c0_i32_8 = arith.constant 0 : i32
    %11 = arith.cmpi ne, %10, %c0_i32_8 : i32
    scf.if %11 {
      %c0_9 = arith.constant 0 : index
      %c0_10 = arith.constant 0 : index
      %12 = vector.load %arg3[%c0_9, %c0_10] : memref<2x256xf32, #tpu.memory_space<vmem>>, vector<2x256xf32>
      %cst_11 = arith.constant 6.250000e-02 : f32
      %13 = vector.broadcast %cst_11 : f32 to vector<2x256xf32>
      %14 = arith.mulf %12, %13 : vector<2x256xf32>
      %c0_12 = arith.constant 0 : index
      %c0_13 = arith.constant 0 : index
      %15 = vector.load %arg2[%c0_12, %c0_13] : memref<2x256xf32, #tpu.memory_space<vmem>>, vector<2x256xf32>
      tpu.vector_store %arg2[%c0_12, %c0_13], %14 {strides = array<i32>} : memref<2x256xf32, #tpu.memory_space<vmem>>, vector<2x256xf32>,
    } else {
    }
    return
  }
  func.func @transform_0(%arg0: i32) -> (i32, i32, i32) {
    %c0_i32 = arith.constant 0 : i32
    %c0_i32_0 = arith.constant 0 : i32
    %c0_i32_1 = arith.constant 0 : i32
    return %c0_i32, %arg0, %c0_i32_0 : i32, i32, i32
  }
  func.func @transform_1(%arg0: i32) -> (i32, i32) {
    %c0_i32 = arith.constant 0 : i32
    %c0_i32_0 = arith.constant 0 : i32
    %c0_i32_1 = arith.constant 0 : i32
    return %c0_i32, %c0_i32_0 : i32, i32
  }
}

module attributes {stable_mosaic.version = 11 : i64} {
  func.func @_mm_kernel(%arg0: i32, %arg1: memref<32x256xbf16, #tpu.memory_space<vmem>>, %arg2: memref<256x512xbf16, #tpu.memory_space<vmem>>, %arg3: memref<1x512xf32, #tpu.memory_space<vmem>>, %arg4: memref<32x512xbf16, #tpu.memory_space<vmem>>) attributes {dimension_semantics = [#tpu.dimension_semantics<parallel>], iteration_bounds = array<i64: 1>, scalar_prefetch = 0 : i64, scratch_operands = 0 : i64, tpu.core_type = #tpu.core_type<tc>, window_params = [{transform_indices = @transform_0, window_bounds = array<i64: 32, 256>}, {pipeline_mode = #tpu.pipeline_mode<synchronous>, transform_indices = @transform_1, window_bounds = array<i64: 256, 512>}, {pipeline_mode = #tpu.pipeline_mode<synchronous>, transform_indices = @transform_2, window_bounds = array<i64: 1, 512>}, {transform_indices = @transform_3, window_bounds = array<i64: 32, 512>}]} {
    %c0 = arith.constant 0 : index
    %c0_0 = arith.constant 0 : index
    %0 = vector.load %arg1[%c0, %c0_0] : memref<32x256xbf16, #tpu.memory_space<vmem>>, vector<32x256xbf16>
    %c0_1 = arith.constant 0 : index
    %c0_2 = arith.constant 0 : index
    %1 = vector.load %arg2[%c0_1, %c0_2] : memref<256x512xbf16, #tpu.memory_space<vmem>>, vector<256x512xbf16>
    %cst = arith.constant dense<0.000000e+00> : vector<32x512xf32>
    %2 = tpu.matmul %0, %1, %cst {dimension_numbers = #tpu.dot_dimension_numbers<[1], [0], [0], [1], [0, 0, 1, 1], [], []>} : vector<32x256xbf16>, vector<256x512xbf16>, vector<32x512xf32> -> vector<32x512xf32>
    %c0_3 = arith.constant 0 : index
    %c0_4 = arith.constant 0 : index
    %3 = vector.load %arg3[%c0_3, %c0_4] : memref<1x512xf32, #tpu.memory_space<vmem>>, vector<1x512xf32>
    %4 = vector.broadcast %3 : vector<1x512xf32> to vector<32x512xf32>
    %5 = arith.addf %2, %4 : vector<32x512xf32>
    %6 = arith.mulf %5, %5 : vector<32x512xf32>
    %7 = arith.mulf %5, %6 : vector<32x512xf32>
    %cst_5 = arith.constant 4.471500e-02 : f32
    %8 = vector.broadcast %cst_5 : f32 to vector<32x512xf32>
    %9 = arith.mulf %8, %7 : vector<32x512xf32>
    %10 = arith.addf %5, %9 : vector<32x512xf32>
    %cst_6 = arith.constant 0.797884583 : f32
    %11 = vector.broadcast %cst_6 : f32 to vector<32x512xf32>
    %12 = arith.mulf %11, %10 : vector<32x512xf32>
    %13 = math.tanh %12 : vector<32x512xf32>
    %cst_7 = arith.constant 1.000000e+00 : f32
    %14 = vector.broadcast %cst_7 : f32 to vector<32x512xf32>
    %15 = arith.addf %14, %13 : vector<32x512xf32>
    %cst_8 = arith.constant 5.000000e-01 : f32
    %16 = vector.broadcast %cst_8 : f32 to vector<32x512xf32>
    %17 = arith.mulf %16, %15 : vector<32x512xf32>
    %18 = arith.mulf %5, %17 : vector<32x512xf32>
    %19 = arith.truncf %18 : vector<32x512xf32> to vector<32x512xbf16>
    %c0_9 = arith.constant 0 : index
    %c0_10 = arith.constant 0 : index
    %20 = vector.load %arg4[%c0_9, %c0_10] : memref<32x512xbf16, #tpu.memory_space<vmem>>, vector<32x512xbf16>
    tpu.vector_store %arg4[%c0_9, %c0_10], %19 {strides = array<i32>} : memref<32x512xbf16, #tpu.memory_space<vmem>>, vector<32x512xbf16>,
    return
  }
  func.func @transform_0(%arg0: i32) -> (i32, i32) {
    %c0_i32 = arith.constant 0 : i32
    %c0_i32_0 = arith.constant 0 : i32
    return %arg0, %c0_i32 : i32, i32
  }
  func.func @transform_1(%arg0: i32) -> (i32, i32) {
    %c0_i32 = arith.constant 0 : i32
    %c0_i32_0 = arith.constant 0 : i32
    %c0_i32_1 = arith.constant 0 : i32
    return %c0_i32, %c0_i32_0 : i32, i32
  }
  func.func @transform_2(%arg0: i32) -> (i32, i32) {
    %c0_i32 = arith.constant 0 : i32
    %c0_i32_0 = arith.constant 0 : i32
    %c0_i32_1 = arith.constant 0 : i32
    return %c0_i32, %c0_i32_0 : i32, i32
  }
  func.func @transform_3(%arg0: i32) -> (i32, i32) {
    %c0_i32 = arith.constant 0 : i32
    %c0_i32_0 = arith.constant 0 : i32
    return %arg0, %c0_i32 : i32, i32
  }
}

module attributes {stable_mosaic.version = 11 : i64} {
  func.func @_mm_res_ln_kernel(%arg0: i32, %arg1: memref<32x512xbf16, #tpu.memory_space<vmem>>, %arg2: memref<512x256xbf16, #tpu.memory_space<vmem>>, %arg3: memref<1x256xf32, #tpu.memory_space<vmem>>, %arg4: memref<32x256xbf16, #tpu.memory_space<vmem>>, %arg5: memref<1x256xf32, #tpu.memory_space<vmem>>, %arg6: memref<1x256xf32, #tpu.memory_space<vmem>>, %arg7: memref<32x256xbf16, #tpu.memory_space<vmem>>) attributes {dimension_semantics = [#tpu.dimension_semantics<parallel>], iteration_bounds = array<i64: 1>, scalar_prefetch = 0 : i64, scratch_operands = 0 : i64, tpu.core_type = #tpu.core_type<tc>, window_params = [{transform_indices = @transform_0, window_bounds = array<i64: 32, 512>}, {pipeline_mode = #tpu.pipeline_mode<synchronous>, transform_indices = @transform_1, window_bounds = array<i64: 512, 256>}, {pipeline_mode = #tpu.pipeline_mode<synchronous>, transform_indices = @transform_2, window_bounds = array<i64: 1, 256>}, {transform_indices = @transform_3, window_bounds = array<i64: 32, 256>}, {pipeline_mode = #tpu.pipeline_mode<synchronous>, transform_indices = @transform_4, window_bounds = array<i64: 1, 256>}, {pipeline_mode = #tpu.pipeline_mode<synchronous>, transform_indices = @transform_5, window_bounds = array<i64: 1, 256>}, {transform_indices = @transform_6, window_bounds = array<i64: 32, 256>}]} {
    %c0 = arith.constant 0 : index
    %c0_0 = arith.constant 0 : index
    %0 = vector.load %arg1[%c0, %c0_0] : memref<32x512xbf16, #tpu.memory_space<vmem>>, vector<32x512xbf16>
    %c0_1 = arith.constant 0 : index
    %c0_2 = arith.constant 0 : index
    %1 = vector.load %arg2[%c0_1, %c0_2] : memref<512x256xbf16, #tpu.memory_space<vmem>>, vector<512x256xbf16>
    %cst = arith.constant dense<0.000000e+00> : vector<32x256xf32>
    %2 = tpu.matmul %0, %1, %cst {dimension_numbers = #tpu.dot_dimension_numbers<[1], [0], [0], [1], [0, 0, 1, 1], [], []>} : vector<32x512xbf16>, vector<512x256xbf16>, vector<32x256xf32> -> vector<32x256xf32>
    %c0_3 = arith.constant 0 : index
    %c0_4 = arith.constant 0 : index
    %3 = vector.load %arg3[%c0_3, %c0_4] : memref<1x256xf32, #tpu.memory_space<vmem>>, vector<1x256xf32>
    %4 = vector.broadcast %3 : vector<1x256xf32> to vector<32x256xf32>
    %5 = arith.addf %2, %4 : vector<32x256xf32>
    %c0_5 = arith.constant 0 : index
    %c0_6 = arith.constant 0 : index
    %6 = vector.load %arg4[%c0_5, %c0_6] : memref<32x256xbf16, #tpu.memory_space<vmem>>, vector<32x256xbf16>
    %7 = arith.extf %6 : vector<32x256xbf16> to vector<32x256xf32>
    %8 = arith.addf %5, %7 : vector<32x256xf32>
    %cst_7 = arith.constant dense<0.000000e+00> : vector<32xf32>
    %9 = vector.multi_reduction <add>, %8, %cst_7 [1] : vector<32x256xf32> to vector<32xf32>
    %10 = vector.shape_cast %9 : vector<32xf32> to vector<32x1xf32>
    %cst_8 = arith.constant 2.560000e+02 : f32
    %11 = vector.broadcast %cst_8 : f32 to vector<32x1xf32>
    %12 = arith.divf %10, %11 : vector<32x1xf32>
    %13 = vector.broadcast %12 : vector<32x1xf32> to vector<32x256xf32>
    %14 = arith.subf %8, %13 : vector<32x256xf32>
    %15 = arith.mulf %14, %14 : vector<32x256xf32>
    %cst_9 = arith.constant dense<0.000000e+00> : vector<32xf32>
    %16 = vector.multi_reduction <add>, %15, %cst_9 [1] : vector<32x256xf32> to vector<32xf32>
    %17 = vector.shape_cast %16 : vector<32xf32> to vector<32x1xf32>
    %cst_10 = arith.constant 2.560000e+02 : f32
    %18 = vector.broadcast %cst_10 : f32 to vector<32x1xf32>
    %19 = arith.divf %17, %18 : vector<32x1xf32>
    %20 = vector.broadcast %12 : vector<32x1xf32> to vector<32x256xf32>
    %21 = arith.subf %8, %20 : vector<32x256xf32>
    %cst_11 = arith.constant 9.99999996E-13 : f32
    %22 = vector.broadcast %cst_11 : f32 to vector<32x1xf32>
    %23 = arith.addf %19, %22 : vector<32x1xf32>
    %24 = math.rsqrt %23 : vector<32x1xf32>
    %25 = vector.broadcast %24 : vector<32x1xf32> to vector<32x256xf32>
    %26 = arith.mulf %21, %25 : vector<32x256xf32>
    %c0_12 = arith.constant 0 : index
    %c0_13 = arith.constant 0 : index
    %27 = vector.load %arg5[%c0_12, %c0_13] : memref<1x256xf32, #tpu.memory_space<vmem>>, vector<1x256xf32>
    %28 = vector.broadcast %27 : vector<1x256xf32> to vector<32x256xf32>
    %29 = arith.mulf %26, %28 : vector<32x256xf32>
    %c0_14 = arith.constant 0 : index
    %c0_15 = arith.constant 0 : index
    %30 = vector.load %arg6[%c0_14, %c0_15] : memref<1x256xf32, #tpu.memory_space<vmem>>, vector<1x256xf32>
    %31 = vector.broadcast %30 : vector<1x256xf32> to vector<32x256xf32>
    %32 = arith.addf %29, %31 : vector<32x256xf32>
    %33 = arith.truncf %32 : vector<32x256xf32> to vector<32x256xbf16>
    %c0_16 = arith.constant 0 : index
    %c0_17 = arith.constant 0 : index
    %34 = vector.load %arg7[%c0_16, %c0_17] : memref<32x256xbf16, #tpu.memory_space<vmem>>, vector<32x256xbf16>
    tpu.vector_store %arg7[%c0_16, %c0_17], %33 {strides = array<i32>} : memref<32x256xbf16, #tpu.memory_space<vmem>>, vector<32x256xbf16>,
    return
  }
  func.func @transform_0(%arg0: i32) -> (i32, i32) {
    %c0_i32 = arith.constant 0 : i32
    %c0_i32_0 = arith.constant 0 : i32
    return %arg0, %c0_i32 : i32, i32
  }
  func.func @transform_1(%arg0: i32) -> (i32, i32) {
    %c0_i32 = arith.constant 0 : i32
    %c0_i32_0 = arith.constant 0 : i32
    %c0_i32_1 = arith.constant 0 : i32
    return %c0_i32, %c0_i32_0 : i32, i32
  }
  func.func @transform_2(%arg0: i32) -> (i32, i32) {
    %c0_i32 = arith.constant 0 : i32
    %c0_i32_0 = arith.constant 0 : i32
    %c0_i32_1 = arith.constant 0 : i32
    return %c0_i32, %c0_i32_0 : i32, i32
  }
  func.func @transform_3(%arg0: i32) -> (i32, i32) {
    %c0_i32 = arith.constant 0 : i32
    %c0_i32_0 = arith.constant 0 : i32
    return %arg0, %c0_i32 : i32, i32
  }
  func.func @transform_4(%arg0: i32) -> (i32, i32) {
    %c0_i32 = arith.constant 0 : i32
    %c0_i32_0 = arith.constant 0 : i32
    %c0_i32_1 = arith.constant 0 : i32
    return %c0_i32, %c0_i32_0 : i32, i32
  }
  func.func @transform_5(%arg0: i32) -> (i32, i32) {
    %c0_i32 = arith.constant 0 : i32
    %c0_i32_0 = arith.constant 0 : i32
    %c0_i32_1 = arith.constant 0 : i32
    return %c0_i32, %c0_i32_0 : i32, i32
  }
  func.func @transform_6(%arg0: i32) -> (i32, i32) {
    %c0_i32 = arith.constant 0 : i32
    %c0_i32_0 = arith.constant 0 : i32
    return %arg0, %c0_i32 : i32, i32
  }
}

</mosaic_0001>

<llo_original>
// kernel: bert_sentence_encoder.12
$region0: #{bert_sentence_encoder.12}
  #allocation0 [shape = 'u32[]', space=smem, size = 0x4, offset = 0x4, fixed_abs, tag = 'smem constant byte address 0x4 - core index']
  #allocation1 [shape = 'u32[144,128]{1,0:T(1,128)}', space=vmem, size = 0x12000, scoped, tag = 'internal scratch']
  %s0 = inlined_call_operand.vmem [shape: f32[32,256], index: 0, kind: input, shape index: {}]
  %s1 = inlined_call_operand.vmem [shape: f32[1,256], index: 1, kind: input, shape index: {}]
  %s2 = inlined_call_operand.vmem [shape: f32[1,256], index: 2, kind: input, shape index: {}]
  %s3 = inlined_call_operand.vmem [shape: bf16[32,256], index: 3, kind: output, shape index: {}]
  %s4 = sld [smem:[#allocation0]]
  $region22: #{bert_sentence_encoder.12} parent=0
    _
  %s6 = ssub.s32 1, %s4
  %s7 = scalar_select 0, %s6, %s4
  // Predicated region
  $region2: #{bert_sentence_encoder.12} parent=0 // pred_check
    _
  $region3: #{bert_sentence_encoder.12} parent=0 // pred_check_branch
    %9 = sbr.rel (0) target = $region5
  $region4: #{bert_sentence_encoder.12} parent=0 // pred_region
    _
  $region5: #{bert_sentence_encoder.12} parent=0 // pred_fallthru
    _
  // Predicated region
  $region6: #{bert_sentence_encoder.12} parent=0 // pred_check
    _
  $region7: #{bert_sentence_encoder.12} parent=0 // pred_check_branch
    %11 = sbr.rel (0) target = $region9
  $region8: #{bert_sentence_encoder.12} parent=0 // pred_region
    _
  $region9: #{bert_sentence_encoder.12} parent=0 // pred_fallthru
    _
  // Predicated region
  $region10: #{bert_sentence_encoder.12} parent=0 // pred_check
    _
  $region11: #{bert_sentence_encoder.12} parent=0 // pred_check_branch
    %13 = sbr.rel (0) target = $region13
  $region12: #{bert_sentence_encoder.12} parent=0 // pred_region
    _
  $region13: #{bert_sentence_encoder.12} parent=0 // pred_fallthru
    _
  %v14 = vld [vmem:[%s0] sm:$0xff]
  %v15 = vld [vmem:[%s0 + $0x8] sm:$0xff]
  %v16 = vld [vmem:[%s0 + $0x10] sm:$0xff]
  %v17 = vld [vmem:[%s0 + $0x18] sm:$0xff]
  %v18 = vld [vmem:[%s0 + $0x20] sm:$0xff]
  %v19 = vld [vmem:[%s0 + $0x28] sm:$0xff]
  %v20 = vld [vmem:[%s0 + $0x30] sm:$0xff]
  %v21 = vld [vmem:[%s0 + $0x38] sm:$0xff]
  %v22 = vadd.f32 %v14, %v15
  %23 = vadd.xlane.f32.xlu0 %v22
  %v24 = vpop.xlane.xlu0 %23
  %v25 = vadd.f32 %v16, %v17
  %26 = vadd.xlane.f32.xlu0 %v25
  %v27 = vpop.xlane.xlu0 %26
  %v28 = vadd.f32 %v18, %v19
  %29 = vadd.xlane.f32.xlu0 %v28
  %v30 = vpop.xlane.xlu0 %29
  %v31 = vadd.f32 %v20, %v21
  %32 = vadd.xlane.f32.xlu0 %v31
  %v33 = vpop.xlane.xlu0 %32
  %v34 = vrcp.pop 256.0
  %v35 = vmul.f32 %v24, %v34
  %v36 = vmul.f32 %v27, %v34
  %v37 = vmul.f32 %v30, %v34
  %v38 = vmul.f32 %v33, %v34
  %v39 = vsub.f32 %v14, %v35
  %v40 = vsub.f32 %v15, %v35
  %v41 = vsub.f32 %v16, %v36
  %v42 = vsub.f32 %v17, %v36
  %v43 = vsub.f32 %v18, %v37
  %v44 = vsub.f32 %v19, %v37
  %v45 = vsub.f32 %v20, %v38
  %v46 = vsub.f32 %v21, %v38
  %v47 = vmul.f32 %v39, %v39
  %v48 = vmul.f32 %v40, %v40
  %v49 = vmul.f32 %v41, %v41
  %v50 = vmul.f32 %v42, %v42
  %v51 = vmul.f32 %v43, %v43
  %v52 = vmul.f32 %v44, %v44
  %v53 = vmul.f32 %v45, %v45
  %v54 = vmul.f32 %v46, %v46
  %v55 = vadd.f32 %v47, %v48
  %56 = vadd.xlane.f32.xlu0 %v55
  %v57 = vpop.xlane.xlu0 %56
  %v58 = vadd.f32 %v49, %v50
  %59 = vadd.xlane.f32.xlu0 %v58
  %v60 = vpop.xlane.xlu0 %59
  %v61 = vadd.f32 %v51, %v52
  %62 = vadd.xlane.f32.xlu0 %v61
  %v63 = vpop.xlane.xlu0 %62
  %v64 = vadd.f32 %v53, %v54
  %65 = vadd.xlane.f32.xlu0 %v64
  %v66 = vpop.xlane.xlu0 %65
  %v67 = vmul.f32 %v57, %v34
  %v68 = vmul.f32 %v60, %v34
  %v69 = vmul.f32 %v63, %v34
  %v70 = vmul.f32 %v66, %v34
  %v71 = vadd.f32 %v67, 1e-12
  %v72 = vadd.f32 %v68, 1e-12
  %v73 = vadd.f32 %v69, 1e-12
  %v74 = vadd.f32 %v70, 1e-12
  %v75 = vrsqrt.pop %v71
  %v76 = vrsqrt.pop %v72
  %v77 = vrsqrt.pop %v73
  %v78 = vrsqrt.pop %v74
  %v79 = vmul.f32 %v39, %v75
  %v80 = vmul.f32 %v40, %v75
  %v81 = vmul.f32 %v41, %v76
  %v82 = vmul.f32 %v42, %v76
  %v83 = vmul.f32 %v43, %v77
  %v84 = vmul.f32 %v44, %v77
  %v85 = vmul.f32 %v45, %v78
  %v86 = vmul.f32 %v46, %v78
  %v87 = vld [vmem:[%s1] sm:$0x3]
  %v89 = vlaneseq
  %v90 = vshrl.u32 %v89, 7
  %v91 = vsub.s32 0, %v90
  %v92 = vrot.slane %v87, %v91
  %v93 = vlaneseq
  %v94 = vshrl.u32 %v93, 7
  %v95 = vsub.s32 1, %v94
  %v96 = vrot.slane %v87, %v95
  %v99 = vmul.f32 %v79, %v92
  %v100 = vmul.f32 %v80, %v96
  %v101 = vmul.f32 %v81, %v92
  %v102 = vmul.f32 %v82, %v96
  %v103 = vmul.f32 %v83, %v92
  %v104 = vmul.f32 %v84, %v96
  %v105 = vmul.f32 %v85, %v92
  %v106 = vmul.f32 %v86, %v96
  %v107 = vld [vmem:[%s2] sm:$0x3]
  %v109 = vlaneseq
  %v110 = vshrl.u32 %v109, 7
  %v111 = vsub.s32 0, %v110
  %v112 = vrot.slane %v107, %v111
  %v113 = vlaneseq
  %v114 = vshrl.u32 %v113, 7
  %v115 = vsub.s32 1, %v114
  %v116 = vrot.slane %v107, %v115
  %v119 = vadd.f32 %v99, %v112
  %v120 = vadd.f32 %v100, %v116
  %v121 = vadd.f32 %v101, %v112
  %v122 = vadd.f32 %v102, %v116
  %v123 = vadd.f32 %v103, %v112
  %v124 = vadd.f32 %v104, %v116
  %v125 = vadd.f32 %v105, %v112
  %v126 = vadd.f32 %v106, %v116
  %v127 = vpack.c.bf16 %v121, %v119
  %v128 = vpack.c.bf16 %v122, %v120
  %v129 = vpack.c.bf16 %v125, %v123
  %v130 = vpack.c.bf16 %v126, %v124
  %v135 = vunpack.c.l.b16 %v127
  %v136 = vunpack.c.l.b16 %v128
  %v137 = vunpack.c.h.b16 %v127
  %v138 = vunpack.c.h.b16 %v128
  %v139 = vunpack.c.l.b16 %v129
  %v140 = vunpack.c.l.b16 %v130
  %v141 = vunpack.c.h.b16 %v129
  %v142 = vunpack.c.h.b16 %v130
  %v143 = vpack.c.b16 %v136, %v135
  %v144 = vpack.c.b16 %v138, %v137
  %v145 = vpack.c.b16 %v140, %v139
  %v146 = vpack.c.b16 %v142, %v141
  %151 = vst [vmem:[%s3] sm:$0xff] %v143
  %152 = vst [vmem:[%s3 + $0x8] sm:$0xff] %v144
  %153 = vst [vmem:[%s3 + $0x10] sm:$0xff] %v145
  %154 = vst [vmem:[%s3 + $0x18] sm:$0xff] %v146
  // Predicated region
  $region14: #{bert_sentence_encoder.12} parent=0 // pred_check
    _
  $region15: #{bert_sentence_encoder.12} parent=0 // pred_check_branch
    %156 = sbr.rel (0) target = $region17
  $region16: #{bert_sentence_encoder.12} parent=0 // pred_region
    _
  $region17: #{bert_sentence_encoder.12} parent=0 // pred_fallthru
    _
  // Predicated region
  $region18: #{bert_sentence_encoder.12} parent=0 // pred_check
    _
  $region19: #{bert_sentence_encoder.12} parent=0 // pred_check_branch
    %158 = sbr.rel (0) target = $region21
  $region20: #{bert_sentence_encoder.12} parent=0 // pred_region
    _
  $region21: #{bert_sentence_encoder.12} parent=0 // pred_fallthru
    _

// kernel: bert_sentence_encoder.14
$region0: #{bert_sentence_encoder.14}
  #allocation0 [shape = 'u32[]', space=smem, size = 0x4, offset = 0x4, fixed_abs, tag = 'smem constant byte address 0x4 - core index']
  #allocation1 [shape = 'u32[144,128]{1,0:T(1,128)}', space=vmem, size = 0x12000, scoped, tag = 'internal scratch']
  %s0 = inlined_call_operand.vmem [shape: bf16[32,768], index: 0, kind: input, shape index: {}, may-alias: {0,1,2}]
  %s1 = inlined_call_operand.vmem [shape: bf16[32,768], index: 1, kind: input, shape index: {}, may-alias: {0,1,2}]
  %s2 = inlined_call_operand.vmem [shape: bf16[32,768], index: 2, kind: input, shape index: {}, may-alias: {0,1,2}]
  %s3 = inlined_call_operand.vmem [shape: f32[2,1,16], index: 3, kind: input, shape index: {}]
  %s4 = inlined_call_operand.vmem [shape: bf16[32,256], index: 4, kind: output, shape index: {}]
  %s5 = sld [smem:[#allocation0]]
  $region209: #{bert_sentence_encoder.14} parent=0
    _
  %s7 = ssub.s32 1, %s5
  %s8 = scalar_select 0, %s7, %s5
  $region1: #{bert_sentence_encoder.14} parent=0
    #allocation2 [shape = 'u8[8192]{0}', space=vmem, size = 0x2000, scoped, tag = 'input window, operand 0']
    #allocation3 [shape = 'u8[8192]{0}', space=vmem, size = 0x2000, scoped, tag = 'input window, operand 1']
    #allocation4 [shape = 'u8[8192]{0}', space=vmem, size = 0x2000, scoped, tag = 'input window, operand 2']
    #allocation5 [shape = 'u8[8192]{0}', space=vmem, size = 0x2000, scoped, tag = 'output window, operand 0']
    loop: start=0, step=1, limit=6
    $region2: #{bert_sentence_encoder.14} parent=1 // loop_pre_header
      _
    $region3: #{bert_sentence_encoder.14} parent=1 // loop_header
      %s10 = sphi 0, %s14
      %p11 = scmp.ge.s32.totalorder %s10, 6
      %s17 = sphi 0, %s29
      %s18 = sphi 0, %s25
      %s19 = sphi 0, %s17
      %s20 = sphi 0, %s18
      %s21 = sphi 0, %s19
      %s22 = sphi 0, %s20
      %s34 = sphi 0, %s36
      %s37 = sphi 0, %s34
      %s38 = sphi 0, %s37
      %s54 = sphi 0, %s38
      %s64 = sphi 0, %s66
      %s67 = sphi 0, %s64
      %s68 = sphi 0, %s67
      %s84 = sphi 0, %s68
      %s94 = sphi 0, %s96
      %s97 = sphi 0, %s94
      %s98 = sphi 0, %s97
      %s114 = sphi 0, %s98
      %s120 = sphi 0, %s122
      %s123 = sphi 0, %s120
      %s124 = sphi 0, %s123
      %s140 = sphi 0, %s124
      %s148 = sphi 0, %s150
      %s151 = sphi 0, %s148
      %s152 = sphi 0, %s151
      %s168 = sphi 0, %s152
    $region4: #{bert_sentence_encoder.14} parent=1 // loop_header_branch
      %13 = sbr.rel (%p11) target = $region8
    $region5: #{bert_sentence_encoder.14} parent=1 // loop_body
      %s15 = ssub.s32 %s10, 1
      %s16 = ssub.s32 %s10, 2
      %s23 = sadd.s32 1, %s18
      %p24 = scmp.ge.s32.totalorder %s23, 2
      %s25 = scalar_select %p24, 0, %s23
      %s26 = sadd.s32 1, %s17
      %s27 = scalar_select %p24, %s26, %s17
      %p28 = scmp.ge.s32.totalorder %s27, 2
      %s29 = scalar_select %p28, 0, %s27
      %s30 = ssub.s32 %s17, %s29
      %s31 = ssub.s32 %s18, %s25
      %s32 = sor.u32 %s30, %s31
      %p33 = scmp.eq.s32.totalorder %s32, 0
      %s35 = sadd.s32 %s34, 1
      %s36 = scalar_select %p33, %s34, %s35
      %p39 = pneg %p33
      %p40 = scmp.eq.s32.totalorder %s10, 3
      %p41 = por %p39, %p40
      %p42 = scmp.ne.s32.totalorder %s34, %s37
      %p43 = scmp.eq.s32.totalorder %s10, 0
      %p44 = por %p42, %p43
      %p45 = scmp.ne.s32.totalorder %s34, %s37
      %p46 = scmp.eq.s32.totalorder %s15, 3
      %p47 = por %p45, %p46
      %p48 = scmp.ne.s32.totalorder %s37, %s38
      %p49 = scmp.eq.s32.totalorder %s15, 0
      %p50 = por %p48, %p49
      %p51 = scmp.ne.s32.totalorder %s37, %s38
      %p52 = scmp.eq.s32.totalorder %s16, 3
      %p53 = por %p51, %p52
      %p55 = scmp.ne.s32.totalorder %s38, %s54
      %p56 = scmp.eq.s32.totalorder %s16, 0
      %p57 = por %p55, %p56
      %s58 = sadd.s32 %s18, 2
      %s59 = sadd.s32 %s25, 2
      %s60 = ssub.s32 %s17, %s29
      %s61 = ssub.s32 %s58, %s59
      %s62 = sor.u32 %s60, %s61
      %p63 = scmp.eq.s32.totalorder %s62, 0
      %s65 = sadd.s32 %s64, 1
      %s66 = scalar_select %p63, %s64, %s65
      %p69 = pneg %p63
      %p70 = scmp.eq.s32.totalorder %s10, 3
      %p71 = por %p69, %p70
      %p72 = scmp.ne.s32.totalorder %s64, %s67
      %p73 = scmp.eq.s32.totalorder %s10, 0
      %p74 = por %p72, %p73
      %p75 = scmp.ne.s32.totalorder %s64, %s67
      %p76 = scmp.eq.s32.totalorder %s15, 3
      %p77 = por %p75, %p76
      %p78 = scmp.ne.s32.totalorder %s67, %s68
      %p79 = scmp.eq.s32.totalorder %s15, 0
      %p80 = por %p78, %p79
      %p81 = scmp.ne.s32.totalorder %s67, %s68
      %p82 = scmp.eq.s32.totalorder %s16, 3
      %p83 = por %p81, %p82
      %p85 = scmp.ne.s32.totalorder %s68, %s84
      %p86 = scmp.eq.s32.totalorder %s16, 0
      %p87 = por %p85, %p86
      %s88 = sadd.s32 %s18, 4
      %s89 = sadd.s32 %s25, 4
      %s90 = ssub.s32 %s17, %s29
      %s91 = ssub.s32 %s88, %s89
      %s92 = sor.u32 %s90, %s91
      %p93 = scmp.eq.s32.totalorder %s92, 0
      %s95 = sadd.s32 %s94, 1
      %s96 = scalar_select %p93, %s94, %s95
      %p99 = pneg %p93
      %p100 = scmp.eq.s32.totalorder %s10, 3
      %p101 = por %p99, %p100
      %p102 = scmp.ne.s32.totalorder %s94, %s97
      %p103 = scmp.eq.s32.totalorder %s10, 0
      %p104 = por %p102, %p103
      %p105 = scmp.ne.s32.totalorder %s94, %s97
      %p106 = scmp.eq.s32.totalorder %s15, 3
      %p107 = por %p105, %p106
      %p108 = scmp.ne.s32.totalorder %s97, %s98
      %p109 = scmp.eq.s32.totalorder %s15, 0
      %p110 = por %p108, %p109
      %p111 = scmp.ne.s32.totalorder %s97, %s98
      %p112 = scmp.eq.s32.totalorder %s16, 3
      %p113 = por %p111, %p112
      %p115 = scmp.ne.s32.totalorder %s98, %s114
      %p116 = scmp.eq.s32.totalorder %s16, 0
      %p117 = por %p115, %p116
      %s118 = ssub.s32 %s17, %s29
      %p119 = scmp.eq.s32.totalorder %s118, 0
      %s121 = sadd.s32 %s120, 1
      %s122 = scalar_select %p119, %s120, %s121
      %p125 = pneg %p119
      %p126 = scmp.eq.s32.totalorder %s10, 3
      %p127 = por %p125, %p126
      %p128 = scmp.ne.s32.totalorder %s120, %s123
      %p129 = scmp.eq.s32.totalorder %s10, 0
      %p130 = por %p128, %p129
      %p131 = scmp.ne.s32.totalorder %s120, %s123
      %p132 = scmp.eq.s32.totalorder %s15, 3
      %p133 = por %p131, %p132
      %p134 = scmp.ne.s32.totalorder %s123, %s124
      %p135 = scmp.eq.s32.totalorder %s15, 0
      %p136 = por %p134, %p135
      %p137 = scmp.ne.s32.totalorder %s123, %s124
      %p138 = scmp.eq.s32.totalorder %s16, 3
      %p139 = por %p137, %p138
      %p141 = scmp.ne.s32.totalorder %s124, %s140
      %p142 = scmp.eq.s32.totalorder %s16, 0
      %p143 = por %p141, %p142
      %s144 = ssub.s32 %s17, %s29
      %s145 = ssub.s32 %s18, %s25
      %s146 = sor.u32 %s144, %s145
      %p147 = scmp.eq.s32.totalorder %s146, 0
      %s149 = sadd.s32 %s148, 1
      %s150 = scalar_select %p147, %s148, %s149
      %p153 = pneg %p147
      %p154 = scmp.eq.s32.totalorder %s10, 3
      %p155 = por %p153, %p154
      %p156 = scmp.ne.s32.totalorder %s148, %s151
      %p157 = scmp.eq.s32.totalorder %s10, 0
      %p158 = por %p156, %p157
      %p159 = scmp.ne.s32.totalorder %s148, %s151
      %p160 = scmp.eq.s32.totalorder %s15, 3
      %p161 = por %p159, %p160
      %p162 = scmp.ne.s32.totalorder %s151, %s152
      %p163 = scmp.eq.s32.totalorder %s15, 0
      %p164 = por %p162, %p163
      %p165 = scmp.ne.s32.totalorder %s151, %s152
      %p166 = scmp.eq.s32.totalorder %s16, 3
      %p167 = por %p165, %p166
      %p169 = scmp.ne.s32.totalorder %s152, %s168
      %p170 = scmp.eq.s32.totalorder %s16, 0
      %p171 = por %p169, %p170
      %p172 = scmp.le.s32.totalorder 1, %s10
      %p173 = scmp.lt.s32.totalorder %s10, 5
      %p174 = pnand %p172, %p173
      %p175 = pneg %p174
      // Predicated region
      $region9: #{bert_sentence_encoder.14} parent=5 // pred_check
        _
      $region10: #{bert_sentence_encoder.14} parent=5 // pred_check_branch
        %177 = sbr.rel (%p174) target = $region12
      $region11: #{bert_sentence_encoder.14} parent=5 // pred_region
        %s178 = ssub.s32 %s10, 1
      $region12: #{bert_sentence_encoder.14} parent=5 // pred_fallthru
        _
      %p179 = scmp.lt.s32.totalorder %s10, 4
      // Predicated region
      $region13: #{bert_sentence_encoder.14} parent=5 // pred_check
        %p180 = pneg %p179
      $region14: #{bert_sentence_encoder.14} parent=5 // pred_check_branch
        %182 = sbr.rel (%p180) target = $region16
      $region15: #{bert_sentence_encoder.14} parent=5 // pred_region
        // Predicated region
        $region17: #{bert_sentence_encoder.14} parent=15 // pred_check
          %p183 = pneg %p44
        $region18: #{bert_sentence_encoder.14} parent=15 // pred_check_branch
          %185 = sbr.rel (%p183) target = $region20
        $region19: #{bert_sentence_encoder.14} parent=15 // pred_region
          %s186 = sand.u32 %s34, 1
          %s187 = sand.u32 %s34, 1
          %s188 = smul.addr %s187, 8
          %s189 = scalar_lea.vmem [#allocation2], %s188
          %s190 = smul.u32 2, %s17
          %s191 = smul.addr %s190, 6
          %s192 = sadd.s32 %s18, %s191
          %s193 = smul.addr %s192, 4
          %s194 = scalar_lea.vmem %s0, %s193
          // Predicated region
          $region21: #{bert_sentence_encoder.14} parent=19 // pred_check
            _
          $region22: #{bert_sentence_encoder.14} parent=19 // pred_check_branch
            %196 = sbr.rel (0) target = $region24
          $region23: #{bert_sentence_encoder.14} parent=19 // pred_region
            // Predicated region
            $region25: #{bert_sentence_encoder.14} parent=23 // pred_check
              _
            $region26: #{bert_sentence_encoder.14} parent=23 // pred_check_branch
              %198 = sbr.rel target = $region28
            $region27: #{bert_sentence_encoder.14} parent=23 // pred_region
              // Predicated region
              $region40: #{bert_sentence_encoder.14} parent=27 // pred_check
                _
              $region41: #{bert_sentence_encoder.14} parent=27 // pred_check_branch
                %215 = sbr.rel (0) target = $region43
              $region42: #{bert_sentence_encoder.14} parent=27 // pred_region
                loop: start=0, step=1, limit=1
                $region44: #{bert_sentence_encoder.14} parent=42 // loop_pre_header
                  _
                $region45: #{bert_sentence_encoder.14} parent=42 // loop_header
                  %s217 = sphi 0, %s221
                  %p218 = scmp.ge.s32.totalorder %s217, 1
                  %s222 = sphi %s194, %s194
                  %s223 = sphi %s189, %s189
                $region46: #{bert_sentence_encoder.14} parent=42 // loop_header_branch
                  %220 = sbr.rel (%p218) target = $region50
                $region47: #{bert_sentence_encoder.14} parent=42 // loop_body
                  _
                $region48: #{bert_sentence_encoder.14} parent=42 // loop_footer
                  %s221 = sadd.s32 1, %s217
                $region49: #{bert_sentence_encoder.14} parent=42 // loop_footer_branch
                  %216 = sbr.rel target = $region45
                $region50: #{bert_sentence_encoder.14} parent=42 // loop_exit
                  _
                loop: start=0, step=1, limit=1
                $region51: #{bert_sentence_encoder.14} parent=42 // loop_pre_header
                  _
                $region52: #{bert_sentence_encoder.14} parent=42 // loop_header
                  %s226 = sphi 0, %s230
                  %p227 = scmp.ge.s32.totalorder %s226, 1
                  %s231 = sphi %s194, %s194
                  %s232 = sphi %s189, %s189
                $region53: #{bert_sentence_encoder.14} parent=42 // loop_header_branch
                  %229 = sbr.rel (%p227) target = $region57
                $region54: #{bert_sentence_encoder.14} parent=42 // loop_body
                  %v233 = vld [vmem:[%s231] sm:$0xf]
                  %234 = vst [vmem:[%s232] sm:$0xf] %v233
                  %v235 = vld [vmem:[%s231 + $0x18] sm:$0xf]
                  %236 = vst [vmem:[%s232 + $0x4] sm:$0xf] %v235
                $region55: #{bert_sentence_encoder.14} parent=42 // loop_footer
                  %s230 = sadd.s32 1, %s226
                $region56: #{bert_sentence_encoder.14} parent=42 // loop_footer_branch
                  %225 = sbr.rel target = $region52
                $region57: #{bert_sentence_encoder.14} parent=42 // loop_exit
                  _
              $region43: #{bert_sentence_encoder.14} parent=27 // pred_fallthru
                _
            $region28: #{bert_sentence_encoder.14} parent=23 // pred_fallthru
              _
            // Predicated region
            $region29: #{bert_sentence_encoder.14} parent=23 // pred_check
              _
            $region30: #{bert_sentence_encoder.14} parent=23 // pred_check_branch
              %200 = sbr.rel (0) target = $region32
            $region31: #{bert_sentence_encoder.14} parent=23 // pred_region
              loop: start=0, step=1, limit=1
              $region33: #{bert_sentence_encoder.14} parent=31 // loop_pre_header
                _
              $region34: #{bert_sentence_encoder.14} parent=31 // loop_header
                %s203 = sphi 0, %s207
                %p204 = scmp.ge.s32.totalorder %s203, 1
                %s208 = sphi %s194, %s194
                %s209 = sphi %s189, %s189
              $region35: #{bert_sentence_encoder.14} parent=31 // loop_header_branch
                %206 = sbr.rel (%p204) target = $region39
              $region36: #{bert_sentence_encoder.14} parent=31 // loop_body
                %v210 = vld [vmem:[%s208] sm:$0xf]
                %211 = vst [vmem:[%s209] sm:$0xf] %v210
                %v212 = vld [vmem:[%s208 + $0x18] sm:$0xf]
                %213 = vst [vmem:[%s209 + $0x4] sm:$0xf] %v212
              $region37: #{bert_sentence_encoder.14} parent=31 // loop_footer
                %s207 = sadd.s32 1, %s203
              $region38: #{bert_sentence_encoder.14} parent=31 // loop_footer_branch
                %202 = sbr.rel target = $region34
              $region39: #{bert_sentence_encoder.14} parent=31 // loop_exit
                _
            $region32: #{bert_sentence_encoder.14} parent=23 // pred_fallthru
              _
          $region24: #{bert_sentence_encoder.14} parent=19 // pred_fallthru
            _
          %237 = vnop
        $region20: #{bert_sentence_encoder.14} parent=15 // pred_fallthru
          _
        // Predicated region
        $region58: #{bert_sentence_encoder.14} parent=15 // pred_check
          %p238 = pneg %p74
        $region59: #{bert_sentence_encoder.14} parent=15 // pred_check_branch
          %240 = sbr.rel (%p238) target = $region61
        $region60: #{bert_sentence_encoder.14} parent=15 // pred_region
          %s241 = sand.u32 %s64, 1
          %s242 = sand.u32 %s64, 1
          %s243 = smul.addr %s242, 8
          %s244 = scalar_lea.vmem [#allocation3], %s243
          %s245 = sadd.s32 %s18, 2
          %s246 = smul.u32 2, %s17
          %s247 = smul.addr %s246, 6
          %s248 = sadd.s32 %s245, %s247
          %s249 = smul.addr %s248, 4
          %s250 = scalar_lea.vmem %s1, %s249
          // Predicated region
          $region62: #{bert_sentence_encoder.14} parent=60 // pred_check
            _
          $region63: #{bert_sentence_encoder.14} parent=60 // pred_check_branch
            %252 = sbr.rel (0) target = $region65
          $region64: #{bert_sentence_encoder.14} parent=60 // pred_region
            // Predicated region
            $region66: #{bert_sentence_encoder.14} parent=64 // pred_check
              _
            $region67: #{bert_sentence_encoder.14} parent=64 // pred_check_branch
              %254 = sbr.rel target = $region69
            $region68: #{bert_sentence_encoder.14} parent=64 // pred_region
              // Predicated region
              $region81: #{bert_sentence_encoder.14} parent=68 // pred_check
                _
              $region82: #{bert_sentence_encoder.14} parent=68 // pred_check_branch
                %271 = sbr.rel (0) target = $region84
              $region83: #{bert_sentence_encoder.14} parent=68 // pred_region
                loop: start=0, step=1, limit=1
                $region85: #{bert_sentence_encoder.14} parent=83 // loop_pre_header
                  _
                $region86: #{bert_sentence_encoder.14} parent=83 // loop_header
                  %s273 = sphi 0, %s277
                  %p274 = scmp.ge.s32.totalorder %s273, 1
                  %s278 = sphi %s250, %s250
                  %s279 = sphi %s244, %s244
                $region87: #{bert_sentence_encoder.14} parent=83 // loop_header_branch
                  %276 = sbr.rel (%p274) target = $region91
                $region88: #{bert_sentence_encoder.14} parent=83 // loop_body
                  _
                $region89: #{bert_sentence_encoder.14} parent=83 // loop_footer
                  %s277 = sadd.s32 1, %s273
                $region90: #{bert_sentence_encoder.14} parent=83 // loop_footer_branch
                  %272 = sbr.rel target = $region86
                $region91: #{bert_sentence_encoder.14} parent=83 // loop_exit
                  _
                loop: start=0, step=1, limit=1
                $region92: #{bert_sentence_encoder.14} parent=83 // loop_pre_header
                  _
                $region93: #{bert_sentence_encoder.14} parent=83 // loop_header
                  %s282 = sphi 0, %s286
                  %p283 = scmp.ge.s32.totalorder %s282, 1
                  %s287 = sphi %s250, %s250
                  %s288 = sphi %s244, %s244
                $region94: #{bert_sentence_encoder.14} parent=83 // loop_header_branch
                  %285 = sbr.rel (%p283) target = $region98
                $region95: #{bert_sentence_encoder.14} parent=83 // loop_body
                  %v289 = vld [vmem:[%s287] sm:$0xf]
                  %290 = vst [vmem:[%s288] sm:$0xf] %v289
                  %v291 = vld [vmem:[%s287 + $0x18] sm:$0xf]
                  %292 = vst [vmem:[%s288 + $0x4] sm:$0xf] %v291
                $region96: #{bert_sentence_encoder.14} parent=83 // loop_footer
                  %s286 = sadd.s32 1, %s282
                $region97: #{bert_sentence_encoder.14} parent=83 // loop_footer_branch
                  %281 = sbr.rel target = $region93
                $region98: #{bert_sentence_encoder.14} parent=83 // loop_exit
                  _
              $region84: #{bert_sentence_encoder.14} parent=68 // pred_fallthru
                _
            $region69: #{bert_sentence_encoder.14} parent=64 // pred_fallthru
              _
            // Predicated region
            $region70: #{bert_sentence_encoder.14} parent=64 // pred_check
              _
            $region71: #{bert_sentence_encoder.14} parent=64 // pred_check_branch
              %256 = sbr.rel (0) target = $region73
            $region72: #{bert_sentence_encoder.14} parent=64 // pred_region
              loop: start=0, step=1, limit=1
              $region74: #{bert_sentence_encoder.14} parent=72 // loop_pre_header
                _
              $region75: #{bert_sentence_encoder.14} parent=72 // loop_header
                %s259 = sphi 0, %s263
                %p260 = scmp.ge.s32.totalorder %s259, 1
                %s264 = sphi %s250, %s250
                %s265 = sphi %s244, %s244
              $region76: #{bert_sentence_encoder.14} parent=72 // loop_header_branch
                %262 = sbr.rel (%p260) target = $region80
              $region77: #{bert_sentence_encoder.14} parent=72 // loop_body
                %v266 = vld [vmem:[%s264] sm:$0xf]
                %267 = vst [vmem:[%s265] sm:$0xf] %v266
                %v268 = vld [vmem:[%s264 + $0x18] sm:$0xf]
                %269 = vst [vmem:[%s265 + $0x4] sm:$0xf] %v268
              $region78: #{bert_sentence_encoder.14} parent=72 // loop_footer
                %s263 = sadd.s32 1, %s259
              $region79: #{bert_sentence_encoder.14} parent=72 // loop_footer_branch
                %258 = sbr.rel target = $region75
              $region80: #{bert_sentence_encoder.14} parent=72 // loop_exit
                _
            $region73: #{bert_sentence_encoder.14} parent=64 // pred_fallthru
              _
          $region65: #{bert_sentence_encoder.14} parent=60 // pred_fallthru
            _
          %293 = vnop
        $region61: #{bert_sentence_encoder.14} parent=15 // pred_fallthru
          _
        // Predicated region
        $region99: #{bert_sentence_encoder.14} parent=15 // pred_check
          %p294 = pneg %p104
        $region100: #{bert_sentence_encoder.14} parent=15 // pred_check_branch
          %296 = sbr.rel (%p294) target = $region102
        $region101: #{bert_sentence_encoder.14} parent=15 // pred_region
          %s297 = sand.u32 %s94, 1
          %s298 = sand.u32 %s94, 1
          %s299 = smul.addr %s298, 8
          %s300 = scalar_lea.vmem [#allocation4], %s299
          %s301 = sadd.s32 %s18, 4
          %s302 = smul.u32 2, %s17
          %s303 = smul.addr %s302, 6
          %s304 = sadd.s32 %s301, %s303
          %s305 = smul.addr %s304, 4
          %s306 = scalar_lea.vmem %s2, %s305
          // Predicated region
          $region103: #{bert_sentence_encoder.14} parent=101 // pred_check
            _
          $region104: #{bert_sentence_encoder.14} parent=101 // pred_check_branch
            %308 = sbr.rel (0) target = $region106
          $region105: #{bert_sentence_encoder.14} parent=101 // pred_region
            // Predicated region
            $region107: #{bert_sentence_encoder.14} parent=105 // pred_check
              _
            $region108: #{bert_sentence_encoder.14} parent=105 // pred_check_branch
              %310 = sbr.rel target = $region110
            $region109: #{bert_sentence_encoder.14} parent=105 // pred_region
              // Predicated region
              $region122: #{bert_sentence_encoder.14} parent=109 // pred_check
                _
              $region123: #{bert_sentence_encoder.14} parent=109 // pred_check_branch
                %327 = sbr.rel (0) target = $region125
              $region124: #{bert_sentence_encoder.14} parent=109 // pred_region
                loop: start=0, step=1, limit=1
                $region126: #{bert_sentence_encoder.14} parent=124 // loop_pre_header
                  _
                $region127: #{bert_sentence_encoder.14} parent=124 // loop_header
                  %s329 = sphi 0, %s333
                  %p330 = scmp.ge.s32.totalorder %s329, 1
                  %s334 = sphi %s306, %s306
                  %s335 = sphi %s300, %s300
                $region128: #{bert_sentence_encoder.14} parent=124 // loop_header_branch
                  %332 = sbr.rel (%p330) target = $region132
                $region129: #{bert_sentence_encoder.14} parent=124 // loop_body
                  _
                $region130: #{bert_sentence_encoder.14} parent=124 // loop_footer
                  %s333 = sadd.s32 1, %s329
                $region131: #{bert_sentence_encoder.14} parent=124 // loop_footer_branch
                  %328 = sbr.rel target = $region127
                $region132: #{bert_sentence_encoder.14} parent=124 // loop_exit
                  _
                loop: start=0, step=1, limit=1
                $region133: #{bert_sentence_encoder.14} parent=124 // loop_pre_header
                  _
                $region134: #{bert_sentence_encoder.14} parent=124 // loop_header
                  %s338 = sphi 0, %s342
                  %p339 = scmp.ge.s32.totalorder %s338, 1
                  %s343 = sphi %s306, %s306
                  %s344 = sphi %s300, %s300
                $region135: #{bert_sentence_encoder.14} parent=124 // loop_header_branch
                  %341 = sbr.rel (%p339) target = $region139
                $region136: #{bert_sentence_encoder.14} parent=124 // loop_body
                  %v345 = vld [vmem:[%s343] sm:$0xf]
                  %346 = vst [vmem:[%s344] sm:$0xf] %v345
                  %v347 = vld [vmem:[%s343 + $0x18] sm:$0xf]
                  %348 = vst [vmem:[%s344 + $0x4] sm:$0xf] %v347
                $region137: #{bert_sentence_encoder.14} parent=124 // loop_footer
                  %s342 = sadd.s32 1, %s338
                $region138: #{bert_sentence_encoder.14} parent=124 // loop_footer_branch
                  %337 = sbr.rel target = $region134
                $region139: #{bert_sentence_encoder.14} parent=124 // loop_exit
                  _
              $region125: #{bert_sentence_encoder.14} parent=109 // pred_fallthru
                _
            $region110: #{bert_sentence_encoder.14} parent=105 // pred_fallthru
              _
            // Predicated region
            $region111: #{bert_sentence_encoder.14} parent=105 // pred_check
              _
            $region112: #{bert_sentence_encoder.14} parent=105 // pred_check_branch
              %312 = sbr.rel (0) target = $region114
            $region113: #{bert_sentence_encoder.14} parent=105 // pred_region
              loop: start=0, step=1, limit=1
              $region115: #{bert_sentence_encoder.14} parent=113 // loop_pre_header
                _
              $region116: #{bert_sentence_encoder.14} parent=113 // loop_header
                %s315 = sphi 0, %s319
                %p316 = scmp.ge.s32.totalorder %s315, 1
                %s320 = sphi %s306, %s306
                %s321 = sphi %s300, %s300
              $region117: #{bert_sentence_encoder.14} parent=113 // loop_header_branch
                %318 = sbr.rel (%p316) target = $region121
              $region118: #{bert_sentence_encoder.14} parent=113 // loop_body
                %v322 = vld [vmem:[%s320] sm:$0xf]
                %323 = vst [vmem:[%s321] sm:$0xf] %v322
                %v324 = vld [vmem:[%s320 + $0x18] sm:$0xf]
                %325 = vst [vmem:[%s321 + $0x4] sm:$0xf] %v324
              $region119: #{bert_sentence_encoder.14} parent=113 // loop_footer
                %s319 = sadd.s32 1, %s315
              $region120: #{bert_sentence_encoder.14} parent=113 // loop_footer_branch
                %314 = sbr.rel target = $region116
              $region121: #{bert_sentence_encoder.14} parent=113 // loop_exit
                _
            $region114: #{bert_sentence_encoder.14} parent=105 // pred_fallthru
              _
          $region106: #{bert_sentence_encoder.14} parent=101 // pred_fallthru
            _
          %349 = vnop
        $region102: #{bert_sentence_encoder.14} parent=15 // pred_fallthru
          _
        // Predicated region
        $region140: #{bert_sentence_encoder.14} parent=15 // pred_check
          %p350 = pneg %p130
        $region141: #{bert_sentence_encoder.14} parent=15 // pred_check_branch
          %352 = sbr.rel (%p350) target = $region143
        $region142: #{bert_sentence_encoder.14} parent=15 // pred_region
          %p353 = scmp.lt.s32.totalorder %s17, 1
          %s354 = scalar_select %p353, %s17, 1
          %s355 = scalar_lea.vmem %s3, %s354
        $region143: #{bert_sentence_encoder.14} parent=15 // pred_fallthru
          _
      $region16: #{bert_sentence_encoder.14} parent=5 // pred_fallthru
        _
      %p356 = scmp.le.s32.totalorder 1, %s10
      %p357 = scmp.lt.s32.totalorder %s10, 5
      %p358 = pnand %p356, %p357
      %p359 = pneg %p358
      // Predicated region
      $region144: #{bert_sentence_encoder.14} parent=5 // pred_check
        _
      $region145: #{bert_sentence_encoder.14} parent=5 // pred_check_branch
        %361 = sbr.rel (%p358) target = $region147
      $region146: #{bert_sentence_encoder.14} parent=5 // pred_region
        %s362 = ssub.s32 %s10, 1
        %s363 = sand.u32 %s37, 1
        %s364 = sand.u32 %s37, 1
        %s365 = smul.addr %s364, 8
        %s366 = scalar_lea.vmem [#allocation2], %s365
        // Predicated region
        $region148: #{bert_sentence_encoder.14} parent=146 // pred_check
          %p367 = pneg %p50
        $region149: #{bert_sentence_encoder.14} parent=146 // pred_check_branch
          %369 = sbr.rel (%p367) target = $region151
        $region150: #{bert_sentence_encoder.14} parent=146 // pred_region
          _
        $region151: #{bert_sentence_encoder.14} parent=146 // pred_fallthru
          _
        %s370 = sand.u32 %s67, 1
        %s371 = sand.u32 %s67, 1
        %s372 = smul.addr %s371, 8
        %s373 = scalar_lea.vmem [#allocation3], %s372
        // Predicated region
        $region152: #{bert_sentence_encoder.14} parent=146 // pred_check
          %p374 = pneg %p80
        $region153: #{bert_sentence_encoder.14} parent=146 // pred_check_branch
          %376 = sbr.rel (%p374) target = $region155
        $region154: #{bert_sentence_encoder.14} parent=146 // pred_region
          _
        $region155: #{bert_sentence_encoder.14} parent=146 // pred_fallthru
          _
        %s377 = sand.u32 %s97, 1
        %s378 = sand.u32 %s97, 1
        %s379 = smul.addr %s378, 8
        %s380 = scalar_lea.vmem [#allocation4], %s379
        // Predicated region
        $region156: #{bert_sentence_encoder.14} parent=146 // pred_check
          %p381 = pneg %p110
        $region157: #{bert_sentence_encoder.14} parent=146 // pred_check_branch
          %383 = sbr.rel (%p381) target = $region159
        $region158: #{bert_sentence_encoder.14} parent=146 // pred_region
          _
        $region159: #{bert_sentence_encoder.14} parent=146 // pred_fallthru
          _
        %s384 = sand.u32 %s37, 1
        %s385 = sand.u32 %s37, 1
        %s386 = smul.addr %s385, 8
        %s387 = scalar_lea.vmem [#allocation2], %s386
        %p388 = pneg %p50
        %p389 = pneg %p47
        %s390 = sand.u32 %s67, 1
        %s391 = sand.u32 %s67, 1
        %s392 = smul.addr %s391, 8
        %s393 = scalar_lea.vmem [#allocation3], %s392
        %p394 = pneg %p80
        %p395 = pneg %p77
        %s396 = sand.u32 %s97, 1
        %s397 = sand.u32 %s97, 1
        %s398 = smul.addr %s397, 8
        %s399 = scalar_lea.vmem [#allocation4], %s398
        %p400 = pneg %p110
        %p401 = pneg %p107
        %p402 = scmp.lt.s32.totalorder %s19, 1
        %s403 = scalar_select %p402, %s19, 1
        %s404 = scalar_lea.vmem %s3, %s403
        %p405 = pneg %p136
        %p406 = pneg %p133
        %p407 = pneg %p164
        %p408 = pneg %p161
        %s409 = sand.u32 %s151, 1
        %s410 = sand.u32 %s151, 1
        %s411 = smul.addr %s410, 8
        %s412 = scalar_lea.vmem [#allocation5], %s411
        %s413 = smul.u32 2, %s19
        %s414 = sadd.s32 %s20, 2
        %s415 = smul.u32 2, %s19
        %s416 = sadd.s32 %s20, 4
        %s417 = smul.u32 2, %s19
        %p418 = scmp.lt.s32.totalorder %s19, 1
        %s419 = scalar_select %p418, %s19, 1
        %s420 = scalar_lea.vmem %s3, %s419
        %s421 = smul.u32 2, %s19
        %v423 = vld [vmem:[%s420] sm:$0x1]
        %v424 = vld [vmem:[%s366] sm:$0xf]
        %v425 = vld [vmem:[%s366 + $0x4] sm:$0xf]
        %v426 = vld [vmem:[%s373] sm:$0xf]
        %v427 = vld [vmem:[%s373 + $0x4] sm:$0xf]
        %v428 = vld [vmem:[%s380] sm:$0xf]
        %v429 = vld [vmem:[%s380 + $0x4] sm:$0xf]
        %v431 = vlaneseq
        %v432 = vshrl.u32 %v431, 7
        %v433 = vsub.s32 0, %v432
        %v434 = vrot.slane %v423, %v433
        %v438 = vunpack.c.l.b16 %v424
        %v439 = vunpack.c.l.b16 %v425
        %v440 = vpack.c.b16 %v439, %v438
        %v444 = vunpack.c.l.b16 %v426
        %v445 = vunpack.c.l.b16 %v427
        %v446 = vpack.c.b16 %v445, %v444
        %448 = vmatprep.subr.bf16.mxu0 0
        %449 = vmatpush1.bf16.xpose.msra.mxu0 %v446
        %450 = vmatprep.subr.bf16.mxu0 0
        %451 = vmatpush1.bf16.xpose.msra.mxu0 0
        %452 = vmatprep.subr.bf16.mxu0 0
        %453 = vmatpush1.bf16.xpose.msra.mxu0 0
        %454 = vmatprep.subr.bf16.mxu0 0
        %455 = vmatpush1.bf16.xpose.msra.mxu0 0
        %456 = vmatprep.subr.bf16.mxu0 0
        %457 = vmatpush1.bf16.xpose.msra.mxu0 0
        %458 = vmatprep.subr.bf16.mxu0 0
        %459 = vmatpush1.bf16.xpose.msra.mxu0 0
        %460 = vmatprep.subr.bf16.mxu0 0
        %461 = vmatpush1.bf16.xpose.msra.mxu0 0
        %462 = vmatprep.subr.bf16.mxu0 0
        %463 = vmatpush1.bf16.xpose.msra.mxu0 0
        %464 = vmatprep.subr.bf16.mxu0 0
        %465 = vmatpush1.bf16.xpose.msra.mxu0 0
        %466 = vmatprep.subr.bf16.mxu0 0
        %467 = vmatpush1.bf16.xpose.msra.mxu0 0
        %468 = vmatprep.subr.bf16.mxu0 0
        %469 = vmatpush1.bf16.xpose.msra.mxu0 0
        %470 = vmatprep.subr.bf16.mxu0 0
        %471 = vmatpush1.bf16.xpose.msra.mxu0 0
        %472 = vmatprep.subr.bf16.mxu0 0
        %473 = vmatpush1.bf16.xpose.msra.mxu0 0
        %474 = vmatprep.subr.bf16.mxu0 0
        %475 = vmatpush1.bf16.xpose.msra.mxu0 0
        %476 = vmatprep.subr.bf16.mxu0 0
        %477 = vmatpush1.bf16.xpose.msra.mxu0 0
        %478 = vmatprep.subr.bf16.mxu0 0
        %479 = vmatpush1.bf16.xpose.msra.mxu0 0
        %480 = vmatprep.mubr.bf16.mxu0 0
        %481 = vmatmul.mubr.bf16.gmra.mrb[0].mxu0 %v440
        %v482 = vpop.f32.mrb[0].mxu0
        %v483 = vadd.f32 %v434, %v482
        %v484 = vpop.f32.mrb[0].mxu0
        %v485 = vpop.f32.mrb[0].mxu0
        %v486 = vadd.f32 %v434, %v485
        %v487 = vpop.f32.mrb[0].mxu0
        %488 = vdwg.mxu0
        %vm489 = vcmask 130048
        %v490 = vsel %vm489, %v483, -inf
        %491 = vmax.xlane.f32.xlu0 %v490
        %v492 = vpop.xlane.xlu0 %491
        %v493 = vsel %vm489, %v486, -inf
        %494 = vmax.xlane.f32.xlu0 %v493
        %v495 = vpop.xlane.xlu0 %494
        %v496 = vsub.f32 %v483, %v492
        %v497 = vsub.f32 %v486, %v495
        %v498 = vmul.f32 %v496, 1.442695
        %v499 = vpow.pop %v498
        %v500 = vmul.f32 %v497, 1.442695
        %v501 = vpow.pop %v500
        %v502 = vsel %vm489, %v499, 0.0
        %503 = vadd.xlane.f32.xlu0 %v502
        %v504 = vpop.xlane.xlu0 %503
        %v505 = vsel %vm489, %v501, 0.0
        %506 = vadd.xlane.f32.xlu0 %v505
        %v507 = vpop.xlane.xlu0 %506
        %v508 = vrcp.pop %v504
        %v509 = vrcp.pop %v507
        %v510 = vmul.f32 %v499, %v508
        %v511 = vmul.f32 %v501, %v509
        %v512 = vpack.c.bf16 %v511, %v510
        %v515 = vunpack.c.l.b16 %v428
        %v516 = vunpack.c.l.b16 %v429
        %v517 = vpack.c.b16 %v516, %v515
        %v520 = vsel %vm489, %v512, 0
        %522 = vmatprep.subr.bf16.mxu0 0
        %523 = vmatpush1.bf16.msra.mxu0 %v517
        %524 = vmatprep.subr.bf16.mxu0 0
        %525 = vmatpush1.bf16.msra.mxu0 0
        %526 = vmatprep.subr.bf16.mxu0 0
        %527 = vmatpush1.bf16.msra.mxu0 0
        %528 = vmatprep.subr.bf16.mxu0 0
        %529 = vmatpush1.bf16.msra.mxu0 0
        %530 = vmatprep.subr.bf16.mxu0 0
        %531 = vmatpush1.bf16.msra.mxu0 0
        %532 = vmatprep.subr.bf16.mxu0 0
        %533 = vmatpush1.bf16.msra.mxu0 0
        %534 = vmatprep.subr.bf16.mxu0 0
        %535 = vmatpush1.bf16.msra.mxu0 0
        %536 = vmatprep.subr.bf16.mxu0 0
        %537 = vmatpush1.bf16.msra.mxu0 0
        %538 = vmatprep.subr.bf16.mxu0 0
        %539 = vmatpush1.bf16.msra.mxu0 0
        %540 = vmatprep.subr.bf16.mxu0 0
        %541 = vmatpush1.bf16.msra.mxu0 0
        %542 = vmatprep.subr.bf16.mxu0 0
        %543 = vmatpush1.bf16.msra.mxu0 0
        %544 = vmatprep.subr.bf16.mxu0 0
        %545 = vmatpush1.bf16.msra.mxu0 0
        %546 = vmatprep.subr.bf16.mxu0 0
        %547 = vmatpush1.bf16.msra.mxu0 0
        %548 = vmatprep.subr.bf16.mxu0 0
        %549 = vmatpush1.bf16.msra.mxu0 0
        %550 = vmatprep.subr.bf16.mxu0 0
        %551 = vmatpush1.bf16.msra.mxu0 0
        %552 = vmatprep.subr.bf16.mxu0 0
        %553 = vmatpush1.bf16.msra.mxu0 0
        %554 = vmatprep.mubr.bf16.mxu0 0
        %555 = vmatmul.mubr.bf16.gmra.mrb[0].mxu0 %v520
        %v556 = vpop.f32.mrb[0].mxu0
        %v557 = vadd.f32 0.0, %v556
        %v558 = vpop.f32.mrb[0].mxu0
        %v559 = vpop.f32.mrb[0].mxu0
        %v560 = vadd.f32 0.0, %v559
        %v561 = vpop.f32.mrb[0].mxu0
        %562 = vdwg.mxu0
        %v563 = vpack.c.bf16 %v560, %v557
        %v565 = vunpack.c.l.b16 %v563
        %v566 = vunpack.c.h.b16 %v563
        %v567 = vpack.c.b16 %v565, %v565
        %v568 = vpack.c.b16 %v566, %v566
        %571 = vst [vmem:[%s412] sm:$0xf] %v567
        %572 = vst [vmem:[%s412 + $0x4] sm:$0xf] %v568
        %s573 = sand.u32 %s151, 1
        %s574 = sand.u32 %s151, 1
        %s575 = smul.addr %s574, 8
        %s576 = scalar_lea.vmem [#allocation5], %s575
        // Predicated region
        $region160: #{bert_sentence_encoder.14} parent=146 // pred_check
          %p577 = pneg %p161
        $region161: #{bert_sentence_encoder.14} parent=146 // pred_check_branch
          %579 = sbr.rel (%p577) target = $region163
        $region162: #{bert_sentence_encoder.14} parent=146 // pred_region
          %s580 = smul.u32 2, %s19
          %s581 = smul.addr %s580, 2
          %s582 = sadd.s32 %s20, %s581
          %s583 = smul.addr %s582, 4
          %s584 = scalar_lea.vmem %s4, %s583
          // Predicated region
          $region164: #{bert_sentence_encoder.14} parent=162 // pred_check
            _
          $region165: #{bert_sentence_encoder.14} parent=162 // pred_check_branch
            %586 = sbr.rel (0) target = $region167
          $region166: #{bert_sentence_encoder.14} parent=162 // pred_region
            // Predicated region
            $region168: #{bert_sentence_encoder.14} parent=166 // pred_check
              _
            $region169: #{bert_sentence_encoder.14} parent=166 // pred_check_branch
              %588 = sbr.rel target = $region171
            $region170: #{bert_sentence_encoder.14} parent=166 // pred_region
              // Predicated region
              $region183: #{bert_sentence_encoder.14} parent=170 // pred_check
                _
              $region184: #{bert_sentence_encoder.14} parent=170 // pred_check_branch
                %605 = sbr.rel (0) target = $region186
              $region185: #{bert_sentence_encoder.14} parent=170 // pred_region
                loop: start=0, step=1, limit=1
                $region187: #{bert_sentence_encoder.14} parent=185 // loop_pre_header
                  _
                $region188: #{bert_sentence_encoder.14} parent=185 // loop_header
                  %s607 = sphi 0, %s611
                  %p608 = scmp.ge.s32.totalorder %s607, 1
                  %s612 = sphi %s576, %s576
                  %s613 = sphi %s584, %s584
                $region189: #{bert_sentence_encoder.14} parent=185 // loop_header_branch
                  %610 = sbr.rel (%p608) target = $region193
                $region190: #{bert_sentence_encoder.14} parent=185 // loop_body
                  _
                $region191: #{bert_sentence_encoder.14} parent=185 // loop_footer
                  %s611 = sadd.s32 1, %s607
                $region192: #{bert_sentence_encoder.14} parent=185 // loop_footer_branch
                  %606 = sbr.rel target = $region188
                $region193: #{bert_sentence_encoder.14} parent=185 // loop_exit
                  _
                loop: start=0, step=1, limit=1
                $region194: #{bert_sentence_encoder.14} parent=185 // loop_pre_header
                  _
                $region195: #{bert_sentence_encoder.14} parent=185 // loop_header
                  %s616 = sphi 0, %s620
                  %p617 = scmp.ge.s32.totalorder %s616, 1
                  %s621 = sphi %s576, %s576
                  %s622 = sphi %s584, %s584
                $region196: #{bert_sentence_encoder.14} parent=185 // loop_header_branch
                  %619 = sbr.rel (%p617) target = $region200
                $region197: #{bert_sentence_encoder.14} parent=185 // loop_body
                  %v623 = vld [vmem:[%s621] sm:$0xf]
                  %624 = vst [vmem:[%s622] sm:$0xf] %v623
                  %v625 = vld [vmem:[%s621 + $0x4] sm:$0xf]
                  %626 = vst [vmem:[%s622 + $0x8] sm:$0xf] %v625
                $region198: #{bert_sentence_encoder.14} parent=185 // loop_footer
                  %s620 = sadd.s32 1, %s616
                $region199: #{bert_sentence_encoder.14} parent=185 // loop_footer_branch
                  %615 = sbr.rel target = $region195
                $region200: #{bert_sentence_encoder.14} parent=185 // loop_exit
                  _
              $region186: #{bert_sentence_encoder.14} parent=170 // pred_fallthru
                _
            $region171: #{bert_sentence_encoder.14} parent=166 // pred_fallthru
              _
            // Predicated region
            $region172: #{bert_sentence_encoder.14} parent=166 // pred_check
              _
            $region173: #{bert_sentence_encoder.14} parent=166 // pred_check_branch
              %590 = sbr.rel (0) target = $region175
            $region174: #{bert_sentence_encoder.14} parent=166 // pred_region
              loop: start=0, step=1, limit=1
              $region176: #{bert_sentence_encoder.14} parent=174 // loop_pre_header
                _
              $region177: #{bert_sentence_encoder.14} parent=174 // loop_header
                %s593 = sphi 0, %s597
                %p594 = scmp.ge.s32.totalorder %s593, 1
                %s598 = sphi %s576, %s576
                %s599 = sphi %s584, %s584
              $region178: #{bert_sentence_encoder.14} parent=174 // loop_header_branch
                %596 = sbr.rel (%p594) target = $region182
              $region179: #{bert_sentence_encoder.14} parent=174 // loop_body
                %v600 = vld [vmem:[%s598] sm:$0xf]
                %601 = vst [vmem:[%s599] sm:$0xf] %v600
                %v602 = vld [vmem:[%s598 + $0x4] sm:$0xf]
                %603 = vst [vmem:[%s599 + $0x8] sm:$0xf] %v602
              $region180: #{bert_sentence_encoder.14} parent=174 // loop_footer
                %s597 = sadd.s32 1, %s593
              $region181: #{bert_sentence_encoder.14} parent=174 // loop_footer_branch
                %592 = sbr.rel target = $region177
              $region182: #{bert_sentence_encoder.14} parent=174 // loop_exit
                _
            $region175: #{bert_sentence_encoder.14} parent=166 // pred_fallthru
              _
          $region167: #{bert_sentence_encoder.14} parent=162 // pred_fallthru
            _
          %627 = vnop
        $region163: #{bert_sentence_encoder.14} parent=146 // pred_fallthru
          _
      $region147: #{bert_sentence_encoder.14} parent=5 // pred_fallthru
        _
      %p628 = scmp.le.s32.totalorder 2, %s10
      // Predicated region
      $region201: #{bert_sentence_encoder.14} parent=5 // pred_check
        %p629 = pneg %p628
      $region202: #{bert_sentence_encoder.14} parent=5 // pred_check_branch
        %631 = sbr.rel (%p629) target = $region204
      $region203: #{bert_sentence_encoder.14} parent=5 // pred_region
        %s632 = ssub.s32 %s10, 2
        // Predicated region
        $region205: #{bert_sentence_encoder.14} parent=203 // pred_check
          %p633 = pneg %p167
        $region206: #{bert_sentence_encoder.14} parent=203 // pred_check_branch
          %635 = sbr.rel (%p633) target = $region208
        $region207: #{bert_sentence_encoder.14} parent=203 // pred_region
          %s636 = sand.u32 %s152, 1
          %s637 = sand.u32 %s152, 1
          %s638 = smul.addr %s637, 8
          %s639 = scalar_lea.vmem [#allocation5], %s638
        $region208: #{bert_sentence_encoder.14} parent=203 // pred_fallthru
          _
      $region204: #{bert_sentence_encoder.14} parent=5 // pred_fallthru
        _
    $region6: #{bert_sentence_encoder.14} parent=1 // loop_footer
      %s14 = sadd.s32 1, %s10
    $region7: #{bert_sentence_encoder.14} parent=1 // loop_footer_branch
      %9 = sbr.rel target = $region3
    $region8: #{bert_sentence_encoder.14} parent=1 // loop_exit
      _

// kernel: bert_sentence_encoder.15
$region0: #{bert_sentence_encoder.15}
  #allocation0 [shape = 'u32[]', space=smem, size = 0x4, offset = 0x4, fixed_abs, tag = 'smem constant byte address 0x4 - core index']
  #allocation1 [shape = 'u32[144,128]{1,0:T(1,128)}', space=vmem, size = 0x12000, scoped, tag = 'internal scratch']
  %s0 = inlined_call_operand.vmem [shape: bf16[32,256], index: 0, kind: input, shape index: {}]
  %s1 = inlined_call_operand.vmem [shape: bf16[256,256], index: 1, kind: input, shape index: {}]
  %s2 = inlined_call_operand.vmem [shape: f32[1,256], index: 2, kind: input, shape index: {}]
  %s3 = inlined_call_operand.vmem [shape: bf16[32,256], index: 3, kind: input, shape index: {}]
  %s4 = inlined_call_operand.vmem [shape: f32[1,256], index: 4, kind: input, shape index: {}]
  %s5 = inlined_call_operand.vmem [shape: f32[1,256], index: 5, kind: input, shape index: {}]
  %s6 = inlined_call_operand.vmem [shape: bf16[32,256], index: 6, kind: output, shape index: {}]
  %s7 = sld [smem:[#allocation0]]
  $region34: #{bert_sentence_encoder.15} parent=0
    _
  %s9 = ssub.s32 1, %s7
  %s10 = scalar_select 0, %s9, %s7
  // Predicated region
  $region2: #{bert_sentence_encoder.15} parent=0 // pred_check
    _
  $region3: #{bert_sentence_encoder.15} parent=0 // pred_check_branch
    %12 = sbr.rel (0) target = $region5
  $region4: #{bert_sentence_encoder.15} parent=0 // pred_region
    _
  $region5: #{bert_sentence_encoder.15} parent=0 // pred_fallthru
    _
  // Predicated region
  $region6: #{bert_sentence_encoder.15} parent=0 // pred_check
    _
  $region7: #{bert_sentence_encoder.15} parent=0 // pred_check_branch
    %14 = sbr.rel (0) target = $region9
  $region8: #{bert_sentence_encoder.15} parent=0 // pred_region
    _
  $region9: #{bert_sentence_encoder.15} parent=0 // pred_fallthru
    _
  // Predicated region
  $region10: #{bert_sentence_encoder.15} parent=0 // pred_check
    _
  $region11: #{bert_sentence_encoder.15} parent=0 // pred_check_branch
    %16 = sbr.rel (0) target = $region13
  $region12: #{bert_sentence_encoder.15} parent=0 // pred_region
    _
  $region13: #{bert_sentence_encoder.15} parent=0 // pred_fallthru
    _
  // Predicated region
  $region14: #{bert_sentence_encoder.15} parent=0 // pred_check
    _
  $region15: #{bert_sentence_encoder.15} parent=0 // pred_check_branch
    %18 = sbr.rel (0) target = $region17
  $region16: #{bert_sentence_encoder.15} parent=0 // pred_region
    _
  $region17: #{bert_sentence_encoder.15} parent=0 // pred_fallthru
    _
  // Predicated region
  $region18: #{bert_sentence_encoder.15} parent=0 // pred_check
    _
  $region19: #{bert_sentence_encoder.15} parent=0 // pred_check_branch
    %20 = sbr.rel (0) target = $region21
  $region20: #{bert_sentence_encoder.15} parent=0 // pred_region
    _
  $region21: #{bert_sentence_encoder.15} parent=0 // pred_fallthru
    _
  // Predicated region
  $region22: #{bert_sentence_encoder.15} parent=0 // pred_check
    _
  $region23: #{bert_sentence_encoder.15} parent=0 // pred_check_branch
    %22 = sbr.rel (0) target = $region25
  $region24: #{bert_sentence_encoder.15} parent=0 // pred_region
    _
  $region25: #{bert_sentence_encoder.15} parent=0 // pred_fallthru
    _
  %v23 = vld [vmem:[%s0] sm:$0xff]
  %v24 = vld [vmem:[%s0 + $0x8] sm:$0xff]
  %v25 = vld [vmem:[%s0 + $0x10] sm:$0xff]
  %v26 = vld [vmem:[%s0 + $0x18] sm:$0xff]
  %v27 = vld [vmem:[%s1] sm:$0xff]
  %v28 = vld [vmem:[%s1 + $0x8] sm:$0xff]
  %v29 = vld [vmem:[%s1 + $0x10] sm:$0xff]
  %v30 = vld [vmem:[%s1 + $0x18] sm:$0xff]
  %v31 = vld [vmem:[%s1 + $0x20] sm:$0xff]
  %v32 = vld [vmem:[%s1 + $0x28] sm:$0xff]
  %v33 = vld [vmem:[%s1 + $0x30] sm:$0xff]
  %v34 = vld [vmem:[%s1 + $0x38] sm:$0xff]
  %v35 = vld [vmem:[%s1 + $0x40] sm:$0xff]
  %v36 = vld [vmem:[%s1 + $0x48] sm:$0xff]
  %v37 = vld [vmem:[%s1 + $0x50] sm:$0xff]
  %v38 = vld [vmem:[%s1 + $0x58] sm:$0xff]
  %v39 = vld [vmem:[%s1 + $0x60] sm:$0xff]
  %v40 = vld [vmem:[%s1 + $0x68] sm:$0xff]
  %v41 = vld [vmem:[%s1 + $0x70] sm:$0xff]
  %v42 = vld [vmem:[%s1 + $0x78] sm:$0xff]
  %v43 = vld [vmem:[%s1 + $0x80] sm:$0xff]
  %v44 = vld [vmem:[%s1 + $0x88] sm:$0xff]
  %v45 = vld [vmem:[%s1 + $0x90] sm:$0xff]
  %v46 = vld [vmem:[%s1 + $0x98] sm:$0xff]
  %v47 = vld [vmem:[%s1 + $0xa0] sm:$0xff]
  %v48 = vld [vmem:[%s1 + $0xa8] sm:$0xff]
  %v49 = vld [vmem:[%s1 + $0xb0] sm:$0xff]
  %v50 = vld [vmem:[%s1 + $0xb8] sm:$0xff]
  %v51 = vld [vmem:[%s1 + $0xc0] sm:$0xff]
  %v52 = vld [vmem:[%s1 + $0xc8] sm:$0xff]
  %v53 = vld [vmem:[%s1 + $0xd0] sm:$0xff]
  %v54 = vld [vmem:[%s1 + $0xd8] sm:$0xff]
  %v55 = vld [vmem:[%s1 + $0xe0] sm:$0xff]
  %v56 = vld [vmem:[%s1 + $0xe8] sm:$0xff]
  %v57 = vld [vmem:[%s1 + $0xf0] sm:$0xff]
  %v58 = vld [vmem:[%s1 + $0xf8] sm:$0xff]
  %v59 = vld [vmem:[%s2] sm:$0x3]
  %v61 = vlaneseq
  %v62 = vshrl.u32 %v61, 7
  %v63 = vsub.s32 0, %v62
  %v64 = vrot.slane %v59, %v63
  %v65 = vlaneseq
  %v66 = vshrl.u32 %v65, 7
  %v67 = vsub.s32 1, %v66
  %v68 = vrot.slane %v59, %v67
  %v75 = vunpack.c.l.b16 %v23
  %v76 = vunpack.c.h.b16 %v23
  %v77 = vunpack.c.l.b16 %v24
  %v78 = vunpack.c.h.b16 %v24
  %v79 = vunpack.c.l.b16 %v25
  %v80 = vunpack.c.h.b16 %v25
  %v81 = vunpack.c.l.b16 %v26
  %v82 = vunpack.c.h.b16 %v26
  %v83 = vpack.c.b16 %v77, %v75
  %v84 = vpack.c.b16 %v78, %v76
  %v85 = vpack.c.b16 %v81, %v79
  %v86 = vpack.c.b16 %v82, %v80
  %v123 = vunpack.c.l.b16 %v27
  %v124 = vunpack.c.h.b16 %v27
  %v125 = vunpack.c.l.b16 %v28
  %v126 = vunpack.c.h.b16 %v28
  %v127 = vunpack.c.l.b16 %v29
  %v128 = vunpack.c.h.b16 %v29
  %v129 = vunpack.c.l.b16 %v30
  %v130 = vunpack.c.h.b16 %v30
  %v131 = vunpack.c.l.b16 %v31
  %v132 = vunpack.c.h.b16 %v31
  %v133 = vunpack.c.l.b16 %v32
  %v134 = vunpack.c.h.b16 %v32
  %v135 = vunpack.c.l.b16 %v33
  %v136 = vunpack.c.h.b16 %v33
  %v137 = vunpack.c.l.b16 %v34
  %v138 = vunpack.c.h.b16 %v34
  %v139 = vunpack.c.l.b16 %v35
  %v140 = vunpack.c.h.b16 %v35
  %v141 = vunpack.c.l.b16 %v36
  %v142 = vunpack.c.h.b16 %v36
  %v143 = vunpack.c.l.b16 %v37
  %v144 = vunpack.c.h.b16 %v37
  %v145 = vunpack.c.l.b16 %v38
  %v146 = vunpack.c.h.b16 %v38
  %v147 = vunpack.c.l.b16 %v39
  %v148 = vunpack.c.h.b16 %v39
  %v149 = vunpack.c.l.b16 %v40
  %v150 = vunpack.c.h.b16 %v40
  %v151 = vunpack.c.l.b16 %v41
  %v152 = vunpack.c.h.b16 %v41
  %v153 = vunpack.c.l.b16 %v42
  %v154 = vunpack.c.h.b16 %v42
  %v155 = vunpack.c.l.b16 %v43
  %v156 = vunpack.c.h.b16 %v43
  %v157 = vunpack.c.l.b16 %v44
  %v158 = vunpack.c.h.b16 %v44
  %v159 = vunpack.c.l.b16 %v45
  %v160 = vunpack.c.h.b16 %v45
  %v161 = vunpack.c.l.b16 %v46
  %v162 = vunpack.c.h.b16 %v46
  %v163 = vunpack.c.l.b16 %v47
  %v164 = vunpack.c.h.b16 %v47
  %v165 = vunpack.c.l.b16 %v48
  %v166 = vunpack.c.h.b16 %v48
  %v167 = vunpack.c.l.b16 %v49
  %v168 = vunpack.c.h.b16 %v49
  %v169 = vunpack.c.l.b16 %v50
  %v170 = vunpack.c.h.b16 %v50
  %v171 = vunpack.c.l.b16 %v51
  %v172 = vunpack.c.h.b16 %v51
  %v173 = vunpack.c.l.b16 %v52
  %v174 = vunpack.c.h.b16 %v52
  %v175 = vunpack.c.l.b16 %v53
  %v176 = vunpack.c.h.b16 %v53
  %v177 = vunpack.c.l.b16 %v54
  %v178 = vunpack.c.h.b16 %v54
  %v179 = vunpack.c.l.b16 %v55
  %v180 = vunpack.c.h.b16 %v55
  %v181 = vunpack.c.l.b16 %v56
  %v182 = vunpack.c.h.b16 %v56
  %v183 = vunpack.c.l.b16 %v57
  %v184 = vunpack.c.h.b16 %v57
  %v185 = vunpack.c.l.b16 %v58
  %v186 = vunpack.c.h.b16 %v58
  %v187 = vpack.c.b16 %v125, %v123
  %v188 = vpack.c.b16 %v126, %v124
  %v189 = vpack.c.b16 %v129, %v127
  %v190 = vpack.c.b16 %v130, %v128
  %v191 = vpack.c.b16 %v133, %v131
  %v192 = vpack.c.b16 %v134, %v132
  %v193 = vpack.c.b16 %v137, %v135
  %v194 = vpack.c.b16 %v138, %v136
  %v195 = vpack.c.b16 %v141, %v139
  %v196 = vpack.c.b16 %v142, %v140
  %v197 = vpack.c.b16 %v145, %v143
  %v198 = vpack.c.b16 %v146, %v144
  %v199 = vpack.c.b16 %v149, %v147
  %v200 = vpack.c.b16 %v150, %v148
  %v201 = vpack.c.b16 %v153, %v151
  %v202 = vpack.c.b16 %v154, %v152
  %v203 = vpack.c.b16 %v157, %v155
  %v204 = vpack.c.b16 %v158, %v156
  %v205 = vpack.c.b16 %v161, %v159
  %v206 = vpack.c.b16 %v162, %v160
  %v207 = vpack.c.b16 %v165, %v163
  %v208 = vpack.c.b16 %v166, %v164
  %v209 = vpack.c.b16 %v169, %v167
  %v210 = vpack.c.b16 %v170, %v168
  %v211 = vpack.c.b16 %v173, %v171
  %v212 = vpack.c.b16 %v174, %v172
  %v213 = vpack.c.b16 %v177, %v175
  %v214 = vpack.c.b16 %v178, %v176
  %v215 = vpack.c.b16 %v181, %v179
  %v216 = vpack.c.b16 %v182, %v180
  %v217 = vpack.c.b16 %v185, %v183
  %v218 = vpack.c.b16 %v186, %v184
  %251 = vmatprep.subr.bf16.mxu0 %v188
  %252 = vmatpush1.bf16.msra.mxu0 %v187
  %253 = vmatprep.subr.bf16.mxu0 %v190
  %254 = vmatpush1.bf16.msra.mxu0 %v189
  %255 = vmatprep.subr.bf16.mxu0 %v192
  %256 = vmatpush1.bf16.msra.mxu0 %v191
  %257 = vmatprep.subr.bf16.mxu0 %v194
  %258 = vmatpush1.bf16.msra.mxu0 %v193
  %259 = vmatprep.subr.bf16.mxu0 %v196
  %260 = vmatpush1.bf16.msra.mxu0 %v195
  %261 = vmatprep.subr.bf16.mxu0 %v198
  %262 = vmatpush1.bf16.msra.mxu0 %v197
  %263 = vmatprep.subr.bf16.mxu0 %v200
  %264 = vmatpush1.bf16.msra.mxu0 %v199
  %265 = vmatprep.subr.bf16.mxu0 %v202
  %266 = vmatpush1.bf16.msra.mxu0 %v201
  %267 = vmatprep.subr.bf16.mxu0 %v204
  %268 = vmatpush1.bf16.msra.mxu0 %v203
  %269 = vmatprep.subr.bf16.mxu0 %v206
  %270 = vmatpush1.bf16.msra.mxu0 %v205
  %271 = vmatprep.subr.bf16.mxu0 %v208
  %272 = vmatpush1.bf16.msra.mxu0 %v207
  %273 = vmatprep.subr.bf16.mxu0 %v210
  %274 = vmatpush1.bf16.msra.mxu0 %v209
  %275 = vmatprep.subr.bf16.mxu0 %v212
  %276 = vmatpush1.bf16.msra.mxu0 %v211
  %277 = vmatprep.subr.bf16.mxu0 %v214
  %278 = vmatpush1.bf16.msra.mxu0 %v213
  %279 = vmatprep.subr.bf16.mxu0 %v216
  %280 = vmatpush1.bf16.msra.mxu0 %v215
  %281 = vmatprep.subr.bf16.mxu0 %v218
  %282 = vmatpush1.bf16.msra.mxu0 %v217
  %283 = vmatprep.mubr.bf16.mxu0 %v84
  %284 = vmatmul.mubr.bf16.gmra.mrb[0].mxu0 %v83
  %v285 = vpop.f32.mrb[0].mxu0
  %v286 = vadd.f32 %v64, %v285
  %v287 = vpop.f32.mrb[0].mxu0
  %v288 = vadd.f32 %v68, %v287
  %v289 = vpop.f32.mrb[0].mxu0
  %v290 = vadd.f32 %v64, %v289
  %v291 = vpop.f32.mrb[0].mxu0
  %v292 = vadd.f32 %v68, %v291
  %293 = vmatprep.mubr.bf16.mxu0 %v86
  %294 = vmatmul.mubr.bf16.gmra.mrb[0].mxu0 %v85
  %v295 = vpop.f32.mrb[0].mxu0
  %v296 = vadd.f32 %v64, %v295
  %v297 = vpop.f32.mrb[0].mxu0
  %v298 = vadd.f32 %v68, %v297
  %v299 = vpop.f32.mrb[0].mxu0
  %v300 = vadd.f32 %v64, %v299
  %v301 = vpop.f32.mrb[0].mxu0
  %v302 = vadd.f32 %v68, %v301
  %303 = vdwg.mxu0
  %v304 = vld [vmem:[%s3] sm:$0xff]
  %v305 = vld [vmem:[%s3 + $0x8] sm:$0xff]
  %v306 = vld [vmem:[%s3 + $0x10] sm:$0xff]
  %v307 = vld [vmem:[%s3 + $0x18] sm:$0xff]
  %v308 = vunpack.c.l.bf16 %v304
  %v309 = vunpack.c.h.bf16 %v304
  %v310 = vunpack.c.l.bf16 %v305
  %v311 = vunpack.c.h.bf16 %v305
  %v312 = vunpack.c.l.bf16 %v306
  %v313 = vunpack.c.h.bf16 %v306
  %v314 = vunpack.c.l.bf16 %v307
  %v315 = vunpack.c.h.bf16 %v307
  %v316 = vadd.f32 %v286, %v308
  %v317 = vadd.f32 %v288, %v309
  %v318 = vadd.f32 %v290, %v310
  %v319 = vadd.f32 %v292, %v311
  %v320 = vadd.f32 %v296, %v312
  %v321 = vadd.f32 %v298, %v313
  %v322 = vadd.f32 %v300, %v314
  %v323 = vadd.f32 %v302, %v315
  %v324 = vadd.f32 %v316, %v317
  %325 = vadd.xlane.f32.xlu0 %v324
  %v326 = vpop.xlane.xlu0 %325
  %v327 = vadd.f32 %v318, %v319
  %328 = vadd.xlane.f32.xlu0 %v327
  %v329 = vpop.xlane.xlu0 %328
  %v330 = vadd.f32 %v320, %v321
  %331 = vadd.xlane.f32.xlu0 %v330
  %v332 = vpop.xlane.xlu0 %331
  %v333 = vadd.f32 %v322, %v323
  %334 = vadd.xlane.f32.xlu0 %v333
  %v335 = vpop.xlane.xlu0 %334
  %v336 = vrcp.pop 256.0
  %v337 = vmul.f32 %v326, %v336
  %v338 = vmul.f32 %v329, %v336
  %v339 = vmul.f32 %v332, %v336
  %v340 = vmul.f32 %v335, %v336
  %v341 = vsub.f32 %v316, %v337
  %v342 = vsub.f32 %v317, %v337
  %v343 = vsub.f32 %v318, %v338
  %v344 = vsub.f32 %v319, %v338
  %v345 = vsub.f32 %v320, %v339
  %v346 = vsub.f32 %v321, %v339
  %v347 = vsub.f32 %v322, %v340
  %v348 = vsub.f32 %v323, %v340
  %v349 = vmul.f32 %v341, %v341
  %v350 = vmul.f32 %v342, %v342
  %v351 = vmul.f32 %v343, %v343
  %v352 = vmul.f32 %v344, %v344
  %v353 = vmul.f32 %v345, %v345
  %v354 = vmul.f32 %v346, %v346
  %v355 = vmul.f32 %v347, %v347
  %v356 = vmul.f32 %v348, %v348
  %v357 = vadd.f32 %v349, %v350
  %358 = vadd.xlane.f32.xlu0 %v357
  %v359 = vpop.xlane.xlu0 %358
  %v360 = vadd.f32 %v351, %v352
  %361 = vadd.xlane.f32.xlu0 %v360
  %v362 = vpop.xlane.xlu0 %361
  %v363 = vadd.f32 %v353, %v354
  %364 = vadd.xlane.f32.xlu0 %v363
  %v365 = vpop.xlane.xlu0 %364
  %v366 = vadd.f32 %v355, %v356
  %367 = vadd.xlane.f32.xlu0 %v366
  %v368 = vpop.xlane.xlu0 %367
  %v369 = vmul.f32 %v359, %v336
  %v370 = vmul.f32 %v362, %v336
  %v371 = vmul.f32 %v365, %v336
  %v372 = vmul.f32 %v368, %v336
  %v373 = vadd.f32 %v369, 1e-12
  %v374 = vadd.f32 %v370, 1e-12
  %v375 = vadd.f32 %v371, 1e-12
  %v376 = vadd.f32 %v372, 1e-12
  %v377 = vrsqrt.pop %v373
  %v378 = vrsqrt.pop %v374
  %v379 = vrsqrt.pop %v375
  %v380 = vrsqrt.pop %v376
  %v381 = vmul.f32 %v341, %v377
  %v382 = vmul.f32 %v342, %v377
  %v383 = vmul.f32 %v343, %v378
  %v384 = vmul.f32 %v344, %v378
  %v385 = vmul.f32 %v345, %v379
  %v386 = vmul.f32 %v346, %v379
  %v387 = vmul.f32 %v347, %v380
  %v388 = vmul.f32 %v348, %v380
  %v389 = vld [vmem:[%s4] sm:$0x3]
  %v391 = vlaneseq
  %v392 = vshrl.u32 %v391, 7
  %v393 = vsub.s32 0, %v392
  %v394 = vrot.slane %v389, %v393
  %v395 = vlaneseq
  %v396 = vshrl.u32 %v395, 7
  %v397 = vsub.s32 1, %v396
  %v398 = vrot.slane %v389, %v397
  %v401 = vmul.f32 %v381, %v394
  %v402 = vmul.f32 %v382, %v398
  %v403 = vmul.f32 %v383, %v394
  %v404 = vmul.f32 %v384, %v398
  %v405 = vmul.f32 %v385, %v394
  %v406 = vmul.f32 %v386, %v398
  %v407 = vmul.f32 %v387, %v394
  %v408 = vmul.f32 %v388, %v398
  %v409 = vld [vmem:[%s5] sm:$0x3]
  %v411 = vlaneseq
  %v412 = vshrl.u32 %v411, 7
  %v413 = vsub.s32 0, %v412
  %v414 = vrot.slane %v409, %v413
  %v415 = vlaneseq
  %v416 = vshrl.u32 %v415, 7
  %v417 = vsub.s32 1, %v416
  %v418 = vrot.slane %v409, %v417
  %v421 = vadd.f32 %v401, %v414
  %v422 = vadd.f32 %v402, %v418
  %v423 = vadd.f32 %v403, %v414
  %v424 = vadd.f32 %v404, %v418
  %v425 = vadd.f32 %v405, %v414
  %v426 = vadd.f32 %v406, %v418
  %v427 = vadd.f32 %v407, %v414
  %v428 = vadd.f32 %v408, %v418
  %v429 = vpack.c.bf16 %v423, %v421
  %v430 = vpack.c.bf16 %v424, %v422
  %v431 = vpack.c.bf16 %v427, %v425
  %v432 = vpack.c.bf16 %v428, %v426
  %v437 = vunpack.c.l.b16 %v429
  %v438 = vunpack.c.l.b16 %v430
  %v439 = vunpack.c.h.b16 %v429
  %v440 = vunpack.c.h.b16 %v430
  %v441 = vunpack.c.l.b16 %v431
  %v442 = vunpack.c.l.b16 %v432
  %v443 = vunpack.c.h.b16 %v431
  %v444 = vunpack.c.h.b16 %v432
  %v445 = vpack.c.b16 %v438, %v437
  %v446 = vpack.c.b16 %v440, %v439
  %v447 = vpack.c.b16 %v442, %v441
  %v448 = vpack.c.b16 %v444, %v443
  %453 = vst [vmem:[%s6] sm:$0xff] %v445
  %454 = vst [vmem:[%s6 + $0x8] sm:$0xff] %v446
  %455 = vst [vmem:[%s6 + $0x10] sm:$0xff] %v447
  %456 = vst [vmem:[%s6 + $0x18] sm:$0xff] %v448
  // Predicated region
  $region26: #{bert_sentence_encoder.15} parent=0 // pred_check
    _
  $region27: #{bert_sentence_encoder.15} parent=0 // pred_check_branch
    %458 = sbr.rel (0) target = $region29
  $region28: #{bert_sentence_encoder.15} parent=0 // pred_region
    _
  $region29: #{bert_sentence_encoder.15} parent=0 // pred_fallthru
    _
  // Predicated region
  $region30: #{bert_sentence_encoder.15} parent=0 // pred_check
    _
  $region31: #{bert_sentence_encoder.15} parent=0 // pred_check_branch
    %460 = sbr.rel (0) target = $region33
  $region32: #{bert_sentence_encoder.15} parent=0 // pred_region
    _
  $region33: #{bert_sentence_encoder.15} parent=0 // pred_fallthru
    _

// kernel: bert_sentence_encoder.13
$region0: #{bert_sentence_encoder.13}
  #allocation0 [shape = 'u32[]', space=smem, size = 0x4, offset = 0x4, fixed_abs, tag = 'smem constant byte address 0x4 - core index']
  #allocation1 [shape = 'u32[144,128]{1,0:T(1,128)}', space=vmem, size = 0x12000, scoped, tag = 'internal scratch']
  %s0 = inlined_call_operand.vmem [shape: bf16[32,256], index: 0, kind: input, shape index: {}]
  %s1 = inlined_call_operand.vmem [shape: bf16[256,768], index: 1, kind: input, shape index: {}]
  %s2 = inlined_call_operand.vmem [shape: f32[1,768], index: 2, kind: input, shape index: {}]
  %s3 = inlined_call_operand.vmem [shape: bf16[32,768], index: 3, kind: output, shape index: {}]
  %s4 = sld [smem:[#allocation0]]
  $region22: #{bert_sentence_encoder.13} parent=0
    _
  %s6 = ssub.s32 1, %s4
  %s7 = scalar_select 0, %s6, %s4
  // Predicated region
  $region2: #{bert_sentence_encoder.13} parent=0 // pred_check
    _
  $region3: #{bert_sentence_encoder.13} parent=0 // pred_check_branch
    %9 = sbr.rel (0) target = $region5
  $region4: #{bert_sentence_encoder.13} parent=0 // pred_region
    _
  $region5: #{bert_sentence_encoder.13} parent=0 // pred_fallthru
    _
  // Predicated region
  $region6: #{bert_sentence_encoder.13} parent=0 // pred_check
    _
  $region7: #{bert_sentence_encoder.13} parent=0 // pred_check_branch
    %11 = sbr.rel (0) target = $region9
  $region8: #{bert_sentence_encoder.13} parent=0 // pred_region
    _
  $region9: #{bert_sentence_encoder.13} parent=0 // pred_fallthru
    _
  // Predicated region
  $region10: #{bert_sentence_encoder.13} parent=0 // pred_check
    _
  $region11: #{bert_sentence_encoder.13} parent=0 // pred_check_branch
    %13 = sbr.rel (0) target = $region13
  $region12: #{bert_sentence_encoder.13} parent=0 // pred_region
    _
  $region13: #{bert_sentence_encoder.13} parent=0 // pred_fallthru
    _
  %v14 = vld [vmem:[%s0] sm:$0xff]
  %v15 = vld [vmem:[%s0 + $0x8] sm:$0xff]
  %v16 = vld [vmem:[%s0 + $0x10] sm:$0xff]
  %v17 = vld [vmem:[%s0 + $0x18] sm:$0xff]
  %v18 = vld [vmem:[%s1] sm:$0xff]
  %v19 = vld [vmem:[%s1 + $0x8] sm:$0xff]
  %v20 = vld [vmem:[%s1 + $0x10] sm:$0xff]
  %v21 = vld [vmem:[%s1 + $0x18] sm:$0xff]
  %v22 = vld [vmem:[%s1 + $0x20] sm:$0xff]
  %v23 = vld [vmem:[%s1 + $0x28] sm:$0xff]
  %v24 = vld [vmem:[%s1 + $0x30] sm:$0xff]
  %v25 = vld [vmem:[%s1 + $0x38] sm:$0xff]
  %v26 = vld [vmem:[%s1 + $0x40] sm:$0xff]
  %v27 = vld [vmem:[%s1 + $0x48] sm:$0xff]
  %v28 = vld [vmem:[%s1 + $0x50] sm:$0xff]
  %v29 = vld [vmem:[%s1 + $0x58] sm:$0xff]
  %v30 = vld [vmem:[%s1 + $0x60] sm:$0xff]
  %v31 = vld [vmem:[%s1 + $0x68] sm:$0xff]
  %v32 = vld [vmem:[%s1 + $0x70] sm:$0xff]
  %v33 = vld [vmem:[%s1 + $0x78] sm:$0xff]
  %v34 = vld [vmem:[%s1 + $0x80] sm:$0xff]
  %v35 = vld [vmem:[%s1 + $0x88] sm:$0xff]
  %v36 = vld [vmem:[%s1 + $0x90] sm:$0xff]
  %v37 = vld [vmem:[%s1 + $0x98] sm:$0xff]
  %v38 = vld [vmem:[%s1 + $0xa0] sm:$0xff]
  %v39 = vld [vmem:[%s1 + $0xa8] sm:$0xff]
  %v40 = vld [vmem:[%s1 + $0xb0] sm:$0xff]
  %v41 = vld [vmem:[%s1 + $0xb8] sm:$0xff]
  %v42 = vld [vmem:[%s1 + $0xc0] sm:$0xff]
  %v43 = vld [vmem:[%s1 + $0xc8] sm:$0xff]
  %v44 = vld [vmem:[%s1 + $0xd0] sm:$0xff]
  %v45 = vld [vmem:[%s1 + $0xd8] sm:$0xff]
  %v46 = vld [vmem:[%s1 + $0xe0] sm:$0xff]
  %v47 = vld [vmem:[%s1 + $0xe8] sm:$0xff]
  %v48 = vld [vmem:[%s1 + $0xf0] sm:$0xff]
  %v49 = vld [vmem:[%s1 + $0xf8] sm:$0xff]
  %v50 = vld [vmem:[%s1 + $0x100] sm:$0xff]
  %v51 = vld [vmem:[%s1 + $0x108] sm:$0xff]
  %v52 = vld [vmem:[%s1 + $0x110] sm:$0xff]
  %v53 = vld [vmem:[%s1 + $0x118] sm:$0xff]
  %v54 = vld [vmem:[%s1 + $0x120] sm:$0xff]
  %v55 = vld [vmem:[%s1 + $0x128] sm:$0xff]
  %v56 = vld [vmem:[%s1 + $0x130] sm:$0xff]
  %v57 = vld [vmem:[%s1 + $0x138] sm:$0xff]
  %v58 = vld [vmem:[%s1 + $0x140] sm:$0xff]
  %v59 = vld [vmem:[%s1 + $0x148] sm:$0xff]
  %v60 = vld [vmem:[%s1 + $0x150] sm:$0xff]
  %v61 = vld [vmem:[%s1 + $0x158] sm:$0xff]
  %v62 = vld [vmem:[%s1 + $0x160] sm:$0xff]
  %v63 = vld [vmem:[%s1 + $0x168] sm:$0xff]
  %v64 = vld [vmem:[%s1 + $0x170] sm:$0xff]
  %v65 = vld [vmem:[%s1 + $0x178] sm:$0xff]
  %v66 = vld [vmem:[%s1 + $0x180] sm:$0xff]
  %v67 = vld [vmem:[%s1 + $0x188] sm:$0xff]
  %v68 = vld [vmem:[%s1 + $0x190] sm:$0xff]
  %v69 = vld [vmem:[%s1 + $0x198] sm:$0xff]
  %v70 = vld [vmem:[%s1 + $0x1a0] sm:$0xff]
  %v71 = vld [vmem:[%s1 + $0x1a8] sm:$0xff]
  %v72 = vld [vmem:[%s1 + $0x1b0] sm:$0xff]
  %v73 = vld [vmem:[%s1 + $0x1b8] sm:$0xff]
  %v74 = vld [vmem:[%s1 + $0x1c0] sm:$0xff]
  %v75 = vld [vmem:[%s1 + $0x1c8] sm:$0xff]
  %v76 = vld [vmem:[%s1 + $0x1d0] sm:$0xff]
  %v77 = vld [vmem:[%s1 + $0x1d8] sm:$0xff]
  %v78 = vld [vmem:[%s1 + $0x1e0] sm:$0xff]
  %v79 = vld [vmem:[%s1 + $0x1e8] sm:$0xff]
  %v80 = vld [vmem:[%s1 + $0x1f0] sm:$0xff]
  %v81 = vld [vmem:[%s1 + $0x1f8] sm:$0xff]
  %v82 = vld [vmem:[%s1 + $0x200] sm:$0xff]
  %v83 = vld [vmem:[%s1 + $0x208] sm:$0xff]
  %v84 = vld [vmem:[%s1 + $0x210] sm:$0xff]
  %v85 = vld [vmem:[%s1 + $0x218] sm:$0xff]
  %v86 = vld [vmem:[%s1 + $0x220] sm:$0xff]
  %v87 = vld [vmem:[%s1 + $0x228] sm:$0xff]
  %v88 = vld [vmem:[%s1 + $0x230] sm:$0xff]
  %v89 = vld [vmem:[%s1 + $0x238] sm:$0xff]
  %v90 = vld [vmem:[%s1 + $0x240] sm:$0xff]
  %v91 = vld [vmem:[%s1 + $0x248] sm:$0xff]
  %v92 = vld [vmem:[%s1 + $0x250] sm:$0xff]
  %v93 = vld [vmem:[%s1 + $0x258] sm:$0xff]
  %v94 = vld [vmem:[%s1 + $0x260] sm:$0xff]
  %v95 = vld [vmem:[%s1 + $0x268] sm:$0xff]
  %v96 = vld [vmem:[%s1 + $0x270] sm:$0xff]
  %v97 = vld [vmem:[%s1 + $0x278] sm:$0xff]
  %v98 = vld [vmem:[%s1 + $0x280] sm:$0xff]
  %v99 = vld [vmem:[%s1 + $0x288] sm:$0xff]
  %v100 = vld [vmem:[%s1 + $0x290] sm:$0xff]
  %v101 = vld [vmem:[%s1 + $0x298] sm:$0xff]
  %v102 = vld [vmem:[%s1 + $0x2a0] sm:$0xff]
  %v103 = vld [vmem:[%s1 + $0x2a8] sm:$0xff]
  %v104 = vld [vmem:[%s1 + $0x2b0] sm:$0xff]
  %v105 = vld [vmem:[%s1 + $0x2b8] sm:$0xff]
  %v106 = vld [vmem:[%s1 + $0x2c0] sm:$0xff]
  %v107 = vld [vmem:[%s1 + $0x2c8] sm:$0xff]
  %v108 = vld [vmem:[%s1 + $0x2d0] sm:$0xff]
  %v109 = vld [vmem:[%s1 + $0x2d8] sm:$0xff]
  %v110 = vld [vmem:[%s1 + $0x2e0] sm:$0xff]
  %v111 = vld [vmem:[%s1 + $0x2e8] sm:$0xff]
  %v112 = vld [vmem:[%s1 + $0x2f0] sm:$0xff]
  %v113 = vld [vmem:[%s1 + $0x2f8] sm:$0xff]
  %v114 = vld [vmem:[%s2] sm:$0x3f]
  %v116 = vlaneseq
  %v117 = vshrl.u32 %v116, 7
  %v118 = vsub.s32 0, %v117
  %v119 = vrot.slane %v114, %v118
  %v120 = vlaneseq
  %v121 = vshrl.u32 %v120, 7
  %v122 = vsub.s32 1, %v121
  %v123 = vrot.slane %v114, %v122
  %v124 = vlaneseq
  %v125 = vshrl.u32 %v124, 7
  %v126 = vsub.s32 2, %v125
  %v127 = vrot.slane %v114, %v126
  %v128 = vlaneseq
  %v129 = vshrl.u32 %v128, 7
  %v130 = vsub.s32 3, %v129
  %v131 = vrot.slane %v114, %v130
  %v132 = vlaneseq
  %v133 = vshrl.u32 %v132, 7
  %v134 = vsub.s32 4, %v133
  %v135 = vrot.slane %v114, %v134
  %v136 = vlaneseq
  %v137 = vshrl.u32 %v136, 7
  %v138 = vsub.s32 5, %v137
  %v139 = vrot.slane %v114, %v138
  %v150 = vunpack.c.l.b16 %v14
  %v151 = vunpack.c.h.b16 %v14
  %v152 = vunpack.c.l.b16 %v15
  %v153 = vunpack.c.h.b16 %v15
  %v154 = vunpack.c.l.b16 %v16
  %v155 = vunpack.c.h.b16 %v16
  %v156 = vunpack.c.l.b16 %v17
  %v157 = vunpack.c.h.b16 %v17
  %v158 = vpack.c.b16 %v152, %v150
  %v159 = vpack.c.b16 %v153, %v151
  %v160 = vpack.c.b16 %v156, %v154
  %v161 = vpack.c.b16 %v157, %v155
  %v262 = vunpack.c.l.b16 %v18
  %v263 = vunpack.c.h.b16 %v18
  %v264 = vunpack.c.l.b16 %v19
  %v265 = vunpack.c.h.b16 %v19
  %v266 = vunpack.c.l.b16 %v20
  %v267 = vunpack.c.h.b16 %v20
  %v268 = vunpack.c.l.b16 %v21
  %v269 = vunpack.c.h.b16 %v21
  %v270 = vunpack.c.l.b16 %v22
  %v271 = vunpack.c.h.b16 %v22
  %v272 = vunpack.c.l.b16 %v23
  %v273 = vunpack.c.h.b16 %v23
  %v274 = vunpack.c.l.b16 %v24
  %v275 = vunpack.c.h.b16 %v24
  %v276 = vunpack.c.l.b16 %v25
  %v277 = vunpack.c.h.b16 %v25
  %v278 = vunpack.c.l.b16 %v26
  %v279 = vunpack.c.h.b16 %v26
  %v280 = vunpack.c.l.b16 %v27
  %v281 = vunpack.c.h.b16 %v27
  %v282 = vunpack.c.l.b16 %v28
  %v283 = vunpack.c.h.b16 %v28
  %v284 = vunpack.c.l.b16 %v29
  %v285 = vunpack.c.h.b16 %v29
  %v286 = vunpack.c.l.b16 %v30
  %v287 = vunpack.c.h.b16 %v30
  %v288 = vunpack.c.l.b16 %v31
  %v289 = vunpack.c.h.b16 %v31
  %v290 = vunpack.c.l.b16 %v32
  %v291 = vunpack.c.h.b16 %v32
  %v292 = vunpack.c.l.b16 %v33
  %v293 = vunpack.c.h.b16 %v33
  %v294 = vunpack.c.l.b16 %v34
  %v295 = vunpack.c.h.b16 %v34
  %v296 = vunpack.c.l.b16 %v35
  %v297 = vunpack.c.h.b16 %v35
  %v298 = vunpack.c.l.b16 %v36
  %v299 = vunpack.c.h.b16 %v36
  %v300 = vunpack.c.l.b16 %v37
  %v301 = vunpack.c.h.b16 %v37
  %v302 = vunpack.c.l.b16 %v38
  %v303 = vunpack.c.h.b16 %v38
  %v304 = vunpack.c.l.b16 %v39
  %v305 = vunpack.c.h.b16 %v39
  %v306 = vunpack.c.l.b16 %v40
  %v307 = vunpack.c.h.b16 %v40
  %v308 = vunpack.c.l.b16 %v41
  %v309 = vunpack.c.h.b16 %v41
  %v310 = vunpack.c.l.b16 %v42
  %v311 = vunpack.c.h.b16 %v42
  %v312 = vunpack.c.l.b16 %v43
  %v313 = vunpack.c.h.b16 %v43
  %v314 = vunpack.c.l.b16 %v44
  %v315 = vunpack.c.h.b16 %v44
  %v316 = vunpack.c.l.b16 %v45
  %v317 = vunpack.c.h.b16 %v45
  %v318 = vunpack.c.l.b16 %v46
  %v319 = vunpack.c.h.b16 %v46
  %v320 = vunpack.c.l.b16 %v47
  %v321 = vunpack.c.h.b16 %v47
  %v322 = vunpack.c.l.b16 %v48
  %v323 = vunpack.c.h.b16 %v48
  %v324 = vunpack.c.l.b16 %v49
  %v325 = vunpack.c.h.b16 %v49
  %v326 = vunpack.c.l.b16 %v50
  %v327 = vunpack.c.h.b16 %v50
  %v328 = vunpack.c.l.b16 %v51
  %v329 = vunpack.c.h.b16 %v51
  %v330 = vunpack.c.l.b16 %v52
  %v331 = vunpack.c.h.b16 %v52
  %v332 = vunpack.c.l.b16 %v53
  %v333 = vunpack.c.h.b16 %v53
  %v334 = vunpack.c.l.b16 %v54
  %v335 = vunpack.c.h.b16 %v54
  %v336 = vunpack.c.l.b16 %v55
  %v337 = vunpack.c.h.b16 %v55
  %v338 = vunpack.c.l.b16 %v56
  %v339 = vunpack.c.h.b16 %v56
  %v340 = vunpack.c.l.b16 %v57
  %v341 = vunpack.c.h.b16 %v57
  %v342 = vunpack.c.l.b16 %v58
  %v343 = vunpack.c.h.b16 %v58
  %v344 = vunpack.c.l.b16 %v59
  %v345 = vunpack.c.h.b16 %v59
  %v346 = vunpack.c.l.b16 %v60
  %v347 = vunpack.c.h.b16 %v60
  %v348 = vunpack.c.l.b16 %v61
  %v349 = vunpack.c.h.b16 %v61
  %v350 = vunpack.c.l.b16 %v62
  %v351 = vunpack.c.h.b16 %v62
  %v352 = vunpack.c.l.b16 %v63
  %v353 = vunpack.c.h.b16 %v63
  %v354 = vunpack.c.l.b16 %v64
  %v355 = vunpack.c.h.b16 %v64
  %v356 = vunpack.c.l.b16 %v65
  %v357 = vunpack.c.h.b16 %v65
  %v358 = vunpack.c.l.b16 %v66
  %v359 = vunpack.c.h.b16 %v66
  %v360 = vunpack.c.l.b16 %v67
  %v361 = vunpack.c.h.b16 %v67
  %v362 = vunpack.c.l.b16 %v68
  %v363 = vunpack.c.h.b16 %v68
  %v364 = vunpack.c.l.b16 %v69
  %v365 = vunpack.c.h.b16 %v69
  %v366 = vunpack.c.l.b16 %v70
  %v367 = vunpack.c.h.b16 %v70
  %v368 = vunpack.c.l.b16 %v71
  %v369 = vunpack.c.h.b16 %v71
  %v370 = vunpack.c.l.b16 %v72
  %v371 = vunpack.c.h.b16 %v72
  %v372 = vunpack.c.l.b16 %v73
  %v373 = vunpack.c.h.b16 %v73
  %v374 = vunpack.c.l.b16 %v74
  %v375 = vunpack.c.h.b16 %v74
  %v376 = vunpack.c.l.b16 %v75
  %v377 = vunpack.c.h.b16 %v75
  %v378 = vunpack.c.l.b16 %v76
  %v379 = vunpack.c.h.b16 %v76
  %v380 = vunpack.c.l.b16 %v77
  %v381 = vunpack.c.h.b16 %v77
  %v382 = vunpack.c.l.b16 %v78
  %v383 = vunpack.c.h.b16 %v78
  %v384 = vunpack.c.l.b16 %v79
  %v385 = vunpack.c.h.b16 %v79
  %v386 = vunpack.c.l.b16 %v80
  %v387 = vunpack.c.h.b16 %v80
  %v388 = vunpack.c.l.b16 %v81
  %v389 = vunpack.c.h.b16 %v81
  %v390 = vunpack.c.l.b16 %v82
  %v391 = vunpack.c.h.b16 %v82
  %v392 = vunpack.c.l.b16 %v83
  %v393 = vunpack.c.h.b16 %v83
  %v394 = vunpack.c.l.b16 %v84
  %v395 = vunpack.c.h.b16 %v84
  %v396 = vunpack.c.l.b16 %v85
  %v397 = vunpack.c.h.b16 %v85
  %v398 = vunpack.c.l.b16 %v86
  %v399 = vunpack.c.h.b16 %v86
  %v400 = vunpack.c.l.b16 %v87
  %v401 = vunpack.c.h.b16 %v87
  %v402 = vunpack.c.l.b16 %v88
  %v403 = vunpack.c.h.b16 %v88
  %v404 = vunpack.c.l.b16 %v89
  %v405 = vunpack.c.h.b16 %v89
  %v406 = vunpack.c.l.b16 %v90
  %v407 = vunpack.c.h.b16 %v90
  %v408 = vunpack.c.l.b16 %v91
  %v409 = vunpack.c.h.b16 %v91
  %v410 = vunpack.c.l.b16 %v92
  %v411 = vunpack.c.h.b16 %v92
  %v412 = vunpack.c.l.b16 %v93
  %v413 = vunpack.c.h.b16 %v93
  %v414 = vunpack.c.l.b16 %v94
  %v415 = vunpack.c.h.b16 %v94
  %v416 = vunpack.c.l.b16 %v95
  %v417 = vunpack.c.h.b16 %v95
  %v418 = vunpack.c.l.b16 %v96
  %v419 = vunpack.c.h.b16 %v96
  %v420 = vunpack.c.l.b16 %v97
  %v421 = vunpack.c.h.b16 %v97
  %v422 = vunpack.c.l.b16 %v98
  %v423 = vunpack.c.h.b16 %v98
  %v424 = vunpack.c.l.b16 %v99
  %v425 = vunpack.c.h.b16 %v99
  %v426 = vunpack.c.l.b16 %v100
  %v427 = vunpack.c.h.b16 %v100
  %v428 = vunpack.c.l.b16 %v101
  %v429 = vunpack.c.h.b16 %v101
  %v430 = vunpack.c.l.b16 %v102
  %v431 = vunpack.c.h.b16 %v102
  %v432 = vunpack.c.l.b16 %v103
  %v433 = vunpack.c.h.b16 %v103
  %v434 = vunpack.c.l.b16 %v104
  %v435 = vunpack.c.h.b16 %v104
  %v436 = vunpack.c.l.b16 %v105
  %v437 = vunpack.c.h.b16 %v105
  %v438 = vunpack.c.l.b16 %v106
  %v439 = vunpack.c.h.b16 %v106
  %v440 = vunpack.c.l.b16 %v107
  %v441 = vunpack.c.h.b16 %v107
  %v442 = vunpack.c.l.b16 %v108
  %v443 = vunpack.c.h.b16 %v108
  %v444 = vunpack.c.l.b16 %v109
  %v445 = vunpack.c.h.b16 %v109
  %v446 = vunpack.c.l.b16 %v110
  %v447 = vunpack.c.h.b16 %v110
  %v448 = vunpack.c.l.b16 %v111
  %v449 = vunpack.c.h.b16 %v111
  %v450 = vunpack.c.l.b16 %v112
  %v451 = vunpack.c.h.b16 %v112
  %v452 = vunpack.c.l.b16 %v113
  %v453 = vunpack.c.h.b16 %v113
  %v454 = vpack.c.b16 %v268, %v262
  %v455 = vpack.c.b16 %v269, %v263
  %v456 = vpack.c.b16 %v270, %v264
  %v457 = vpack.c.b16 %v271, %v265
  %v458 = vpack.c.b16 %v272, %v266
  %v459 = vpack.c.b16 %v273, %v267
  %v460 = vpack.c.b16 %v280, %v274
  %v461 = vpack.c.b16 %v281, %v275
  %v462 = vpack.c.b16 %v282, %v276
  %v463 = vpack.c.b16 %v283, %v277
  %v464 = vpack.c.b16 %v284, %v278
  %v465 = vpack.c.b16 %v285, %v279
  %v466 = vpack.c.b16 %v292, %v286
  %v467 = vpack.c.b16 %v293, %v287
  %v468 = vpack.c.b16 %v294, %v288
  %v469 = vpack.c.b16 %v295, %v289
  %v470 = vpack.c.b16 %v296, %v290
  %v471 = vpack.c.b16 %v297, %v291
  %v472 = vpack.c.b16 %v304, %v298
  %v473 = vpack.c.b16 %v305, %v299
  %v474 = vpack.c.b16 %v306, %v300
  %v475 = vpack.c.b16 %v307, %v301
  %v476 = vpack.c.b16 %v308, %v302
  %v477 = vpack.c.b16 %v309, %v303
  %v478 = vpack.c.b16 %v316, %v310
  %v479 = vpack.c.b16 %v317, %v311
  %v480 = vpack.c.b16 %v318, %v312
  %v481 = vpack.c.b16 %v319, %v313
  %v482 = vpack.c.b16 %v320, %v314
  %v483 = vpack.c.b16 %v321, %v315
  %v484 = vpack.c.b16 %v328, %v322
  %v485 = vpack.c.b16 %v329, %v323
  %v486 = vpack.c.b16 %v330, %v324
  %v487 = vpack.c.b16 %v331, %v325
  %v488 = vpack.c.b16 %v332, %v326
  %v489 = vpack.c.b16 %v333, %v327
  %v490 = vpack.c.b16 %v340, %v334
  %v491 = vpack.c.b16 %v341, %v335
  %v492 = vpack.c.b16 %v342, %v336
  %v493 = vpack.c.b16 %v343, %v337
  %v494 = vpack.c.b16 %v344, %v338
  %v495 = vpack.c.b16 %v345, %v339
  %v496 = vpack.c.b16 %v352, %v346
  %v497 = vpack.c.b16 %v353, %v347
  %v498 = vpack.c.b16 %v354, %v348
  %v499 = vpack.c.b16 %v355, %v349
  %v500 = vpack.c.b16 %v356, %v350
  %v501 = vpack.c.b16 %v357, %v351
  %v502 = vpack.c.b16 %v364, %v358
  %v503 = vpack.c.b16 %v365, %v359
  %v504 = vpack.c.b16 %v366, %v360
  %v505 = vpack.c.b16 %v367, %v361
  %v506 = vpack.c.b16 %v368, %v362
  %v507 = vpack.c.b16 %v369, %v363
  %v508 = vpack.c.b16 %v376, %v370
  %v509 = vpack.c.b16 %v377, %v371
  %v510 = vpack.c.b16 %v378, %v372
  %v511 = vpack.c.b16 %v379, %v373
  %v512 = vpack.c.b16 %v380, %v374
  %v513 = vpack.c.b16 %v381, %v375
  %v514 = vpack.c.b16 %v388, %v382
  %v515 = vpack.c.b16 %v389, %v383
  %v516 = vpack.c.b16 %v390, %v384
  %v517 = vpack.c.b16 %v391, %v385
  %v518 = vpack.c.b16 %v392, %v386
  %v519 = vpack.c.b16 %v393, %v387
  %v520 = vpack.c.b16 %v400, %v394
  %v521 = vpack.c.b16 %v401, %v395
  %v522 = vpack.c.b16 %v402, %v396
  %v523 = vpack.c.b16 %v403, %v397
  %v524 = vpack.c.b16 %v404, %v398
  %v525 = vpack.c.b16 %v405, %v399
  %v526 = vpack.c.b16 %v412, %v406
  %v527 = vpack.c.b16 %v413, %v407
  %v528 = vpack.c.b16 %v414, %v408
  %v529 = vpack.c.b16 %v415, %v409
  %v530 = vpack.c.b16 %v416, %v410
  %v531 = vpack.c.b16 %v417, %v411
  %v532 = vpack.c.b16 %v424, %v418
  %v533 = vpack.c.b16 %v425, %v419
  %v534 = vpack.c.b16 %v426, %v420
  %v535 = vpack.c.b16 %v427, %v421
  %v536 = vpack.c.b16 %v428, %v422
  %v537 = vpack.c.b16 %v429, %v423
  %v538 = vpack.c.b16 %v436, %v430
  %v539 = vpack.c.b16 %v437, %v431
  %v540 = vpack.c.b16 %v438, %v432
  %v541 = vpack.c.b16 %v439, %v433
  %v542 = vpack.c.b16 %v440, %v434
  %v543 = vpack.c.b16 %v441, %v435
  %v544 = vpack.c.b16 %v448, %v442
  %v545 = vpack.c.b16 %v449, %v443
  %v546 = vpack.c.b16 %v450, %v444
  %v547 = vpack.c.b16 %v451, %v445
  %v548 = vpack.c.b16 %v452, %v446
  %v549 = vpack.c.b16 %v453, %v447
  %646 = vmatprep.subr.bf16.mxu0 %v455
  %647 = vmatpush1.bf16.msra.mxu0 %v454
  %648 = vmatprep.subr.bf16.mxu0 %v461
  %649 = vmatpush1.bf16.msra.mxu0 %v460
  %650 = vmatprep.subr.bf16.mxu0 %v467
  %651 = vmatpush1.bf16.msra.mxu0 %v466
  %652 = vmatprep.subr.bf16.mxu0 %v473
  %653 = vmatpush1.bf16.msra.mxu0 %v472
  %654 = vmatprep.subr.bf16.mxu0 %v479
  %655 = vmatpush1.bf16.msra.mxu0 %v478
  %656 = vmatprep.subr.bf16.mxu0 %v485
  %657 = vmatpush1.bf16.msra.mxu0 %v484
  %658 = vmatprep.subr.bf16.mxu0 %v491
  %659 = vmatpush1.bf16.msra.mxu0 %v490
  %660 = vmatprep.subr.bf16.mxu0 %v497
  %661 = vmatpush1.bf16.msra.mxu0 %v496
  %662 = vmatprep.subr.bf16.mxu0 %v503
  %663 = vmatpush1.bf16.msra.mxu0 %v502
  %664 = vmatprep.subr.bf16.mxu0 %v509
  %665 = vmatpush1.bf16.msra.mxu0 %v508
  %666 = vmatprep.subr.bf16.mxu0 %v515
  %667 = vmatpush1.bf16.msra.mxu0 %v514
  %668 = vmatprep.subr.bf16.mxu0 %v521
  %669 = vmatpush1.bf16.msra.mxu0 %v520
  %670 = vmatprep.subr.bf16.mxu0 %v527
  %671 = vmatpush1.bf16.msra.mxu0 %v526
  %672 = vmatprep.subr.bf16.mxu0 %v533
  %673 = vmatpush1.bf16.msra.mxu0 %v532
  %674 = vmatprep.subr.bf16.mxu0 %v539
  %675 = vmatpush1.bf16.msra.mxu0 %v538
  %676 = vmatprep.subr.bf16.mxu0 %v545
  %677 = vmatpush1.bf16.msra.mxu0 %v544
  %678 = vmatprep.mubr.bf16.mxu0 %v159
  %679 = vmatmul.mubr.bf16.gmra.mrb[0].mxu0 %v158
  %v680 = vpop.f32.mrb[0].mxu0
  %v681 = vadd.f32 %v119, %v680
  %v682 = vpop.f32.mrb[0].mxu0
  %v683 = vadd.f32 %v123, %v682
  %v684 = vpop.f32.mrb[0].mxu0
  %v685 = vadd.f32 %v119, %v684
  %v686 = vpop.f32.mrb[0].mxu0
  %v687 = vadd.f32 %v123, %v686
  %688 = vmatprep.mubr.bf16.mxu0 %v161
  %689 = vmatmul.mubr.bf16.gmra.mrb[0].mxu0 %v160
  %v690 = vpop.f32.mrb[0].mxu0
  %v691 = vadd.f32 %v119, %v690
  %v692 = vpop.f32.mrb[0].mxu0
  %v693 = vadd.f32 %v123, %v692
  %v694 = vpop.f32.mrb[0].mxu0
  %v695 = vadd.f32 %v119, %v694
  %v696 = vpop.f32.mrb[0].mxu0
  %v697 = vadd.f32 %v123, %v696
  %698 = vdwg.mxu0
  %699 = vmatprep.subr.bf16.mxu0 %v457
  %700 = vmatpush1.bf16.msra.mxu0 %v456
  %701 = vmatprep.subr.bf16.mxu0 %v463
  %702 = vmatpush1.bf16.msra.mxu0 %v462
  %703 = vmatprep.subr.bf16.mxu0 %v469
  %704 = vmatpush1.bf16.msra.mxu0 %v468
  %705 = vmatprep.subr.bf16.mxu0 %v475
  %706 = vmatpush1.bf16.msra.mxu0 %v474
  %707 = vmatprep.subr.bf16.mxu0 %v481
  %708 = vmatpush1.bf16.msra.mxu0 %v480
  %709 = vmatprep.subr.bf16.mxu0 %v487
  %710 = vmatpush1.bf16.msra.mxu0 %v486
  %711 = vmatprep.subr.bf16.mxu0 %v493
  %712 = vmatpush1.bf16.msra.mxu0 %v492
  %713 = vmatprep.subr.bf16.mxu0 %v499
  %714 = vmatpush1.bf16.msra.mxu0 %v498
  %715 = vmatprep.subr.bf16.mxu0 %v505
  %716 = vmatpush1.bf16.msra.mxu0 %v504
  %717 = vmatprep.subr.bf16.mxu0 %v511
  %718 = vmatpush1.bf16.msra.mxu0 %v510
  %719 = vmatprep.subr.bf16.mxu0 %v517
  %720 = vmatpush1.bf16.msra.mxu0 %v516
  %721 = vmatprep.subr.bf16.mxu0 %v523
  %722 = vmatpush1.bf16.msra.mxu0 %v522
  %723 = vmatprep.subr.bf16.mxu0 %v529
  %724 = vmatpush1.bf16.msra.mxu0 %v528
  %725 = vmatprep.subr.bf16.mxu0 %v535
  %726 = vmatpush1.bf16.msra.mxu0 %v534
  %727 = vmatprep.subr.bf16.mxu0 %v541
  %728 = vmatpush1.bf16.msra.mxu0 %v540
  %729 = vmatprep.subr.bf16.mxu0 %v547
  %730 = vmatpush1.bf16.msra.mxu0 %v546
  %731 = vmatprep.mubr.bf16.mxu0 %v159
  %732 = vmatmul.mubr.bf16.gmra.mrb[0].mxu0 %v158
  %v733 = vpop.f32.mrb[0].mxu0
  %v734 = vadd.f32 %v127, %v733
  %v735 = vpop.f32.mrb[0].mxu0
  %v736 = vadd.f32 %v131, %v735
  %v737 = vpop.f32.mrb[0].mxu0
  %v738 = vadd.f32 %v127, %v737
  %v739 = vpop.f32.mrb[0].mxu0
  %v740 = vadd.f32 %v131, %v739
  %741 = vmatprep.mubr.bf16.mxu0 %v161
  %742 = vmatmul.mubr.bf16.gmra.mrb[0].mxu0 %v160
  %v743 = vpop.f32.mrb[0].mxu0
  %v744 = vadd.f32 %v127, %v743
  %v745 = vpop.f32.mrb[0].mxu0
  %v746 = vadd.f32 %v131, %v745
  %v747 = vpop.f32.mrb[0].mxu0
  %v748 = vadd.f32 %v127, %v747
  %v749 = vpop.f32.mrb[0].mxu0
  %v750 = vadd.f32 %v131, %v749
  %751 = vdwg.mxu0
  %752 = vmatprep.subr.bf16.mxu0 %v459
  %753 = vmatpush1.bf16.msra.mxu0 %v458
  %754 = vmatprep.subr.bf16.mxu0 %v465
  %755 = vmatpush1.bf16.msra.mxu0 %v464
  %756 = vmatprep.subr.bf16.mxu0 %v471
  %757 = vmatpush1.bf16.msra.mxu0 %v470
  %758 = vmatprep.subr.bf16.mxu0 %v477
  %759 = vmatpush1.bf16.msra.mxu0 %v476
  %760 = vmatprep.subr.bf16.mxu0 %v483
  %761 = vmatpush1.bf16.msra.mxu0 %v482
  %762 = vmatprep.subr.bf16.mxu0 %v489
  %763 = vmatpush1.bf16.msra.mxu0 %v488
  %764 = vmatprep.subr.bf16.mxu0 %v495
  %765 = vmatpush1.bf16.msra.mxu0 %v494
  %766 = vmatprep.subr.bf16.mxu0 %v501
  %767 = vmatpush1.bf16.msra.mxu0 %v500
  %768 = vmatprep.subr.bf16.mxu0 %v507
  %769 = vmatpush1.bf16.msra.mxu0 %v506
  %770 = vmatprep.subr.bf16.mxu0 %v513
  %771 = vmatpush1.bf16.msra.mxu0 %v512
  %772 = vmatprep.subr.bf16.mxu0 %v519
  %773 = vmatpush1.bf16.msra.mxu0 %v518
  %774 = vmatprep.subr.bf16.mxu0 %v525
  %775 = vmatpush1.bf16.msra.mxu0 %v524
  %776 = vmatprep.subr.bf16.mxu0 %v531
  %777 = vmatpush1.bf16.msra.mxu0 %v530
  %778 = vmatprep.subr.bf16.mxu0 %v537
  %779 = vmatpush1.bf16.msra.mxu0 %v536
  %780 = vmatprep.subr.bf16.mxu0 %v543
  %781 = vmatpush1.bf16.msra.mxu0 %v542
  %782 = vmatprep.subr.bf16.mxu0 %v549
  %783 = vmatpush1.bf16.msra.mxu0 %v548
  %784 = vmatprep.mubr.bf16.mxu0 %v159
  %785 = vmatmul.mubr.bf16.gmra.mrb[0].mxu0 %v158
  %v786 = vpop.f32.mrb[0].mxu0
  %v787 = vadd.f32 %v135, %v786
  %v788 = vpop.f32.mrb[0].mxu0
  %v789 = vadd.f32 %v139, %v788
  %v790 = vpop.f32.mrb[0].mxu0
  %v791 = vadd.f32 %v135, %v790
  %v792 = vpop.f32.mrb[0].mxu0
  %v793 = vadd.f32 %v139, %v792
  %794 = vmatprep.mubr.bf16.mxu0 %v161
  %795 = vmatmul.mubr.bf16.gmra.mrb[0].mxu0 %v160
  %v796 = vpop.f32.mrb[0].mxu0
  %v797 = vadd.f32 %v135, %v796
  %v798 = vpop.f32.mrb[0].mxu0
  %v799 = vadd.f32 %v139, %v798
  %v800 = vpop.f32.mrb[0].mxu0
  %v801 = vadd.f32 %v135, %v800
  %v802 = vpop.f32.mrb[0].mxu0
  %v803 = vadd.f32 %v139, %v802
  %804 = vdwg.mxu0
  %v805 = vpack.c.bf16 %v685, %v681
  %v806 = vpack.c.bf16 %v687, %v683
  %v807 = vpack.c.bf16 %v738, %v734
  %v808 = vpack.c.bf16 %v740, %v736
  %v809 = vpack.c.bf16 %v791, %v787
  %v810 = vpack.c.bf16 %v793, %v789
  %v811 = vpack.c.bf16 %v695, %v691
  %v812 = vpack.c.bf16 %v697, %v693
  %v813 = vpack.c.bf16 %v748, %v744
  %v814 = vpack.c.bf16 %v750, %v746
  %v815 = vpack.c.bf16 %v801, %v797
  %v816 = vpack.c.bf16 %v803, %v799
  %v829 = vunpack.c.l.b16 %v805
  %v830 = vunpack.c.l.b16 %v806
  %v831 = vunpack.c.l.b16 %v807
  %v832 = vunpack.c.l.b16 %v808
  %v833 = vunpack.c.l.b16 %v809
  %v834 = vunpack.c.l.b16 %v810
  %v835 = vunpack.c.h.b16 %v805
  %v836 = vunpack.c.h.b16 %v806
  %v837 = vunpack.c.h.b16 %v807
  %v838 = vunpack.c.h.b16 %v808
  %v839 = vunpack.c.h.b16 %v809
  %v840 = vunpack.c.h.b16 %v810
  %v841 = vunpack.c.l.b16 %v811
  %v842 = vunpack.c.l.b16 %v812
  %v843 = vunpack.c.l.b16 %v813
  %v844 = vunpack.c.l.b16 %v814
  %v845 = vunpack.c.l.b16 %v815
  %v846 = vunpack.c.l.b16 %v816
  %v847 = vunpack.c.h.b16 %v811
  %v848 = vunpack.c.h.b16 %v812
  %v849 = vunpack.c.h.b16 %v813
  %v850 = vunpack.c.h.b16 %v814
  %v851 = vunpack.c.h.b16 %v815
  %v852 = vunpack.c.h.b16 %v816
  %v853 = vpack.c.b16 %v830, %v829
  %v854 = vpack.c.b16 %v832, %v831
  %v855 = vpack.c.b16 %v834, %v833
  %v856 = vpack.c.b16 %v836, %v835
  %v857 = vpack.c.b16 %v838, %v837
  %v858 = vpack.c.b16 %v840, %v839
  %v859 = vpack.c.b16 %v842, %v841
  %v860 = vpack.c.b16 %v844, %v843
  %v861 = vpack.c.b16 %v846, %v845
  %v862 = vpack.c.b16 %v848, %v847
  %v863 = vpack.c.b16 %v850, %v849
  %v864 = vpack.c.b16 %v852, %v851
  %877 = vst [vmem:[%s3] sm:$0xff] %v853
  %878 = vst [vmem:[%s3 + $0x8] sm:$0xff] %v854
  %879 = vst [vmem:[%s3 + $0x10] sm:$0xff] %v855
  %880 = vst [vmem:[%s3 + $0x18] sm:$0xff] %v856
  %881 = vst [vmem:[%s3 + $0x20] sm:$0xff] %v857
  %882 = vst [vmem:[%s3 + $0x28] sm:$0xff] %v858
  %883 = vst [vmem:[%s3 + $0x30] sm:$0xff] %v859
  %884 = vst [vmem:[%s3 + $0x38] sm:$0xff] %v860
  %885 = vst [vmem:[%s3 + $0x40] sm:$0xff] %v861
  %886 = vst [vmem:[%s3 + $0x48] sm:$0xff] %v862
  %887 = vst [vmem:[%s3 + $0x50] sm:$0xff] %v863
  %888 = vst [vmem:[%s3 + $0x58] sm:$0xff] %v864
  // Predicated region
  $region14: #{bert_sentence_encoder.13} parent=0 // pred_check
    _
  $region15: #{bert_sentence_encoder.13} parent=0 // pred_check_branch
    %890 = sbr.rel (0) target = $region17
  $region16: #{bert_sentence_encoder.13} parent=0 // pred_region
    _
  $region17: #{bert_sentence_encoder.13} parent=0 // pred_fallthru
    _
  // Predicated region
  $region18: #{bert_sentence_encoder.13} parent=0 // pred_check
    _
  $region19: #{bert_sentence_encoder.13} parent=0 // pred_check_branch
    %892 = sbr.rel (0) target = $region21
  $region20: #{bert_sentence_encoder.13} parent=0 // pred_region
    _
  $region21: #{bert_sentence_encoder.13} parent=0 // pred_fallthru
    _

// kernel: bert_sentence_encoder.23
$region0: #{bert_sentence_encoder.23}
  #allocation0 [shape = 'u32[]', space=smem, size = 0x4, offset = 0x4, fixed_abs, tag = 'smem constant byte address 0x4 - core index']
  #allocation1 [shape = 'u32[144,128]{1,0:T(1,128)}', space=vmem, size = 0x12000, scoped, tag = 'internal scratch']
  #allocation2 [shape = 'f32[2,256]{1,0:T(2,128)}', space=vmem, size = 0x800, scoped, tag = 'scratch operand']
  %s0 = inlined_call_operand.vmem [shape: bf16[2,16,256], index: 0, kind: input, shape index: {}]
  %s1 = inlined_call_operand.hbm [shape: f32[2,256], index: 1, kind: output, shape index: {}]
  %s2 = sld [smem:[#allocation0]]
  $region22: #{bert_sentence_encoder.23} parent=0
    _
  %s4 = ssub.s32 1, %s2
  %s5 = scalar_select 0, %s4, %s2
  $region1: #{bert_sentence_encoder.23} parent=0
    #allocation3 [shape = 'u8[2048]{0}', space=vmem, size = 0x800, scoped, tag = 'output window, operand 0, single buffered']
    #allocation4 [shape = 's32[1]{0}', space=sflag, size = 0x4, scoped, tag = 'scoped memory for bert_sentence_encoder.23']
    %6 = vsyncpa [#allocation4], 0
    // Predicated region
    $region2: #{bert_sentence_encoder.23} parent=1 // pred_check
      _
    $region3: #{bert_sentence_encoder.23} parent=1 // pred_check_branch
      %8 = sbr.rel (0) target = $region5
    $region4: #{bert_sentence_encoder.23} parent=1 // pred_region
      _
    $region5: #{bert_sentence_encoder.23} parent=1 // pred_fallthru
      _
    %p9 = scmp.eq.s32.totalorder 0, 0
    // Predicated region
    $region6: #{bert_sentence_encoder.23} parent=1 // pred_check
      %p10 = pneg %p9
    $region7: #{bert_sentence_encoder.23} parent=1 // pred_check_branch
      %12 = sbr.rel (%p10) target = $region9
    $region8: #{bert_sentence_encoder.23} parent=1 // pred_region
      %13 = vst [vmem:[#allocation2] sm:$0xf] 0.0
    $region9: #{bert_sentence_encoder.23} parent=1 // pred_fallthru
      _
    %v14 = vld [vmem:[#allocation2] sm:$0xf]
    %v15 = vld [vmem:[%s0] sm:$0xff]
    %v16 = vld [vmem:[%s0 + $0x8] sm:$0xff]
    %v17 = vld [vmem:[%s0 + $0x10] sm:$0xff]
    %v18 = vld [vmem:[%s0 + $0x18] sm:$0xff]
    %v19 = vunpack.c.l.bf16 %v15
    %v20 = vunpack.c.h.bf16 %v15
    %v21 = vunpack.c.l.bf16 %v16
    %v22 = vunpack.c.h.bf16 %v16
    %v23 = vunpack.c.l.bf16 %v17
    %v24 = vunpack.c.h.bf16 %v17
    %v25 = vunpack.c.l.bf16 %v18
    %v26 = vunpack.c.h.bf16 %v18
    %v27 = vadd.f32 %v19, %v21
    %v28 = vrot.slane %v27, 4
    %v29 = vadd.f32 %v27, %v28
    %v30 = vrot.slane %v29, 2
    %v31 = vadd.f32 %v29, %v30
    %v32 = vrot.slane %v31, 1
    %v33 = vadd.f32 %v31, %v32
    %v34 = vadd.f32 %v20, %v22
    %v35 = vrot.slane %v34, 4
    %v36 = vadd.f32 %v34, %v35
    %v37 = vrot.slane %v36, 2
    %v38 = vadd.f32 %v36, %v37
    %v39 = vrot.slane %v38, 1
    %v40 = vadd.f32 %v38, %v39
    %v41 = vadd.f32 %v23, %v25
    %v42 = vrot.slane %v41, 4
    %v43 = vadd.f32 %v41, %v42
    %v44 = vrot.slane %v43, 2
    %v45 = vadd.f32 %v43, %v44
    %v46 = vrot.slane %v45, 1
    %v47 = vadd.f32 %v45, %v46
    %v48 = vadd.f32 %v24, %v26
    %v49 = vrot.slane %v48, 4
    %v50 = vadd.f32 %v48, %v49
    %v51 = vrot.slane %v50, 2
    %v52 = vadd.f32 %v50, %v51
    %v53 = vrot.slane %v52, 1
    %v54 = vadd.f32 %v52, %v53
    %v59 = vcombine.low %v33, %v40
    %v61 = vunpack.c.l.s4 1983009808
    %v62 = vunpack.c.0.s8 %v61
    %v63 = vlaneseq
    %v64 = vshrl.u32 %v63, 7
    %v65 = vsub.s32 %v62, %v64
    %v66 = vrot.slane %v59, %v65
    %v67 = vcombine.low %v47, %v54
    %v69 = vunpack.c.l.s4 1983009808
    %v70 = vunpack.c.0.s8 %v69
    %v71 = vlaneseq
    %v72 = vshrl.u32 %v71, 7
    %v73 = vsub.s32 %v70, %v72
    %v74 = vrot.slane %v67, %v73
    %vm75 = vcmask 1044484
    %v76 = vsel %vm75, %v66, %v66
    %vm77 = vcmask 1046534
    %v78 = vsel %vm77, %v66, %v76
    %v79 = vrot.slane %v74, 7
    %vm80 = vcmask 1041409
    %v81 = vsel %vm80, %v79, %v78
    %vm82 = vcmask 1043459
    %v83 = vsel %vm82, %v79, %v81
    %vm84 = vcmask 1045509
    %v85 = vsel %vm84, %v79, %v83
    %vm86 = vcmask 1047559
    %v87 = vsel %vm86, %v79, %v85
    %v89 = vadd.f32 %v14, %v87
    %90 = vst [vmem:[#allocation2] sm:$0xf] %v89
    // Predicated region
    $region10: #{bert_sentence_encoder.23} parent=1 // pred_check
      %p91 = pneg %p9
    $region11: #{bert_sentence_encoder.23} parent=1 // pred_check_branch
      %93 = sbr.rel (%p91) target = $region13
    $region12: #{bert_sentence_encoder.23} parent=1 // pred_region
      %v94 = vld [vmem:[#allocation2] sm:$0xf]
      %v95 = vmul.f32 %v94, 0.0625
      %96 = vst [vmem:[#allocation3] sm:$0xf] %v95
    $region13: #{bert_sentence_encoder.23} parent=1 // pred_fallthru
      _
    // Predicated region
    $region14: #{bert_sentence_encoder.23} parent=1 // pred_check
      _
    $region15: #{bert_sentence_encoder.23} parent=1 // pred_check_branch
      %98 = sbr.rel (0) target = $region17
    $region16: #{bert_sentence_encoder.23} parent=1 // pred_region
      %s100 = ssub.s32 64, 64
      %101 = vsyncadd [#allocation4], %s100
      %s103 = sshll.u32 [#allocation3], 4
      %s104 = int_to_ptr.vmem [resolvable:$true] %s103
      %106 = dma.vmem_to_hbm [thread:$0]  %s104, 64, %s1, [#allocation4]
    $region17: #{bert_sentence_encoder.23} parent=1 // pred_fallthru
      _
    // Predicated region
    $region18: #{bert_sentence_encoder.23} parent=1 // pred_check
      _
    $region19: #{bert_sentence_encoder.23} parent=1 // pred_check_branch
      %108 = sbr.rel (0) target = $region21
    $region20: #{bert_sentence_encoder.23} parent=1 // pred_region
      %109 = dma.done [#allocation4], 64
    $region21: #{bert_sentence_encoder.23} parent=1 // pred_fallthru
      _
    %110 = vsyncpa [#allocation4], 1

// kernel: bert_sentence_encoder.16
$region0: #{bert_sentence_encoder.16}
  #allocation0 [shape = 'u32[]', space=smem, size = 0x4, offset = 0x4, fixed_abs, tag = 'smem constant byte address 0x4 - core index']
  #allocation1 [shape = 'u32[144,128]{1,0:T(1,128)}', space=vmem, size = 0x12000, scoped, tag = 'internal scratch']
  %s0 = inlined_call_operand.vmem [shape: bf16[32,256], index: 0, kind: input, shape index: {}]
  %s1 = inlined_call_operand.vmem [shape: bf16[256,512], index: 1, kind: input, shape index: {}]
  %s2 = inlined_call_operand.vmem [shape: f32[1,512], index: 2, kind: input, shape index: {}]
  %s3 = inlined_call_operand.vmem [shape: bf16[32,512], index: 3, kind: output, shape index: {}]
  %s4 = sld [smem:[#allocation0]]
  $region22: #{bert_sentence_encoder.16} parent=0
    _
  %s6 = ssub.s32 1, %s4
  %s7 = scalar_select 0, %s6, %s4
  // Predicated region
  $region2: #{bert_sentence_encoder.16} parent=0 // pred_check
    _
  $region3: #{bert_sentence_encoder.16} parent=0 // pred_check_branch
    %9 = sbr.rel (0) target = $region5
  $region4: #{bert_sentence_encoder.16} parent=0 // pred_region
    _
  $region5: #{bert_sentence_encoder.16} parent=0 // pred_fallthru
    _
  // Predicated region
  $region6: #{bert_sentence_encoder.16} parent=0 // pred_check
    _
  $region7: #{bert_sentence_encoder.16} parent=0 // pred_check_branch
    %11 = sbr.rel (0) target = $region9
  $region8: #{bert_sentence_encoder.16} parent=0 // pred_region
    _
  $region9: #{bert_sentence_encoder.16} parent=0 // pred_fallthru
    _
  // Predicated region
  $region10: #{bert_sentence_encoder.16} parent=0 // pred_check
    _
  $region11: #{bert_sentence_encoder.16} parent=0 // pred_check_branch
    %13 = sbr.rel (0) target = $region13
  $region12: #{bert_sentence_encoder.16} parent=0 // pred_region
    _
  $region13: #{bert_sentence_encoder.16} parent=0 // pred_fallthru
    _
  %v14 = vld [vmem:[%s0] sm:$0xff]
  %v15 = vld [vmem:[%s0 + $0x8] sm:$0xff]
  %v16 = vld [vmem:[%s0 + $0x10] sm:$0xff]
  %v17 = vld [vmem:[%s0 + $0x18] sm:$0xff]
  %v18 = vld [vmem:[%s1] sm:$0xff]
  %v19 = vld [vmem:[%s1 + $0x8] sm:$0xff]
  %v20 = vld [vmem:[%s1 + $0x10] sm:$0xff]
  %v21 = vld [vmem:[%s1 + $0x18] sm:$0xff]
  %v22 = vld [vmem:[%s1 + $0x20] sm:$0xff]
  %v23 = vld [vmem:[%s1 + $0x28] sm:$0xff]
  %v24 = vld [vmem:[%s1 + $0x30] sm:$0xff]
  %v25 = vld [vmem:[%s1 + $0x38] sm:$0xff]
  %v26 = vld [vmem:[%s1 + $0x40] sm:$0xff]
  %v27 = vld [vmem:[%s1 + $0x48] sm:$0xff]
  %v28 = vld [vmem:[%s1 + $0x50] sm:$0xff]
  %v29 = vld [vmem:[%s1 + $0x58] sm:$0xff]
  %v30 = vld [vmem:[%s1 + $0x60] sm:$0xff]
  %v31 = vld [vmem:[%s1 + $0x68] sm:$0xff]
  %v32 = vld [vmem:[%s1 + $0x70] sm:$0xff]
  %v33 = vld [vmem:[%s1 + $0x78] sm:$0xff]
  %v34 = vld [vmem:[%s1 + $0x80] sm:$0xff]
  %v35 = vld [vmem:[%s1 + $0x88] sm:$0xff]
  %v36 = vld [vmem:[%s1 + $0x90] sm:$0xff]
  %v37 = vld [vmem:[%s1 + $0x98] sm:$0xff]
  %v38 = vld [vmem:[%s1 + $0xa0] sm:$0xff]
  %v39 = vld [vmem:[%s1 + $0xa8] sm:$0xff]
  %v40 = vld [vmem:[%s1 + $0xb0] sm:$0xff]
  %v41 = vld [vmem:[%s1 + $0xb8] sm:$0xff]
  %v42 = vld [vmem:[%s1 + $0xc0] sm:$0xff]
  %v43 = vld [vmem:[%s1 + $0xc8] sm:$0xff]
  %v44 = vld [vmem:[%s1 + $0xd0] sm:$0xff]
  %v45 = vld [vmem:[%s1 + $0xd8] sm:$0xff]
  %v46 = vld [vmem:[%s1 + $0xe0] sm:$0xff]
  %v47 = vld [vmem:[%s1 + $0xe8] sm:$0xff]
  %v48 = vld [vmem:[%s1 + $0xf0] sm:$0xff]
  %v49 = vld [vmem:[%s1 + $0xf8] sm:$0xff]
  %v50 = vld [vmem:[%s1 + $0x100] sm:$0xff]
  %v51 = vld [vmem:[%s1 + $0x108] sm:$0xff]
  %v52 = vld [vmem:[%s1 + $0x110] sm:$0xff]
  %v53 = vld [vmem:[%s1 + $0x118] sm:$0xff]
  %v54 = vld [vmem:[%s1 + $0x120] sm:$0xff]
  %v55 = vld [vmem:[%s1 + $0x128] sm:$0xff]
  %v56 = vld [vmem:[%s1 + $0x130] sm:$0xff]
  %v57 = vld [vmem:[%s1 + $0x138] sm:$0xff]
  %v58 = vld [vmem:[%s1 + $0x140] sm:$0xff]
  %v59 = vld [vmem:[%s1 + $0x148] sm:$0xff]
  %v60 = vld [vmem:[%s1 + $0x150] sm:$0xff]
  %v61 = vld [vmem:[%s1 + $0x158] sm:$0xff]
  %v62 = vld [vmem:[%s1 + $0x160] sm:$0xff]
  %v63 = vld [vmem:[%s1 + $0x168] sm:$0xff]
  %v64 = vld [vmem:[%s1 + $0x170] sm:$0xff]
  %v65 = vld [vmem:[%s1 + $0x178] sm:$0xff]
  %v66 = vld [vmem:[%s1 + $0x180] sm:$0xff]
  %v67 = vld [vmem:[%s1 + $0x188] sm:$0xff]
  %v68 = vld [vmem:[%s1 + $0x190] sm:$0xff]
  %v69 = vld [vmem:[%s1 + $0x198] sm:$0xff]
  %v70 = vld [vmem:[%s1 + $0x1a0] sm:$0xff]
  %v71 = vld [vmem:[%s1 + $0x1a8] sm:$0xff]
  %v72 = vld [vmem:[%s1 + $0x1b0] sm:$0xff]
  %v73 = vld [vmem:[%s1 + $0x1b8] sm:$0xff]
  %v74 = vld [vmem:[%s1 + $0x1c0] sm:$0xff]
  %v75 = vld [vmem:[%s1 + $0x1c8] sm:$0xff]
  %v76 = vld [vmem:[%s1 + $0x1d0] sm:$0xff]
  %v77 = vld [vmem:[%s1 + $0x1d8] sm:$0xff]
  %v78 = vld [vmem:[%s1 + $0x1e0] sm:$0xff]
  %v79 = vld [vmem:[%s1 + $0x1e8] sm:$0xff]
  %v80 = vld [vmem:[%s1 + $0x1f0] sm:$0xff]
  %v81 = vld [vmem:[%s1 + $0x1f8] sm:$0xff]
  %v82 = vld [vmem:[%s2] sm:$0xf]
  %v84 = vlaneseq
  %v85 = vshrl.u32 %v84, 7
  %v86 = vsub.s32 0, %v85
  %v87 = vrot.slane %v82, %v86
  %v88 = vlaneseq
  %v89 = vshrl.u32 %v88, 7
  %v90 = vsub.s32 1, %v89
  %v91 = vrot.slane %v82, %v90
  %v92 = vlaneseq
  %v93 = vshrl.u32 %v92, 7
  %v94 = vsub.s32 2, %v93
  %v95 = vrot.slane %v82, %v94
  %v96 = vlaneseq
  %v97 = vshrl.u32 %v96, 7
  %v98 = vsub.s32 3, %v97
  %v99 = vrot.slane %v82, %v98
  %v108 = vunpack.c.l.b16 %v14
  %v109 = vunpack.c.h.b16 %v14
  %v110 = vunpack.c.l.b16 %v15
  %v111 = vunpack.c.h.b16 %v15
  %v112 = vunpack.c.l.b16 %v16
  %v113 = vunpack.c.h.b16 %v16
  %v114 = vunpack.c.l.b16 %v17
  %v115 = vunpack.c.h.b16 %v17
  %v116 = vpack.c.b16 %v110, %v108
  %v117 = vpack.c.b16 %v111, %v109
  %v118 = vpack.c.b16 %v114, %v112
  %v119 = vpack.c.b16 %v115, %v113
  %v188 = vunpack.c.l.b16 %v18
  %v189 = vunpack.c.h.b16 %v18
  %v190 = vunpack.c.l.b16 %v19
  %v191 = vunpack.c.h.b16 %v19
  %v192 = vunpack.c.l.b16 %v20
  %v193 = vunpack.c.h.b16 %v20
  %v194 = vunpack.c.l.b16 %v21
  %v195 = vunpack.c.h.b16 %v21
  %v196 = vunpack.c.l.b16 %v22
  %v197 = vunpack.c.h.b16 %v22
  %v198 = vunpack.c.l.b16 %v23
  %v199 = vunpack.c.h.b16 %v23
  %v200 = vunpack.c.l.b16 %v24
  %v201 = vunpack.c.h.b16 %v24
  %v202 = vunpack.c.l.b16 %v25
  %v203 = vunpack.c.h.b16 %v25
  %v204 = vunpack.c.l.b16 %v26
  %v205 = vunpack.c.h.b16 %v26
  %v206 = vunpack.c.l.b16 %v27
  %v207 = vunpack.c.h.b16 %v27
  %v208 = vunpack.c.l.b16 %v28
  %v209 = vunpack.c.h.b16 %v28
  %v210 = vunpack.c.l.b16 %v29
  %v211 = vunpack.c.h.b16 %v29
  %v212 = vunpack.c.l.b16 %v30
  %v213 = vunpack.c.h.b16 %v30
  %v214 = vunpack.c.l.b16 %v31
  %v215 = vunpack.c.h.b16 %v31
  %v216 = vunpack.c.l.b16 %v32
  %v217 = vunpack.c.h.b16 %v32
  %v218 = vunpack.c.l.b16 %v33
  %v219 = vunpack.c.h.b16 %v33
  %v220 = vunpack.c.l.b16 %v34
  %v221 = vunpack.c.h.b16 %v34
  %v222 = vunpack.c.l.b16 %v35
  %v223 = vunpack.c.h.b16 %v35
  %v224 = vunpack.c.l.b16 %v36
  %v225 = vunpack.c.h.b16 %v36
  %v226 = vunpack.c.l.b16 %v37
  %v227 = vunpack.c.h.b16 %v37
  %v228 = vunpack.c.l.b16 %v38
  %v229 = vunpack.c.h.b16 %v38
  %v230 = vunpack.c.l.b16 %v39
  %v231 = vunpack.c.h.b16 %v39
  %v232 = vunpack.c.l.b16 %v40
  %v233 = vunpack.c.h.b16 %v40
  %v234 = vunpack.c.l.b16 %v41
  %v235 = vunpack.c.h.b16 %v41
  %v236 = vunpack.c.l.b16 %v42
  %v237 = vunpack.c.h.b16 %v42
  %v238 = vunpack.c.l.b16 %v43
  %v239 = vunpack.c.h.b16 %v43
  %v240 = vunpack.c.l.b16 %v44
  %v241 = vunpack.c.h.b16 %v44
  %v242 = vunpack.c.l.b16 %v45
  %v243 = vunpack.c.h.b16 %v45
  %v244 = vunpack.c.l.b16 %v46
  %v245 = vunpack.c.h.b16 %v46
  %v246 = vunpack.c.l.b16 %v47
  %v247 = vunpack.c.h.b16 %v47
  %v248 = vunpack.c.l.b16 %v48
  %v249 = vunpack.c.h.b16 %v48
  %v250 = vunpack.c.l.b16 %v49
  %v251 = vunpack.c.h.b16 %v49
  %v252 = vunpack.c.l.b16 %v50
  %v253 = vunpack.c.h.b16 %v50
  %v254 = vunpack.c.l.b16 %v51
  %v255 = vunpack.c.h.b16 %v51
  %v256 = vunpack.c.l.b16 %v52
  %v257 = vunpack.c.h.b16 %v52
  %v258 = vunpack.c.l.b16 %v53
  %v259 = vunpack.c.h.b16 %v53
  %v260 = vunpack.c.l.b16 %v54
  %v261 = vunpack.c.h.b16 %v54
  %v262 = vunpack.c.l.b16 %v55
  %v263 = vunpack.c.h.b16 %v55
  %v264 = vunpack.c.l.b16 %v56
  %v265 = vunpack.c.h.b16 %v56
  %v266 = vunpack.c.l.b16 %v57
  %v267 = vunpack.c.h.b16 %v57
  %v268 = vunpack.c.l.b16 %v58
  %v269 = vunpack.c.h.b16 %v58
  %v270 = vunpack.c.l.b16 %v59
  %v271 = vunpack.c.h.b16 %v59
  %v272 = vunpack.c.l.b16 %v60
  %v273 = vunpack.c.h.b16 %v60
  %v274 = vunpack.c.l.b16 %v61
  %v275 = vunpack.c.h.b16 %v61
  %v276 = vunpack.c.l.b16 %v62
  %v277 = vunpack.c.h.b16 %v62
  %v278 = vunpack.c.l.b16 %v63
  %v279 = vunpack.c.h.b16 %v63
  %v280 = vunpack.c.l.b16 %v64
  %v281 = vunpack.c.h.b16 %v64
  %v282 = vunpack.c.l.b16 %v65
  %v283 = vunpack.c.h.b16 %v65
  %v284 = vunpack.c.l.b16 %v66
  %v285 = vunpack.c.h.b16 %v66
  %v286 = vunpack.c.l.b16 %v67
  %v287 = vunpack.c.h.b16 %v67
  %v288 = vunpack.c.l.b16 %v68
  %v289 = vunpack.c.h.b16 %v68
  %v290 = vunpack.c.l.b16 %v69
  %v291 = vunpack.c.h.b16 %v69
  %v292 = vunpack.c.l.b16 %v70
  %v293 = vunpack.c.h.b16 %v70
  %v294 = vunpack.c.l.b16 %v71
  %v295 = vunpack.c.h.b16 %v71
  %v296 = vunpack.c.l.b16 %v72
  %v297 = vunpack.c.h.b16 %v72
  %v298 = vunpack.c.l.b16 %v73
  %v299 = vunpack.c.h.b16 %v73
  %v300 = vunpack.c.l.b16 %v74
  %v301 = vunpack.c.h.b16 %v74
  %v302 = vunpack.c.l.b16 %v75
  %v303 = vunpack.c.h.b16 %v75
  %v304 = vunpack.c.l.b16 %v76
  %v305 = vunpack.c.h.b16 %v76
  %v306 = vunpack.c.l.b16 %v77
  %v307 = vunpack.c.h.b16 %v77
  %v308 = vunpack.c.l.b16 %v78
  %v309 = vunpack.c.h.b16 %v78
  %v310 = vunpack.c.l.b16 %v79
  %v311 = vunpack.c.h.b16 %v79
  %v312 = vunpack.c.l.b16 %v80
  %v313 = vunpack.c.h.b16 %v80
  %v314 = vunpack.c.l.b16 %v81
  %v315 = vunpack.c.h.b16 %v81
  %v316 = vpack.c.b16 %v192, %v188
  %v317 = vpack.c.b16 %v193, %v189
  %v318 = vpack.c.b16 %v194, %v190
  %v319 = vpack.c.b16 %v195, %v191
  %v320 = vpack.c.b16 %v200, %v196
  %v321 = vpack.c.b16 %v201, %v197
  %v322 = vpack.c.b16 %v202, %v198
  %v323 = vpack.c.b16 %v203, %v199
  %v324 = vpack.c.b16 %v208, %v204
  %v325 = vpack.c.b16 %v209, %v205
  %v326 = vpack.c.b16 %v210, %v206
  %v327 = vpack.c.b16 %v211, %v207
  %v328 = vpack.c.b16 %v216, %v212
  %v329 = vpack.c.b16 %v217, %v213
  %v330 = vpack.c.b16 %v218, %v214
  %v331 = vpack.c.b16 %v219, %v215
  %v332 = vpack.c.b16 %v224, %v220
  %v333 = vpack.c.b16 %v225, %v221
  %v334 = vpack.c.b16 %v226, %v222
  %v335 = vpack.c.b16 %v227, %v223
  %v336 = vpack.c.b16 %v232, %v228
  %v337 = vpack.c.b16 %v233, %v229
  %v338 = vpack.c.b16 %v234, %v230
  %v339 = vpack.c.b16 %v235, %v231
  %v340 = vpack.c.b16 %v240, %v236
  %v341 = vpack.c.b16 %v241, %v237
  %v342 = vpack.c.b16 %v242, %v238
  %v343 = vpack.c.b16 %v243, %v239
  %v344 = vpack.c.b16 %v248, %v244
  %v345 = vpack.c.b16 %v249, %v245
  %v346 = vpack.c.b16 %v250, %v246
  %v347 = vpack.c.b16 %v251, %v247
  %v348 = vpack.c.b16 %v256, %v252
  %v349 = vpack.c.b16 %v257, %v253
  %v350 = vpack.c.b16 %v258, %v254
  %v351 = vpack.c.b16 %v259, %v255
  %v352 = vpack.c.b16 %v264, %v260
  %v353 = vpack.c.b16 %v265, %v261
  %v354 = vpack.c.b16 %v266, %v262
  %v355 = vpack.c.b16 %v267, %v263
  %v356 = vpack.c.b16 %v272, %v268
  %v357 = vpack.c.b16 %v273, %v269
  %v358 = vpack.c.b16 %v274, %v270
  %v359 = vpack.c.b16 %v275, %v271
  %v360 = vpack.c.b16 %v280, %v276
  %v361 = vpack.c.b16 %v281, %v277
  %v362 = vpack.c.b16 %v282, %v278
  %v363 = vpack.c.b16 %v283, %v279
  %v364 = vpack.c.b16 %v288, %v284
  %v365 = vpack.c.b16 %v289, %v285
  %v366 = vpack.c.b16 %v290, %v286
  %v367 = vpack.c.b16 %v291, %v287
  %v368 = vpack.c.b16 %v296, %v292
  %v369 = vpack.c.b16 %v297, %v293
  %v370 = vpack.c.b16 %v298, %v294
  %v371 = vpack.c.b16 %v299, %v295
  %v372 = vpack.c.b16 %v304, %v300
  %v373 = vpack.c.b16 %v305, %v301
  %v374 = vpack.c.b16 %v306, %v302
  %v375 = vpack.c.b16 %v307, %v303
  %v376 = vpack.c.b16 %v312, %v308
  %v377 = vpack.c.b16 %v313, %v309
  %v378 = vpack.c.b16 %v314, %v310
  %v379 = vpack.c.b16 %v315, %v311
  %444 = vmatprep.subr.bf16.mxu0 %v317
  %445 = vmatpush1.bf16.msra.mxu0 %v316
  %446 = vmatprep.subr.bf16.mxu0 %v321
  %447 = vmatpush1.bf16.msra.mxu0 %v320
  %448 = vmatprep.subr.bf16.mxu0 %v325
  %449 = vmatpush1.bf16.msra.mxu0 %v324
  %450 = vmatprep.subr.bf16.mxu0 %v329
  %451 = vmatpush1.bf16.msra.mxu0 %v328
  %452 = vmatprep.subr.bf16.mxu0 %v333
  %453 = vmatpush1.bf16.msra.mxu0 %v332
  %454 = vmatprep.subr.bf16.mxu0 %v337
  %455 = vmatpush1.bf16.msra.mxu0 %v336
  %456 = vmatprep.subr.bf16.mxu0 %v341
  %457 = vmatpush1.bf16.msra.mxu0 %v340
  %458 = vmatprep.subr.bf16.mxu0 %v345
  %459 = vmatpush1.bf16.msra.mxu0 %v344
  %460 = vmatprep.subr.bf16.mxu0 %v349
  %461 = vmatpush1.bf16.msra.mxu0 %v348
  %462 = vmatprep.subr.bf16.mxu0 %v353
  %463 = vmatpush1.bf16.msra.mxu0 %v352
  %464 = vmatprep.subr.bf16.mxu0 %v357
  %465 = vmatpush1.bf16.msra.mxu0 %v356
  %466 = vmatprep.subr.bf16.mxu0 %v361
  %467 = vmatpush1.bf16.msra.mxu0 %v360
  %468 = vmatprep.subr.bf16.mxu0 %v365
  %469 = vmatpush1.bf16.msra.mxu0 %v364
  %470 = vmatprep.subr.bf16.mxu0 %v369
  %471 = vmatpush1.bf16.msra.mxu0 %v368
  %472 = vmatprep.subr.bf16.mxu0 %v373
  %473 = vmatpush1.bf16.msra.mxu0 %v372
  %474 = vmatprep.subr.bf16.mxu0 %v377
  %475 = vmatpush1.bf16.msra.mxu0 %v376
  %476 = vmatprep.mubr.bf16.mxu0 %v117
  %477 = vmatmul.mubr.bf16.gmra.mrb[0].mxu0 %v116
  %v478 = vpop.f32.mrb[0].mxu0
  %v479 = vadd.f32 %v87, %v478
  %v480 = vpop.f32.mrb[0].mxu0
  %v481 = vadd.f32 %v91, %v480
  %v482 = vpop.f32.mrb[0].mxu0
  %v483 = vadd.f32 %v87, %v482
  %v484 = vpop.f32.mrb[0].mxu0
  %v485 = vadd.f32 %v91, %v484
  %486 = vmatprep.mubr.bf16.mxu0 %v119
  %487 = vmatmul.mubr.bf16.gmra.mrb[0].mxu0 %v118
  %v488 = vpop.f32.mrb[0].mxu0
  %v489 = vadd.f32 %v87, %v488
  %v490 = vpop.f32.mrb[0].mxu0
  %v491 = vadd.f32 %v91, %v490
  %v492 = vpop.f32.mrb[0].mxu0
  %v493 = vadd.f32 %v87, %v492
  %v494 = vpop.f32.mrb[0].mxu0
  %v495 = vadd.f32 %v91, %v494
  %496 = vdwg.mxu0
  %497 = vmatprep.subr.bf16.mxu0 %v319
  %498 = vmatpush1.bf16.msra.mxu0 %v318
  %499 = vmatprep.subr.bf16.mxu0 %v323
  %500 = vmatpush1.bf16.msra.mxu0 %v322
  %501 = vmatprep.subr.bf16.mxu0 %v327
  %502 = vmatpush1.bf16.msra.mxu0 %v326
  %503 = vmatprep.subr.bf16.mxu0 %v331
  %504 = vmatpush1.bf16.msra.mxu0 %v330
  %505 = vmatprep.subr.bf16.mxu0 %v335
  %506 = vmatpush1.bf16.msra.mxu0 %v334
  %507 = vmatprep.subr.bf16.mxu0 %v339
  %508 = vmatpush1.bf16.msra.mxu0 %v338
  %509 = vmatprep.subr.bf16.mxu0 %v343
  %510 = vmatpush1.bf16.msra.mxu0 %v342
  %511 = vmatprep.subr.bf16.mxu0 %v347
  %512 = vmatpush1.bf16.msra.mxu0 %v346
  %513 = vmatprep.subr.bf16.mxu0 %v351
  %514 = vmatpush1.bf16.msra.mxu0 %v350
  %515 = vmatprep.subr.bf16.mxu0 %v355
  %516 = vmatpush1.bf16.msra.mxu0 %v354
  %517 = vmatprep.subr.bf16.mxu0 %v359
  %518 = vmatpush1.bf16.msra.mxu0 %v358
  %519 = vmatprep.subr.bf16.mxu0 %v363
  %520 = vmatpush1.bf16.msra.mxu0 %v362
  %521 = vmatprep.subr.bf16.mxu0 %v367
  %522 = vmatpush1.bf16.msra.mxu0 %v366
  %523 = vmatprep.subr.bf16.mxu0 %v371
  %524 = vmatpush1.bf16.msra.mxu0 %v370
  %525 = vmatprep.subr.bf16.mxu0 %v375
  %526 = vmatpush1.bf16.msra.mxu0 %v374
  %527 = vmatprep.subr.bf16.mxu0 %v379
  %528 = vmatpush1.bf16.msra.mxu0 %v378
  %529 = vmatprep.mubr.bf16.mxu0 %v117
  %530 = vmatmul.mubr.bf16.gmra.mrb[0].mxu0 %v116
  %v531 = vpop.f32.mrb[0].mxu0
  %v532 = vadd.f32 %v95, %v531
  %v533 = vpop.f32.mrb[0].mxu0
  %v534 = vadd.f32 %v99, %v533
  %v535 = vpop.f32.mrb[0].mxu0
  %v536 = vadd.f32 %v95, %v535
  %v537 = vpop.f32.mrb[0].mxu0
  %v538 = vadd.f32 %v99, %v537
  %539 = vmatprep.mubr.bf16.mxu0 %v119
  %540 = vmatmul.mubr.bf16.gmra.mrb[0].mxu0 %v118
  %v541 = vpop.f32.mrb[0].mxu0
  %v542 = vadd.f32 %v95, %v541
  %v543 = vpop.f32.mrb[0].mxu0
  %v544 = vadd.f32 %v99, %v543
  %v545 = vpop.f32.mrb[0].mxu0
  %v546 = vadd.f32 %v95, %v545
  %v547 = vpop.f32.mrb[0].mxu0
  %v548 = vadd.f32 %v99, %v547
  %549 = vdwg.mxu0
  %v550 = vmul.f32 %v479, %v479
  %v551 = vmul.f32 %v481, %v481
  %v552 = vmul.f32 %v532, %v532
  %v553 = vmul.f32 %v534, %v534
  %v554 = vmul.f32 %v483, %v483
  %v555 = vmul.f32 %v485, %v485
  %v556 = vmul.f32 %v536, %v536
  %v557 = vmul.f32 %v538, %v538
  %v558 = vmul.f32 %v489, %v489
  %v559 = vmul.f32 %v491, %v491
  %v560 = vmul.f32 %v542, %v542
  %v561 = vmul.f32 %v544, %v544
  %v562 = vmul.f32 %v493, %v493
  %v563 = vmul.f32 %v495, %v495
  %v564 = vmul.f32 %v546, %v546
  %v565 = vmul.f32 %v548, %v548
  %v566 = vmul.f32 %v479, %v550
  %v567 = vmul.f32 %v481, %v551
  %v568 = vmul.f32 %v532, %v552
  %v569 = vmul.f32 %v534, %v553
  %v570 = vmul.f32 %v483, %v554
  %v571 = vmul.f32 %v485, %v555
  %v572 = vmul.f32 %v536, %v556
  %v573 = vmul.f32 %v538, %v557
  %v574 = vmul.f32 %v489, %v558
  %v575 = vmul.f32 %v491, %v559
  %v576 = vmul.f32 %v542, %v560
  %v577 = vmul.f32 %v544, %v561
  %v578 = vmul.f32 %v493, %v562
  %v579 = vmul.f32 %v495, %v563
  %v580 = vmul.f32 %v546, %v564
  %v581 = vmul.f32 %v548, %v565
  %v582 = vmul.f32 %v566, 0.044715
  %v583 = vmul.f32 %v567, 0.044715
  %v584 = vmul.f32 %v568, 0.044715
  %v585 = vmul.f32 %v569, 0.044715
  %v586 = vmul.f32 %v570, 0.044715
  %v587 = vmul.f32 %v571, 0.044715
  %v588 = vmul.f32 %v572, 0.044715
  %v589 = vmul.f32 %v573, 0.044715
  %v590 = vmul.f32 %v574, 0.044715
  %v591 = vmul.f32 %v575, 0.044715
  %v592 = vmul.f32 %v576, 0.044715
  %v593 = vmul.f32 %v577, 0.044715
  %v594 = vmul.f32 %v578, 0.044715
  %v595 = vmul.f32 %v579, 0.044715
  %v596 = vmul.f32 %v580, 0.044715
  %v597 = vmul.f32 %v581, 0.044715
  %v598 = vadd.f32 %v479, %v582
  %v599 = vadd.f32 %v481, %v583
  %v600 = vadd.f32 %v532, %v584
  %v601 = vadd.f32 %v534, %v585
  %v602 = vadd.f32 %v483, %v586
  %v603 = vadd.f32 %v485, %v587
  %v604 = vadd.f32 %v536, %v588
  %v605 = vadd.f32 %v538, %v589
  %v606 = vadd.f32 %v489, %v590
  %v607 = vadd.f32 %v491, %v591
  %v608 = vadd.f32 %v542, %v592
  %v609 = vadd.f32 %v544, %v593
  %v610 = vadd.f32 %v493, %v594
  %v611 = vadd.f32 %v495, %v595
  %v612 = vadd.f32 %v546, %v596
  %v613 = vadd.f32 %v548, %v597
  %v614 = vmul.f32 %v598, 0.7978846
  %v615 = vmul.f32 %v599, 0.7978846
  %v616 = vmul.f32 %v600, 0.7978846
  %v617 = vmul.f32 %v601, 0.7978846
  %v618 = vmul.f32 %v602, 0.7978846
  %v619 = vmul.f32 %v603, 0.7978846
  %v620 = vmul.f32 %v604, 0.7978846
  %v621 = vmul.f32 %v605, 0.7978846
  %v622 = vmul.f32 %v606, 0.7978846
  %v623 = vmul.f32 %v607, 0.7978846
  %v624 = vmul.f32 %v608, 0.7978846
  %v625 = vmul.f32 %v609, 0.7978846
  %v626 = vmul.f32 %v610, 0.7978846
  %v627 = vmul.f32 %v611, 0.7978846
  %v628 = vmul.f32 %v612, 0.7978846
  %v629 = vmul.f32 %v613, 0.7978846
  %v630 = vtanh.pop %v614
  %v631 = vtanh.pop %v615
  %v632 = vtanh.pop %v616
  %v633 = vtanh.pop %v617
  %v634 = vtanh.pop %v618
  %v635 = vtanh.pop %v619
  %v636 = vtanh.pop %v620
  %v637 = vtanh.pop %v621
  %v638 = vtanh.pop %v622
  %v639 = vtanh.pop %v623
  %v640 = vtanh.pop %v624
  %v641 = vtanh.pop %v625
  %v642 = vtanh.pop %v626
  %v643 = vtanh.pop %v627
  %v644 = vtanh.pop %v628
  %v645 = vtanh.pop %v629
  %v646 = vadd.f32 %v630, 1.0
  %v647 = vadd.f32 %v631, 1.0
  %v648 = vadd.f32 %v632, 1.0
  %v649 = vadd.f32 %v633, 1.0
  %v650 = vadd.f32 %v634, 1.0
  %v651 = vadd.f32 %v635, 1.0
  %v652 = vadd.f32 %v636, 1.0
  %v653 = vadd.f32 %v637, 1.0
  %v654 = vadd.f32 %v638, 1.0
  %v655 = vadd.f32 %v639, 1.0
  %v656 = vadd.f32 %v640, 1.0
  %v657 = vadd.f32 %v641, 1.0
  %v658 = vadd.f32 %v642, 1.0
  %v659 = vadd.f32 %v643, 1.0
  %v660 = vadd.f32 %v644, 1.0
  %v661 = vadd.f32 %v645, 1.0
  %v662 = vmul.f32 %v646, 0.5
  %v663 = vmul.f32 %v647, 0.5
  %v664 = vmul.f32 %v648, 0.5
  %v665 = vmul.f32 %v649, 0.5
  %v666 = vmul.f32 %v650, 0.5
  %v667 = vmul.f32 %v651, 0.5
  %v668 = vmul.f32 %v652, 0.5
  %v669 = vmul.f32 %v653, 0.5
  %v670 = vmul.f32 %v654, 0.5
  %v671 = vmul.f32 %v655, 0.5
  %v672 = vmul.f32 %v656, 0.5
  %v673 = vmul.f32 %v657, 0.5
  %v674 = vmul.f32 %v658, 0.5
  %v675 = vmul.f32 %v659, 0.5
  %v676 = vmul.f32 %v660, 0.5
  %v677 = vmul.f32 %v661, 0.5
  %v678 = vmul.f32 %v479, %v662
  %v679 = vmul.f32 %v481, %v663
  %v680 = vmul.f32 %v532, %v664
  %v681 = vmul.f32 %v534, %v665
  %v682 = vmul.f32 %v483, %v666
  %v683 = vmul.f32 %v485, %v667
  %v684 = vmul.f32 %v536, %v668
  %v685 = vmul.f32 %v538, %v669
  %v686 = vmul.f32 %v489, %v670
  %v687 = vmul.f32 %v491, %v671
  %v688 = vmul.f32 %v542, %v672
  %v689 = vmul.f32 %v544, %v673
  %v690 = vmul.f32 %v493, %v674
  %v691 = vmul.f32 %v495, %v675
  %v692 = vmul.f32 %v546, %v676
  %v693 = vmul.f32 %v548, %v677
  %v694 = vpack.c.bf16 %v682, %v678
  %v695 = vpack.c.bf16 %v683, %v679
  %v696 = vpack.c.bf16 %v684, %v680
  %v697 = vpack.c.bf16 %v685, %v681
  %v698 = vpack.c.bf16 %v690, %v686
  %v699 = vpack.c.bf16 %v691, %v687
  %v700 = vpack.c.bf16 %v692, %v688
  %v701 = vpack.c.bf16 %v693, %v689
  %v710 = vunpack.c.l.b16 %v694
  %v711 = vunpack.c.l.b16 %v695
  %v712 = vunpack.c.l.b16 %v696
  %v713 = vunpack.c.l.b16 %v697
  %v714 = vunpack.c.h.b16 %v694
  %v715 = vunpack.c.h.b16 %v695
  %v716 = vunpack.c.h.b16 %v696
  %v717 = vunpack.c.h.b16 %v697
  %v718 = vunpack.c.l.b16 %v698
  %v719 = vunpack.c.l.b16 %v699
  %v720 = vunpack.c.l.b16 %v700
  %v721 = vunpack.c.l.b16 %v701
  %v722 = vunpack.c.h.b16 %v698
  %v723 = vunpack.c.h.b16 %v699
  %v724 = vunpack.c.h.b16 %v700
  %v725 = vunpack.c.h.b16 %v701
  %v726 = vpack.c.b16 %v711, %v710
  %v727 = vpack.c.b16 %v713, %v712
  %v728 = vpack.c.b16 %v715, %v714
  %v729 = vpack.c.b16 %v717, %v716
  %v730 = vpack.c.b16 %v719, %v718
  %v731 = vpack.c.b16 %v721, %v720
  %v732 = vpack.c.b16 %v723, %v722
  %v733 = vpack.c.b16 %v725, %v724
  %742 = vst [vmem:[%s3] sm:$0xff] %v726
  %743 = vst [vmem:[%s3 + $0x8] sm:$0xff] %v727
  %744 = vst [vmem:[%s3 + $0x10] sm:$0xff] %v728
  %745 = vst [vmem:[%s3 + $0x18] sm:$0xff] %v729
  %746 = vst [vmem:[%s3 + $0x20] sm:$0xff] %v730
  %747 = vst [vmem:[%s3 + $0x28] sm:$0xff] %v731
  %748 = vst [vmem:[%s3 + $0x30] sm:$0xff] %v732
  %749 = vst [vmem:[%s3 + $0x38] sm:$0xff] %v733
  // Predicated region
  $region14: #{bert_sentence_encoder.16} parent=0 // pred_check
    _
  $region15: #{bert_sentence_encoder.16} parent=0 // pred_check_branch
    %751 = sbr.rel (0) target = $region17
  $region16: #{bert_sentence_encoder.16} parent=0 // pred_region
    _
  $region17: #{bert_sentence_encoder.16} parent=0 // pred_fallthru
    _
  // Predicated region
  $region18: #{bert_sentence_encoder.16} parent=0 // pred_check
    _
  $region19: #{bert_sentence_encoder.16} parent=0 // pred_check_branch
    %753 = sbr.rel (0) target = $region21
  $region20: #{bert_sentence_encoder.16} parent=0 // pred_region
    _
  $region21: #{bert_sentence_encoder.16} parent=0 // pred_fallthru
    _

// kernel: bert_sentence_encoder.17
$region0: #{bert_sentence_encoder.17}
  #allocation0 [shape = 'u32[]', space=smem, size = 0x4, offset = 0x4, fixed_abs, tag = 'smem constant byte address 0x4 - core index']
  #allocation1 [shape = 'u32[144,128]{1,0:T(1,128)}', space=vmem, size = 0x12000, scoped, tag = 'internal scratch']
  %s0 = inlined_call_operand.vmem [shape: bf16[32,512], index: 0, kind: input, shape index: {}]
  %s1 = inlined_call_operand.vmem [shape: bf16[512,256], index: 1, kind: input, shape index: {}]
  %s2 = inlined_call_operand.vmem [shape: f32[1,256], index: 2, kind: input, shape index: {}]
  %s3 = inlined_call_operand.vmem [shape: bf16[32,256], index: 3, kind: input, shape index: {}]
  %s4 = inlined_call_operand.vmem [shape: f32[1,256], index: 4, kind: input, shape index: {}]
  %s5 = inlined_call_operand.vmem [shape: f32[1,256], index: 5, kind: input, shape index: {}]
  %s6 = inlined_call_operand.vmem [shape: bf16[32,256], index: 6, kind: output, shape index: {}]
  %s7 = sld [smem:[#allocation0]]
  $region34: #{bert_sentence_encoder.17} parent=0
    _
  %s9 = ssub.s32 1, %s7
  %s10 = scalar_select 0, %s9, %s7
  // Predicated region
  $region2: #{bert_sentence_encoder.17} parent=0 // pred_check
    _
  $region3: #{bert_sentence_encoder.17} parent=0 // pred_check_branch
    %12 = sbr.rel (0) target = $region5
  $region4: #{bert_sentence_encoder.17} parent=0 // pred_region
    _
  $region5: #{bert_sentence_encoder.17} parent=0 // pred_fallthru
    _
  // Predicated region
  $region6: #{bert_sentence_encoder.17} parent=0 // pred_check
    _
  $region7: #{bert_sentence_encoder.17} parent=0 // pred_check_branch
    %14 = sbr.rel (0) target = $region9
  $region8: #{bert_sentence_encoder.17} parent=0 // pred_region
    _
  $region9: #{bert_sentence_encoder.17} parent=0 // pred_fallthru
    _
  // Predicated region
  $region10: #{bert_sentence_encoder.17} parent=0 // pred_check
    _
  $region11: #{bert_sentence_encoder.17} parent=0 // pred_check_branch
    %16 = sbr.rel (0) target = $region13
  $region12: #{bert_sentence_encoder.17} parent=0 // pred_region
    _
  $region13: #{bert_sentence_encoder.17} parent=0 // pred_fallthru
    _
  // Predicated region
  $region14: #{bert_sentence_encoder.17} parent=0 // pred_check
    _
  $region15: #{bert_sentence_encoder.17} parent=0 // pred_check_branch
    %18 = sbr.rel (0) target = $region17
  $region16: #{bert_sentence_encoder.17} parent=0 // pred_region
    _
  $region17: #{bert_sentence_encoder.17} parent=0 // pred_fallthru
    _
  // Predicated region
  $region18: #{bert_sentence_encoder.17} parent=0 // pred_check
    _
  $region19: #{bert_sentence_encoder.17} parent=0 // pred_check_branch
    %20 = sbr.rel (0) target = $region21
  $region20: #{bert_sentence_encoder.17} parent=0 // pred_region
    _
  $region21: #{bert_sentence_encoder.17} parent=0 // pred_fallthru
    _
  // Predicated region
  $region22: #{bert_sentence_encoder.17} parent=0 // pred_check
    _
  $region23: #{bert_sentence_encoder.17} parent=0 // pred_check_branch
    %22 = sbr.rel (0) target = $region25
  $region24: #{bert_sentence_encoder.17} parent=0 // pred_region
    _
  $region25: #{bert_sentence_encoder.17} parent=0 // pred_fallthru
    _
  %v23 = vld [vmem:[%s0] sm:$0xff]
  %v24 = vld [vmem:[%s0 + $0x8] sm:$0xff]
  %v25 = vld [vmem:[%s0 + $0x10] sm:$0xff]
  %v26 = vld [vmem:[%s0 + $0x18] sm:$0xff]
  %v27 = vld [vmem:[%s0 + $0x20] sm:$0xff]
  %v28 = vld [vmem:[%s0 + $0x28] sm:$0xff]
  %v29 = vld [vmem:[%s0 + $0x30] sm:$0xff]
  %v30 = vld [vmem:[%s0 + $0x38] sm:$0xff]
  %v31 = vld [vmem:[%s1] sm:$0xff]
  %v32 = vld [vmem:[%s1 + $0x8] sm:$0xff]
  %v33 = vld [vmem:[%s1 + $0x10] sm:$0xff]
  %v34 = vld [vmem:[%s1 + $0x18] sm:$0xff]
  %v35 = vld [vmem:[%s1 + $0x20] sm:$0xff]
  %v36 = vld [vmem:[%s1 + $0x28] sm:$0xff]
  %v37 = vld [vmem:[%s1 + $0x30] sm:$0xff]
  %v38 = vld [vmem:[%s1 + $0x38] sm:$0xff]
  %v39 = vld [vmem:[%s1 + $0x40] sm:$0xff]
  %v40 = vld [vmem:[%s1 + $0x48] sm:$0xff]
  %v41 = vld [vmem:[%s1 + $0x50] sm:$0xff]
  %v42 = vld [vmem:[%s1 + $0x58] sm:$0xff]
  %v43 = vld [vmem:[%s1 + $0x60] sm:$0xff]
  %v44 = vld [vmem:[%s1 + $0x68] sm:$0xff]
  %v45 = vld [vmem:[%s1 + $0x70] sm:$0xff]
  %v46 = vld [vmem:[%s1 + $0x78] sm:$0xff]
  %v47 = vld [vmem:[%s1 + $0x80] sm:$0xff]
  %v48 = vld [vmem:[%s1 + $0x88] sm:$0xff]
  %v49 = vld [vmem:[%s1 + $0x90] sm:$0xff]
  %v50 = vld [vmem:[%s1 + $0x98] sm:$0xff]
  %v51 = vld [vmem:[%s1 + $0xa0] sm:$0xff]
  %v52 = vld [vmem:[%s1 + $0xa8] sm:$0xff]
  %v53 = vld [vmem:[%s1 + $0xb0] sm:$0xff]
  %v54 = vld [vmem:[%s1 + $0xb8] sm:$0xff]
  %v55 = vld [vmem:[%s1 + $0xc0] sm:$0xff]
  %v56 = vld [vmem:[%s1 + $0xc8] sm:$0xff]
  %v57 = vld [vmem:[%s1 + $0xd0] sm:$0xff]
  %v58 = vld [vmem:[%s1 + $0xd8] sm:$0xff]
  %v59 = vld [vmem:[%s1 + $0xe0] sm:$0xff]
  %v60 = vld [vmem:[%s1 + $0xe8] sm:$0xff]
  %v61 = vld [vmem:[%s1 + $0xf0] sm:$0xff]
  %v62 = vld [vmem:[%s1 + $0xf8] sm:$0xff]
  %v63 = vld [vmem:[%s1 + $0x100] sm:$0xff]
  %v64 = vld [vmem:[%s1 + $0x108] sm:$0xff]
  %v65 = vld [vmem:[%s1 + $0x110] sm:$0xff]
  %v66 = vld [vmem:[%s1 + $0x118] sm:$0xff]
  %v67 = vld [vmem:[%s1 + $0x120] sm:$0xff]
  %v68 = vld [vmem:[%s1 + $0x128] sm:$0xff]
  %v69 = vld [vmem:[%s1 + $0x130] sm:$0xff]
  %v70 = vld [vmem:[%s1 + $0x138] sm:$0xff]
  %v71 = vld [vmem:[%s1 + $0x140] sm:$0xff]
  %v72 = vld [vmem:[%s1 + $0x148] sm:$0xff]
  %v73 = vld [vmem:[%s1 + $0x150] sm:$0xff]
  %v74 = vld [vmem:[%s1 + $0x158] sm:$0xff]
  %v75 = vld [vmem:[%s1 + $0x160] sm:$0xff]
  %v76 = vld [vmem:[%s1 + $0x168] sm:$0xff]
  %v77 = vld [vmem:[%s1 + $0x170] sm:$0xff]
  %v78 = vld [vmem:[%s1 + $0x178] sm:$0xff]
  %v79 = vld [vmem:[%s1 + $0x180] sm:$0xff]
  %v80 = vld [vmem:[%s1 + $0x188] sm:$0xff]
  %v81 = vld [vmem:[%s1 + $0x190] sm:$0xff]
  %v82 = vld [vmem:[%s1 + $0x198] sm:$0xff]
  %v83 = vld [vmem:[%s1 + $0x1a0] sm:$0xff]
  %v84 = vld [vmem:[%s1 + $0x1a8] sm:$0xff]
  %v85 = vld [vmem:[%s1 + $0x1b0] sm:$0xff]
  %v86 = vld [vmem:[%s1 + $0x1b8] sm:$0xff]
  %v87 = vld [vmem:[%s1 + $0x1c0] sm:$0xff]
  %v88 = vld [vmem:[%s1 + $0x1c8] sm:$0xff]
  %v89 = vld [vmem:[%s1 + $0x1d0] sm:$0xff]
  %v90 = vld [vmem:[%s1 + $0x1d8] sm:$0xff]
  %v91 = vld [vmem:[%s1 + $0x1e0] sm:$0xff]
  %v92 = vld [vmem:[%s1 + $0x1e8] sm:$0xff]
  %v93 = vld [vmem:[%s1 + $0x1f0] sm:$0xff]
  %v94 = vld [vmem:[%s1 + $0x1f8] sm:$0xff]
  %v95 = vld [vmem:[%s2] sm:$0x3]
  %v97 = vlaneseq
  %v98 = vshrl.u32 %v97, 7
  %v99 = vsub.s32 0, %v98
  %v100 = vrot.slane %v95, %v99
  %v101 = vlaneseq
  %v102 = vshrl.u32 %v101, 7
  %v103 = vsub.s32 1, %v102
  %v104 = vrot.slane %v95, %v103
  %v115 = vunpack.c.l.b16 %v23
  %v116 = vunpack.c.h.b16 %v23
  %v117 = vunpack.c.l.b16 %v24
  %v118 = vunpack.c.h.b16 %v24
  %v119 = vunpack.c.l.b16 %v25
  %v120 = vunpack.c.h.b16 %v25
  %v121 = vunpack.c.l.b16 %v26
  %v122 = vunpack.c.h.b16 %v26
  %v123 = vunpack.c.l.b16 %v27
  %v124 = vunpack.c.h.b16 %v27
  %v125 = vunpack.c.l.b16 %v28
  %v126 = vunpack.c.h.b16 %v28
  %v127 = vunpack.c.l.b16 %v29
  %v128 = vunpack.c.h.b16 %v29
  %v129 = vunpack.c.l.b16 %v30
  %v130 = vunpack.c.h.b16 %v30
  %v131 = vpack.c.b16 %v119, %v115
  %v132 = vpack.c.b16 %v120, %v116
  %v133 = vpack.c.b16 %v121, %v117
  %v134 = vpack.c.b16 %v122, %v118
  %v135 = vpack.c.b16 %v127, %v123
  %v136 = vpack.c.b16 %v128, %v124
  %v137 = vpack.c.b16 %v129, %v125
  %v138 = vpack.c.b16 %v130, %v126
  %v211 = vunpack.c.l.b16 %v31
  %v212 = vunpack.c.h.b16 %v31
  %v213 = vunpack.c.l.b16 %v32
  %v214 = vunpack.c.h.b16 %v32
  %v215 = vunpack.c.l.b16 %v33
  %v216 = vunpack.c.h.b16 %v33
  %v217 = vunpack.c.l.b16 %v34
  %v218 = vunpack.c.h.b16 %v34
  %v219 = vunpack.c.l.b16 %v35
  %v220 = vunpack.c.h.b16 %v35
  %v221 = vunpack.c.l.b16 %v36
  %v222 = vunpack.c.h.b16 %v36
  %v223 = vunpack.c.l.b16 %v37
  %v224 = vunpack.c.h.b16 %v37
  %v225 = vunpack.c.l.b16 %v38
  %v226 = vunpack.c.h.b16 %v38
  %v227 = vunpack.c.l.b16 %v39
  %v228 = vunpack.c.h.b16 %v39
  %v229 = vunpack.c.l.b16 %v40
  %v230 = vunpack.c.h.b16 %v40
  %v231 = vunpack.c.l.b16 %v41
  %v232 = vunpack.c.h.b16 %v41
  %v233 = vunpack.c.l.b16 %v42
  %v234 = vunpack.c.h.b16 %v42
  %v235 = vunpack.c.l.b16 %v43
  %v236 = vunpack.c.h.b16 %v43
  %v237 = vunpack.c.l.b16 %v44
  %v238 = vunpack.c.h.b16 %v44
  %v239 = vunpack.c.l.b16 %v45
  %v240 = vunpack.c.h.b16 %v45
  %v241 = vunpack.c.l.b16 %v46
  %v242 = vunpack.c.h.b16 %v46
  %v243 = vunpack.c.l.b16 %v47
  %v244 = vunpack.c.h.b16 %v47
  %v245 = vunpack.c.l.b16 %v48
  %v246 = vunpack.c.h.b16 %v48
  %v247 = vunpack.c.l.b16 %v49
  %v248 = vunpack.c.h.b16 %v49
  %v249 = vunpack.c.l.b16 %v50
  %v250 = vunpack.c.h.b16 %v50
  %v251 = vunpack.c.l.b16 %v51
  %v252 = vunpack.c.h.b16 %v51
  %v253 = vunpack.c.l.b16 %v52
  %v254 = vunpack.c.h.b16 %v52
  %v255 = vunpack.c.l.b16 %v53
  %v256 = vunpack.c.h.b16 %v53
  %v257 = vunpack.c.l.b16 %v54
  %v258 = vunpack.c.h.b16 %v54
  %v259 = vunpack.c.l.b16 %v55
  %v260 = vunpack.c.h.b16 %v55
  %v261 = vunpack.c.l.b16 %v56
  %v262 = vunpack.c.h.b16 %v56
  %v263 = vunpack.c.l.b16 %v57
  %v264 = vunpack.c.h.b16 %v57
  %v265 = vunpack.c.l.b16 %v58
  %v266 = vunpack.c.h.b16 %v58
  %v267 = vunpack.c.l.b16 %v59
  %v268 = vunpack.c.h.b16 %v59
  %v269 = vunpack.c.l.b16 %v60
  %v270 = vunpack.c.h.b16 %v60
  %v271 = vunpack.c.l.b16 %v61
  %v272 = vunpack.c.h.b16 %v61
  %v273 = vunpack.c.l.b16 %v62
  %v274 = vunpack.c.h.b16 %v62
  %v275 = vunpack.c.l.b16 %v63
  %v276 = vunpack.c.h.b16 %v63
  %v277 = vunpack.c.l.b16 %v64
  %v278 = vunpack.c.h.b16 %v64
  %v279 = vunpack.c.l.b16 %v65
  %v280 = vunpack.c.h.b16 %v65
  %v281 = vunpack.c.l.b16 %v66
  %v282 = vunpack.c.h.b16 %v66
  %v283 = vunpack.c.l.b16 %v67
  %v284 = vunpack.c.h.b16 %v67
  %v285 = vunpack.c.l.b16 %v68
  %v286 = vunpack.c.h.b16 %v68
  %v287 = vunpack.c.l.b16 %v69
  %v288 = vunpack.c.h.b16 %v69
  %v289 = vunpack.c.l.b16 %v70
  %v290 = vunpack.c.h.b16 %v70
  %v291 = vunpack.c.l.b16 %v71
  %v292 = vunpack.c.h.b16 %v71
  %v293 = vunpack.c.l.b16 %v72
  %v294 = vunpack.c.h.b16 %v72
  %v295 = vunpack.c.l.b16 %v73
  %v296 = vunpack.c.h.b16 %v73
  %v297 = vunpack.c.l.b16 %v74
  %v298 = vunpack.c.h.b16 %v74
  %v299 = vunpack.c.l.b16 %v75
  %v300 = vunpack.c.h.b16 %v75
  %v301 = vunpack.c.l.b16 %v76
  %v302 = vunpack.c.h.b16 %v76
  %v303 = vunpack.c.l.b16 %v77
  %v304 = vunpack.c.h.b16 %v77
  %v305 = vunpack.c.l.b16 %v78
  %v306 = vunpack.c.h.b16 %v78
  %v307 = vunpack.c.l.b16 %v79
  %v308 = vunpack.c.h.b16 %v79
  %v309 = vunpack.c.l.b16 %v80
  %v310 = vunpack.c.h.b16 %v80
  %v311 = vunpack.c.l.b16 %v81
  %v312 = vunpack.c.h.b16 %v81
  %v313 = vunpack.c.l.b16 %v82
  %v314 = vunpack.c.h.b16 %v82
  %v315 = vunpack.c.l.b16 %v83
  %v316 = vunpack.c.h.b16 %v83
  %v317 = vunpack.c.l.b16 %v84
  %v318 = vunpack.c.h.b16 %v84
  %v319 = vunpack.c.l.b16 %v85
  %v320 = vunpack.c.h.b16 %v85
  %v321 = vunpack.c.l.b16 %v86
  %v322 = vunpack.c.h.b16 %v86
  %v323 = vunpack.c.l.b16 %v87
  %v324 = vunpack.c.h.b16 %v87
  %v325 = vunpack.c.l.b16 %v88
  %v326 = vunpack.c.h.b16 %v88
  %v327 = vunpack.c.l.b16 %v89
  %v328 = vunpack.c.h.b16 %v89
  %v329 = vunpack.c.l.b16 %v90
  %v330 = vunpack.c.h.b16 %v90
  %v331 = vunpack.c.l.b16 %v91
  %v332 = vunpack.c.h.b16 %v91
  %v333 = vunpack.c.l.b16 %v92
  %v334 = vunpack.c.h.b16 %v92
  %v335 = vunpack.c.l.b16 %v93
  %v336 = vunpack.c.h.b16 %v93
  %v337 = vunpack.c.l.b16 %v94
  %v338 = vunpack.c.h.b16 %v94
  %v339 = vpack.c.b16 %v213, %v211
  %v340 = vpack.c.b16 %v214, %v212
  %v341 = vpack.c.b16 %v217, %v215
  %v342 = vpack.c.b16 %v218, %v216
  %v343 = vpack.c.b16 %v221, %v219
  %v344 = vpack.c.b16 %v222, %v220
  %v345 = vpack.c.b16 %v225, %v223
  %v346 = vpack.c.b16 %v226, %v224
  %v347 = vpack.c.b16 %v229, %v227
  %v348 = vpack.c.b16 %v230, %v228
  %v349 = vpack.c.b16 %v233, %v231
  %v350 = vpack.c.b16 %v234, %v232
  %v351 = vpack.c.b16 %v237, %v235
  %v352 = vpack.c.b16 %v238, %v236
  %v353 = vpack.c.b16 %v241, %v239
  %v354 = vpack.c.b16 %v242, %v240
  %v355 = vpack.c.b16 %v245, %v243
  %v356 = vpack.c.b16 %v246, %v244
  %v357 = vpack.c.b16 %v249, %v247
  %v358 = vpack.c.b16 %v250, %v248
  %v359 = vpack.c.b16 %v253, %v251
  %v360 = vpack.c.b16 %v254, %v252
  %v361 = vpack.c.b16 %v257, %v255
  %v362 = vpack.c.b16 %v258, %v256
  %v363 = vpack.c.b16 %v261, %v259
  %v364 = vpack.c.b16 %v262, %v260
  %v365 = vpack.c.b16 %v265, %v263
  %v366 = vpack.c.b16 %v266, %v264
  %v367 = vpack.c.b16 %v269, %v267
  %v368 = vpack.c.b16 %v270, %v268
  %v369 = vpack.c.b16 %v273, %v271
  %v370 = vpack.c.b16 %v274, %v272
  %v371 = vpack.c.b16 %v277, %v275
  %v372 = vpack.c.b16 %v278, %v276
  %v373 = vpack.c.b16 %v281, %v279
  %v374 = vpack.c.b16 %v282, %v280
  %v375 = vpack.c.b16 %v285, %v283
  %v376 = vpack.c.b16 %v286, %v284
  %v377 = vpack.c.b16 %v289, %v287
  %v378 = vpack.c.b16 %v290, %v288
  %v379 = vpack.c.b16 %v293, %v291
  %v380 = vpack.c.b16 %v294, %v292
  %v381 = vpack.c.b16 %v297, %v295
  %v382 = vpack.c.b16 %v298, %v296
  %v383 = vpack.c.b16 %v301, %v299
  %v384 = vpack.c.b16 %v302, %v300
  %v385 = vpack.c.b16 %v305, %v303
  %v386 = vpack.c.b16 %v306, %v304
  %v387 = vpack.c.b16 %v309, %v307
  %v388 = vpack.c.b16 %v310, %v308
  %v389 = vpack.c.b16 %v313, %v311
  %v390 = vpack.c.b16 %v314, %v312
  %v391 = vpack.c.b16 %v317, %v315
  %v392 = vpack.c.b16 %v318, %v316
  %v393 = vpack.c.b16 %v321, %v319
  %v394 = vpack.c.b16 %v322, %v320
  %v395 = vpack.c.b16 %v325, %v323
  %v396 = vpack.c.b16 %v326, %v324
  %v397 = vpack.c.b16 %v329, %v327
  %v398 = vpack.c.b16 %v330, %v328
  %v399 = vpack.c.b16 %v333, %v331
  %v400 = vpack.c.b16 %v334, %v332
  %v401 = vpack.c.b16 %v337, %v335
  %v402 = vpack.c.b16 %v338, %v336
  %467 = vmatprep.subr.bf16.mxu0 %v340
  %468 = vmatpush1.bf16.msra.mxu0 %v339
  %469 = vmatprep.subr.bf16.mxu0 %v342
  %470 = vmatpush1.bf16.msra.mxu0 %v341
  %471 = vmatprep.subr.bf16.mxu0 %v344
  %472 = vmatpush1.bf16.msra.mxu0 %v343
  %473 = vmatprep.subr.bf16.mxu0 %v346
  %474 = vmatpush1.bf16.msra.mxu0 %v345
  %475 = vmatprep.subr.bf16.mxu0 %v348
  %476 = vmatpush1.bf16.msra.mxu0 %v347
  %477 = vmatprep.subr.bf16.mxu0 %v350
  %478 = vmatpush1.bf16.msra.mxu0 %v349
  %479 = vmatprep.subr.bf16.mxu0 %v352
  %480 = vmatpush1.bf16.msra.mxu0 %v351
  %481 = vmatprep.subr.bf16.mxu0 %v354
  %482 = vmatpush1.bf16.msra.mxu0 %v353
  %483 = vmatprep.subr.bf16.mxu0 %v356
  %484 = vmatpush1.bf16.msra.mxu0 %v355
  %485 = vmatprep.subr.bf16.mxu0 %v358
  %486 = vmatpush1.bf16.msra.mxu0 %v357
  %487 = vmatprep.subr.bf16.mxu0 %v360
  %488 = vmatpush1.bf16.msra.mxu0 %v359
  %489 = vmatprep.subr.bf16.mxu0 %v362
  %490 = vmatpush1.bf16.msra.mxu0 %v361
  %491 = vmatprep.subr.bf16.mxu0 %v364
  %492 = vmatpush1.bf16.msra.mxu0 %v363
  %493 = vmatprep.subr.bf16.mxu0 %v366
  %494 = vmatpush1.bf16.msra.mxu0 %v365
  %495 = vmatprep.subr.bf16.mxu0 %v368
  %496 = vmatpush1.bf16.msra.mxu0 %v367
  %497 = vmatprep.subr.bf16.mxu0 %v370
  %498 = vmatpush1.bf16.msra.mxu0 %v369
  %499 = vmatprep.mubr.bf16.mxu0 %v132
  %500 = vmatmul.mubr.bf16.gmra.mrb[0].mxu0 %v131
  %v501 = vpop.f32.mrb[0].mxu0
  %v502 = vadd.f32 %v100, %v501
  %v503 = vpop.f32.mrb[0].mxu0
  %v504 = vadd.f32 %v104, %v503
  %v505 = vpop.f32.mrb[0].mxu0
  %v506 = vadd.f32 %v100, %v505
  %v507 = vpop.f32.mrb[0].mxu0
  %v508 = vadd.f32 %v104, %v507
  %509 = vmatprep.mubr.bf16.mxu0 %v136
  %510 = vmatmul.mubr.bf16.gmra.mrb[0].mxu0 %v135
  %v511 = vpop.f32.mrb[0].mxu0
  %v512 = vadd.f32 %v100, %v511
  %v513 = vpop.f32.mrb[0].mxu0
  %v514 = vadd.f32 %v104, %v513
  %v515 = vpop.f32.mrb[0].mxu0
  %v516 = vadd.f32 %v100, %v515
  %v517 = vpop.f32.mrb[0].mxu0
  %v518 = vadd.f32 %v104, %v517
  %519 = vdwg.mxu0
  %520 = vmatprep.subr.bf16.mxu0 %v372
  %521 = vmatpush1.bf16.msra.mxu0 %v371
  %522 = vmatprep.subr.bf16.mxu0 %v374
  %523 = vmatpush1.bf16.msra.mxu0 %v373
  %524 = vmatprep.subr.bf16.mxu0 %v376
  %525 = vmatpush1.bf16.msra.mxu0 %v375
  %526 = vmatprep.subr.bf16.mxu0 %v378
  %527 = vmatpush1.bf16.msra.mxu0 %v377
  %528 = vmatprep.subr.bf16.mxu0 %v380
  %529 = vmatpush1.bf16.msra.mxu0 %v379
  %530 = vmatprep.subr.bf16.mxu0 %v382
  %531 = vmatpush1.bf16.msra.mxu0 %v381
  %532 = vmatprep.subr.bf16.mxu0 %v384
  %533 = vmatpush1.bf16.msra.mxu0 %v383
  %534 = vmatprep.subr.bf16.mxu0 %v386
  %535 = vmatpush1.bf16.msra.mxu0 %v385
  %536 = vmatprep.subr.bf16.mxu0 %v388
  %537 = vmatpush1.bf16.msra.mxu0 %v387
  %538 = vmatprep.subr.bf16.mxu0 %v390
  %539 = vmatpush1.bf16.msra.mxu0 %v389
  %540 = vmatprep.subr.bf16.mxu0 %v392
  %541 = vmatpush1.bf16.msra.mxu0 %v391
  %542 = vmatprep.subr.bf16.mxu0 %v394
  %543 = vmatpush1.bf16.msra.mxu0 %v393
  %544 = vmatprep.subr.bf16.mxu0 %v396
  %545 = vmatpush1.bf16.msra.mxu0 %v395
  %546 = vmatprep.subr.bf16.mxu0 %v398
  %547 = vmatpush1.bf16.msra.mxu0 %v397
  %548 = vmatprep.subr.bf16.mxu0 %v400
  %549 = vmatpush1.bf16.msra.mxu0 %v399
  %550 = vmatprep.subr.bf16.mxu0 %v402
  %551 = vmatpush1.bf16.msra.mxu0 %v401
  %552 = vmatprep.mubr.bf16.mxu0 %v134
  %553 = vmatmul.mubr.bf16.gmra.mrb[0].mxu0 %v133
  %v554 = vpop.f32.mrb[0].mxu0
  %v555 = vadd.f32 %v502, %v554
  %v556 = vpop.f32.mrb[0].mxu0
  %v557 = vadd.f32 %v504, %v556
  %v558 = vpop.f32.mrb[0].mxu0
  %v559 = vadd.f32 %v506, %v558
  %v560 = vpop.f32.mrb[0].mxu0
  %v561 = vadd.f32 %v508, %v560
  %562 = vmatprep.mubr.bf16.mxu0 %v138
  %563 = vmatmul.mubr.bf16.gmra.mrb[0].mxu0 %v137
  %v564 = vpop.f32.mrb[0].mxu0
  %v565 = vadd.f32 %v512, %v564
  %v566 = vpop.f32.mrb[0].mxu0
  %v567 = vadd.f32 %v514, %v566
  %v568 = vpop.f32.mrb[0].mxu0
  %v569 = vadd.f32 %v516, %v568
  %v570 = vpop.f32.mrb[0].mxu0
  %v571 = vadd.f32 %v518, %v570
  %572 = vdwg.mxu0
  %v573 = vld [vmem:[%s3] sm:$0xff]
  %v574 = vld [vmem:[%s3 + $0x8] sm:$0xff]
  %v575 = vld [vmem:[%s3 + $0x10] sm:$0xff]
  %v576 = vld [vmem:[%s3 + $0x18] sm:$0xff]
  %v577 = vunpack.c.l.bf16 %v573
  %v578 = vunpack.c.h.bf16 %v573
  %v579 = vunpack.c.l.bf16 %v574
  %v580 = vunpack.c.h.bf16 %v574
  %v581 = vunpack.c.l.bf16 %v575
  %v582 = vunpack.c.h.bf16 %v575
  %v583 = vunpack.c.l.bf16 %v576
  %v584 = vunpack.c.h.bf16 %v576
  %v585 = vadd.f32 %v555, %v577
  %v586 = vadd.f32 %v557, %v578
  %v587 = vadd.f32 %v559, %v579
  %v588 = vadd.f32 %v561, %v580
  %v589 = vadd.f32 %v565, %v581
  %v590 = vadd.f32 %v567, %v582
  %v591 = vadd.f32 %v569, %v583
  %v592 = vadd.f32 %v571, %v584
  %v593 = vadd.f32 %v585, %v586
  %594 = vadd.xlane.f32.xlu0 %v593
  %v595 = vpop.xlane.xlu0 %594
  %v596 = vadd.f32 %v587, %v588
  %597 = vadd.xlane.f32.xlu0 %v596
  %v598 = vpop.xlane.xlu0 %597
  %v599 = vadd.f32 %v589, %v590
  %600 = vadd.xlane.f32.xlu0 %v599
  %v601 = vpop.xlane.xlu0 %600
  %v602 = vadd.f32 %v591, %v592
  %603 = vadd.xlane.f32.xlu0 %v602
  %v604 = vpop.xlane.xlu0 %603
  %v605 = vrcp.pop 256.0
  %v606 = vmul.f32 %v595, %v605
  %v607 = vmul.f32 %v598, %v605
  %v608 = vmul.f32 %v601, %v605
  %v609 = vmul.f32 %v604, %v605
  %v610 = vsub.f32 %v585, %v606
  %v611 = vsub.f32 %v586, %v606
  %v612 = vsub.f32 %v587, %v607
  %v613 = vsub.f32 %v588, %v607
  %v614 = vsub.f32 %v589, %v608
  %v615 = vsub.f32 %v590, %v608
  %v616 = vsub.f32 %v591, %v609
  %v617 = vsub.f32 %v592, %v609
  %v618 = vmul.f32 %v610, %v610
  %v619 = vmul.f32 %v611, %v611
  %v620 = vmul.f32 %v612, %v612
  %v621 = vmul.f32 %v613, %v613
  %v622 = vmul.f32 %v614, %v614
  %v623 = vmul.f32 %v615, %v615
  %v624 = vmul.f32 %v616, %v616
  %v625 = vmul.f32 %v617, %v617
  %v626 = vadd.f32 %v618, %v619
  %627 = vadd.xlane.f32.xlu0 %v626
  %v628 = vpop.xlane.xlu0 %627
  %v629 = vadd.f32 %v620, %v621
  %630 = vadd.xlane.f32.xlu0 %v629
  %v631 = vpop.xlane.xlu0 %630
  %v632 = vadd.f32 %v622, %v623
  %633 = vadd.xlane.f32.xlu0 %v632
  %v634 = vpop.xlane.xlu0 %633
  %v635 = vadd.f32 %v624, %v625
  %636 = vadd.xlane.f32.xlu0 %v635
  %v637 = vpop.xlane.xlu0 %636
  %v638 = vmul.f32 %v628, %v605
  %v639 = vmul.f32 %v631, %v605
  %v640 = vmul.f32 %v634, %v605
  %v641 = vmul.f32 %v637, %v605
  %v642 = vadd.f32 %v638, 1e-12
  %v643 = vadd.f32 %v639, 1e-12
  %v644 = vadd.f32 %v640, 1e-12
  %v645 = vadd.f32 %v641, 1e-12
  %v646 = vrsqrt.pop %v642
  %v647 = vrsqrt.pop %v643
  %v648 = vrsqrt.pop %v644
  %v649 = vrsqrt.pop %v645
  %v650 = vmul.f32 %v610, %v646
  %v651 = vmul.f32 %v611, %v646
  %v652 = vmul.f32 %v612, %v647
  %v653 = vmul.f32 %v613, %v647
  %v654 = vmul.f32 %v614, %v648
  %v655 = vmul.f32 %v615, %v648
  %v656 = vmul.f32 %v616, %v649
  %v657 = vmul.f32 %v617, %v649
  %v658 = vld [vmem:[%s4] sm:$0x3]
  %v660 = vlaneseq
  %v661 = vshrl.u32 %v660, 7
  %v662 = vsub.s32 0, %v661
  %v663 = vrot.slane %v658, %v662
  %v664 = vlaneseq
  %v665 = vshrl.u32 %v664, 7
  %v666 = vsub.s32 1, %v665
  %v667 = vrot.slane %v658, %v666
  %v670 = vmul.f32 %v650, %v663
  %v671 = vmul.f32 %v651, %v667
  %v672 = vmul.f32 %v652, %v663
  %v673 = vmul.f32 %v653, %v667
  %v674 = vmul.f32 %v654, %v663
  %v675 = vmul.f32 %v655, %v667
  %v676 = vmul.f32 %v656, %v663
  %v677 = vmul.f32 %v657, %v667
  %v678 = vld [vmem:[%s5] sm:$0x3]
  %v680 = vlaneseq
  %v681 = vshrl.u32 %v680, 7
  %v682 = vsub.s32 0, %v681
  %v683 = vrot.slane %v678, %v682
  %v684 = vlaneseq
  %v685 = vshrl.u32 %v684, 7
  %v686 = vsub.s32 1, %v685
  %v687 = vrot.slane %v678, %v686
  %v690 = vadd.f32 %v670, %v683
  %v691 = vadd.f32 %v671, %v687
  %v692 = vadd.f32 %v672, %v683
  %v693 = vadd.f32 %v673, %v687
  %v694 = vadd.f32 %v674, %v683
  %v695 = vadd.f32 %v675, %v687
  %v696 = vadd.f32 %v676, %v683
  %v697 = vadd.f32 %v677, %v687
  %v698 = vpack.c.bf16 %v692, %v690
  %v699 = vpack.c.bf16 %v693, %v691
  %v700 = vpack.c.bf16 %v696, %v694
  %v701 = vpack.c.bf16 %v697, %v695
  %v706 = vunpack.c.l.b16 %v698
  %v707 = vunpack.c.l.b16 %v699
  %v708 = vunpack.c.h.b16 %v698
  %v709 = vunpack.c.h.b16 %v699
  %v710 = vunpack.c.l.b16 %v700
  %v711 = vunpack.c.l.b16 %v701
  %v712 = vunpack.c.h.b16 %v700
  %v713 = vunpack.c.h.b16 %v701
  %v714 = vpack.c.b16 %v707, %v706
  %v715 = vpack.c.b16 %v709, %v708
  %v716 = vpack.c.b16 %v711, %v710
  %v717 = vpack.c.b16 %v713, %v712
  %722 = vst [vmem:[%s6] sm:$0xff] %v714
  %723 = vst [vmem:[%s6 + $0x8] sm:$0xff] %v715
  %724 = vst [vmem:[%s6 + $0x10] sm:$0xff] %v716
  %725 = vst [vmem:[%s6 + $0x18] sm:$0xff] %v717
  // Predicated region
  $region26: #{bert_sentence_encoder.17} parent=0 // pred_check
    _
  $region27: #{bert_sentence_encoder.17} parent=0 // pred_check_branch
    %727 = sbr.rel (0) target = $region29
  $region28: #{bert_sentence_encoder.17} parent=0 // pred_region
    _
  $region29: #{bert_sentence_encoder.17} parent=0 // pred_fallthru
    _
  // Predicated region
  $region30: #{bert_sentence_encoder.17} parent=0 // pred_check
    _
  $region31: #{bert_sentence_encoder.17} parent=0 // pred_check_branch
    %729 = sbr.rel (0) target = $region33
  $region32: #{bert_sentence_encoder.17} parent=0 // pred_region
    _
  $region33: #{bert_sentence_encoder.17} parent=0 // pred_fallthru
    _

</llo_original>
